<compile_context>
chip_gen: v6e
topology: v6e:2x2x1
jax: 0.10.0
libtpu: 0.0.40
codegen_flags: <defaults>
</compile_context>

<pallas_src>
import functools

import jax
import jax.numpy as jnp
from jax.experimental import pallas as pl
from jax.experimental.pallas import tpu as pltpu

LEAKY_SLOPE = 0.2
EPS = 1e-5  # nn.InstanceNorm2d default eps


def _round_up(x, m):
    return (x + m - 1) // m * m


def _cdiv(a, b):
    return (a + b - 1) // b


def _leaky_relu(t):
    return jnp.where(t >= 0, t, LEAKY_SLOPE * t)


def _instance_norm(t, inv_n):
    # t: (C, HW) f32, one image. Stacked [t, t*t] -> a single lane-reduction pass
    # (halves the XLU reduce count). Biased variance + eps=1e-5 (InstanceNorm2d
    # defaults); single-pass E[x^2]-E[x]^2 is fine at post-conv magnitudes.
    c = t.shape[0]
    s = jnp.sum(jnp.concatenate([t, t * t], axis=0), axis=-1, keepdims=True)
    mean = s[:c] * inv_n
    var = jnp.maximum(s[c:] * inv_n - mean * mean, 0.0)
    return (t - mean) * jax.lax.rsqrt(var + EPS)


def _conv_block_kernel(x_ref, w1_ref, w2_ref, w1x1_ref, ymap_ref, xmap_ref,
                       o_ref, slab_ref, patch_ref, *, H, W, use_res):
    # x_ref    : (bn, Cin_p, HW)   bf16 input block, channels-in-sublanes
    # w1_ref   : (Cout, 9*G)       bf16 im2col conv1 weights (tap-major, padded groups)
    # w2_ref   : (Cout, 9*G)       bf16 im2col conv2 weights
    # w1x1_ref : (Cout, Cin_p)     bf16 residual 1x1 weights
    # ymap_ref : (1, bn*HW)        within-image row index of each lane (periodic in HW)
    # xmap_ref : (1, bn*HW)        within-image col index of each lane
    # o_ref    : (bn, Cout, HW)    lane-dense output block
    # slab_ref : (G, bn*HW+2*PAD)  bf16 flat slab, bn images contiguous in lanes + halo
    # patch_ref: (9*G, bn*HW)      bf16 im2col staging, fully overwritten per conv
    bn, cin_p, hw = x_ref.shape
    cout = o_ref.shape[1]
    L = bn * hw
    G = patch_ref.shape[0] // 9
    PAD = (slab_ref.shape[1] - L) // 2
    inv_hw = 1.0 / hw

    ymap = ymap_ref[...]
    xmap = xmap_ref[...]
    sub = jax.lax.broadcasted_iota(jnp.int32, (G, 1), 0)

    def tap_mask(dy, dx, c_used):
        # Lane conditions implement the conv's zero padding (and also neutralize taps
        # that spill into the neighbouring image of the lane-stacked slab); the sublane
        # condition neutralizes stale / unused channel rows. All masking is a select,
        # so halo lanes / stale rows are never zero-filled and never multiplied.
        conds = []
        if dy < 0:
            conds.append(ymap >= -dy)
        elif dy > 0:
            conds.append(ymap < H - dy)
        if dx < 0:
            conds.append(xmap >= -dx)
        elif dx > 0:
            conds.append(xmap < W - dx)
        if c_used < G:
            conds.append(sub < c_used)
        if not conds:
            return None
        m = conds[0]
        for c in conds[1:]:
            m = jnp.logical_and(m, c)
        return m

    def conv3x3(w_ref, c_used):
        # Source activation must already sit in slab_ref[0:c_used, PAD:PAD+L].
        # Each tap is a static lane-shifted window (shift = dy*W + dx); the whole
        # bn-image batch is convolved with ONE lane-stacked MXU push.
        t = 0
        for dy in (-1, 0, 1):
            for dx in (-1, 0, 1):
                s = dy * W + dx
                win = slab_ref[:, PAD + s:PAD + s + L]          # (G, bn*HW) bf16
                m = tap_mask(dy, dx, c_used)
                if m is not None:
                    win = jnp.where(m, win, 0.0)
                patch_ref[t * G:(t + 1) * G, :] = win
                t += 1
        return jnp.dot(w_ref[...], patch_ref[...],
                       preferred_element_type=jnp.float32)       # (Cout, bn*HW) f32

    # ---- stage the batch block into the flat slab (images contiguous in lanes) ----
    for b in range(bn):
        slab_ref[0:cin_p, PAD + b * hw:PAD + (b + 1) * hw] = x_ref[b]

    # ---- conv1 (3x3) and residual 1x1 branch, each ONE batched matmul ----
    h1 = conv3x3(w1_ref, cin_p)
    if use_res:
        res = jnp.dot(w1x1_ref[...], slab_ref[0:cin_p, PAD:PAD + L],
                      preferred_element_type=jnp.float32)        # (Cout, bn*HW) f32

    # ---- InstanceNorm + LeakyReLU on conv1 (per image), written back to the slab ----
    # TODO(synk): training-mode Dropout2d (per-channel Bernoulli mask) not applied (eval).
    for b in range(bn):
        a1 = _leaky_relu(_instance_norm(h1[:, b * hw:(b + 1) * hw], inv_hw))
        slab_ref[0:cout, PAD + b * hw:PAD + (b + 1) * hw] = a1.astype(slab_ref.dtype)

    # ---- conv2 (3x3), one batched matmul ----
    h2 = conv3x3(w2_ref, cout)

    # ---- residual norm + layers_out (InstanceNorm + LeakyReLU), lane-dense stores ----
    for b in range(bn):
        h2b = h2[:, b * hw:(b + 1) * hw]
        if use_res:
            h2b = h2b + _instance_norm(res[:, b * hw:(b + 1) * hw], inv_hw)
        out = _leaky_relu(_instance_norm(h2b, inv_hw))
        o_ref[b] = out.astype(o_ref.dtype)


def conv_block(x_nchw, w1, w2, w1x1, *, use_res=True, out_dtype=jnp.float32,
               max_batch_block=16):
    """ConvBlock forward (eval mode). x_nchw: (N, Cin, H, W) -> (N, Cout, H, W).

    w1: (3,3,Cin,Cout), w2: (3,3,Cout,Cout) HWIO conv weights; w1x1: (Cin,Cout).
    """
    N, Cin, H, W = x_nchw.shape
    Cout = w1.shape[-1]
    HW = H * W
    Cin_p = _round_up(Cin, 16)                 # bf16 sublane packing
    G = _round_up(max(Cin_p, Cout), 16)        # channel rows per im2col tap group
    PAD = _round_up(W + 1, 128)                # slab halo; keeps interior lane-aligned

    # --- per-generation VMEM budget (v7x: 64 MiB/TC) -> batch-block size ---
    try:
        vmem_cap = int(pltpu.get_tpu_info().vmem_capacity_bytes)
    except Exception:
        vmem_cap = 64 << 20                    # conservative default (v7x)
    out_itemsize = jnp.dtype(out_dtype).itemsize

    def footprint(bn):
        L = bn * HW
        return (2 * bn * Cin_p * HW * 2                       # input block (bf16, 2x buf)
                + 2 * bn * Cout * HW * out_itemsize           # output block (2x buf)
                + 2 * (2 * Cout * 9 * G * 2 + Cout * Cin_p * 2 + 2 * L * 4)  # weights+maps
                + G * (L + 2 * PAD) * 2                       # slab scratch (bf16)
                + 9 * G * L * 2                               # im2col patch scratch (bf16)
                + 4 * Cout * L * 4)                           # f32 intermediates headroom

    bn = 1
    for cand in range(1, max(1, min(N, max_batch_block)) + 1):
        if footprint(cand) <= int(0.5 * vmem_cap):
            bn = cand
    if N >= 2:                  # keep >= 2 grid steps so both v7x TensorCores get work
        bn = min(bn, _cdiv(N, 2))
    n_steps = _cdiv(N, bn)      # robust to awkward N: pad, don't factor
    N_pad = n_steps * bn
    L = bn * HW
    # TODO(synk): add a spatial (HW) grid axis with halo (or per-dy accumulation) so the
    # 9*G x bn*HW patch buffer also fits for large images; bn=1 is the current fallback.

    # bf16 MXU operands (f32 accumulation in-kernel); zero-pad channels / batch.
    x = x_nchw.reshape(N, Cin, HW).astype(jnp.bfloat16)
    x = jnp.pad(x, ((0, N_pad - N), (0, Cin_p - Cin), (0, 0)))

    # im2col weights: tap-major groups of G channel rows (zero-padded) matching the
    # kernel's patch layout.
    w1_p = jnp.pad(jnp.transpose(w1, (3, 0, 1, 2)).reshape(Cout, 9, Cin),
                   ((0, 0), (0, 0), (0, G - Cin))).reshape(Cout, 9 * G).astype(jnp.bfloat16)
    w2_p = jnp.pad(jnp.transpose(w2, (3, 0, 1, 2)).reshape(Cout, 9, Cout),
                   ((0, 0), (0, 0), (0, G - Cout))).reshape(Cout, 9 * G).astype(jnp.bfloat16)
    w1x1_p = jnp.pad(jnp.transpose(w1x1),
                     ((0, 0), (0, Cin_p - Cin))).astype(jnp.bfloat16)

    # within-image (row, col) coordinate of every lane of the bn-stacked block
    # (periodic with period HW); avoids in-kernel integer div/mod.
    yy = jnp.repeat(jnp.arange(H, dtype=jnp.int32), W)
    xx = jnp.tile(jnp.arange(W, dtype=jnp.int32), H)
    ymap = jnp.tile(yy, bn).reshape(1, L)
    xmap = jnp.tile(xx, bn).reshape(1, L)

    vmem_limit = int(min(vmem_cap - (4 << 20), max(32 << 20, 2 * footprint(bn))))

    kernel = functools.partial(_conv_block_kernel, H=H, W=W, use_res=use_res)
    out = pl.pallas_call(
        kernel,
        out_shape=jax.ShapeDtypeStruct((N_pad, Cout, HW), out_dtype),
        grid_spec=pltpu.PrefetchScalarGridSpec(
            num_scalar_prefetch=0,
            grid=(n_steps,),
            in_specs=[
                pl.BlockSpec((bn, Cin_p, HW), lambda n: (n, 0, 0)),
                pl.BlockSpec((Cout, 9 * G), lambda n: (0, 0)),
                pl.BlockSpec((Cout, 9 * G), lambda n: (0, 0)),
                pl.BlockSpec((Cout, Cin_p), lambda n: (0, 0)),
                pl.BlockSpec((1, L), lambda n: (0, 0)),
                pl.BlockSpec((1, L), lambda n: (0, 0)),
            ],
            out_specs=pl.BlockSpec((bn, Cout, HW), lambda n: (n, 0, 0)),
            scratch_shapes=[
                pltpu.VMEM((G, L + 2 * PAD), jnp.bfloat16),   # flat slab + halo
                pltpu.VMEM((9 * G, L), jnp.bfloat16),         # im2col patches
            ],
        ),
        compiler_params=pltpu.CompilerParams(
            dimension_semantics=("parallel",),     # batch blocks independent (megacore)
            vmem_limit_bytes=vmem_limit),
    )(x, w1_p, w2_p, w1x1_p, ymap, xmap)

    return out[:N].reshape(N, Cout, H, W)


def _ref_conv_block(x_nchw, w1, w2, w1x1, use_res=True):
    """Plain-JAX reference (eval mode, f32) for validation."""
    x = jnp.transpose(x_nchw, (0, 2, 3, 1)).astype(jnp.float32)
    dn = ('NHWC', 'HWIO', 'NHWC')

    def conv(a, w):
        return jax.lax.conv_general_dilated(a, w, (1, 1), 'SAME',
                                            dimension_numbers=dn,
                                            precision=jax.lax.Precision.HIGHEST)

    def inorm(a):
        m = jnp.mean(a, axis=(1, 2), keepdims=True)
        v = jnp.mean(jnp.square(a - m), axis=(1, 2), keepdims=True)
        return (a - m) * jax.lax.rsqrt(v + EPS)

    def lrelu(a):
        return jnp.where(a >= 0, a, LEAKY_SLOPE * a)

    h = conv(x, w1)
    h = lrelu(inorm(h))
    h = conv(h, w2)
    if use_res:
        h = h + inorm(conv(x, w1x1.reshape(1, 1, *w1x1.shape)))
    out = lrelu(inorm(h))
    return jnp.transpose(out, (0, 3, 1, 2))


if __name__ == "__main__":
    # N=5 exercises cdiv batch padding (bn=3, grid=2) plus the lane-stacked batch path.
    N, Cin, Cout, H, W = 5, 4, 8, 16, 16

    key = jax.random.PRNGKey(0)
    k_x, k_w1, k_w2, k_w3 = jax.random.split(key, 4)

    x = jax.random.normal(k_x, (N, Cin, H, W), dtype=jnp.float32)
    # Deterministic Kaiming-style init (shapes from nn.Conv2d, bias=False).
    w1 = jax.random.normal(k_w1, (3, 3, Cin, Cout), jnp.float32) * (2.0 / (9 * Cin)) ** 0.5
    w2 = jax.random.normal(k_w2, (3, 3, Cout, Cout), jnp.float32) * (2.0 / (9 * Cout)) ** 0.5
    w1x1 = jax.random.normal(k_w3, (Cin, Cout), jnp.float32) * (2.0 / Cin) ** 0.5

    out = jax.block_until_ready(conv_block(x, w1, w2, w1x1))
    ref = jax.block_until_ready(_ref_conv_block(x, w1, w2, w1x1))

    assert out.shape == (N, Cout, H, W)
    # bf16 MXU operands with f32 accumulation -> ~1e-2-level error vs the f32 reference.
    assert jnp.allclose(out, ref, atol=5e-2, rtol=5e-2), float(jnp.max(jnp.abs(out - ref)))
    print("KERNEL_OK")
</pallas_src>

<mosaic_0001>
module attributes {stable_mosaic.version = 11 : i64} {
  func.func @_conv_block_kernel(%arg0: i32, %arg1: memref<3x16x256xbf16, #tpu.memory_space<vmem>>, %arg2: memref<8x144xbf16, #tpu.memory_space<vmem>>, %arg3: memref<8x144xbf16, #tpu.memory_space<vmem>>, %arg4: memref<8x16xbf16, #tpu.memory_space<vmem>>, %arg5: memref<1x768xi32, #tpu.memory_space<vmem>>, %arg6: memref<1x768xi32, #tpu.memory_space<vmem>>, %arg7: memref<3x8x256xf32, #tpu.memory_space<vmem>>, %arg8: memref<16x1024xbf16, #tpu.memory_space<vmem>>, %arg9: memref<144x768xbf16, #tpu.memory_space<vmem>>) attributes {dimension_semantics = [#tpu.dimension_semantics<parallel>], iteration_bounds = array<i64: 2>, scalar_prefetch = 0 : i64, scratch_operands = 2 : i64, tpu.core_type = #tpu.core_type<tc>, window_params = [{transform_indices = @transform_0, window_bounds = array<i64: 3, 16, 256>}, {pipeline_mode = #tpu.pipeline_mode<synchronous>, transform_indices = @transform_1, window_bounds = array<i64: 8, 144>}, {pipeline_mode = #tpu.pipeline_mode<synchronous>, transform_indices = @transform_2, window_bounds = array<i64: 8, 144>}, {pipeline_mode = #tpu.pipeline_mode<synchronous>, transform_indices = @transform_3, window_bounds = array<i64: 8, 16>}, {pipeline_mode = #tpu.pipeline_mode<synchronous>, transform_indices = @transform_4, window_bounds = array<i64: 1, 768>}, {pipeline_mode = #tpu.pipeline_mode<synchronous>, transform_indices = @transform_5, window_bounds = array<i64: 1, 768>}, {transform_indices = @transform_6, window_bounds = array<i64: 3, 8, 256>}]} {
    %c0 = arith.constant 0 : index
    %c0_0 = arith.constant 0 : index
    %0 = vector.load %arg5[%c0, %c0_0] : memref<1x768xi32, #tpu.memory_space<vmem>>, vector<1x768xi32>
    %c0_1 = arith.constant 0 : index
    %c0_2 = arith.constant 0 : index
    %1 = vector.load %arg6[%c0_1, %c0_2] : memref<1x768xi32, #tpu.memory_space<vmem>>, vector<1x768xi32>
    %2 = tpu.iota {dimensions = array<i32: 0>} : vector<16x1xi32>
    %c0_3 = arith.constant 0 : index
    %c0_4 = arith.constant 0 : index
    %c0_5 = arith.constant 0 : index
    %3 = vector.load %arg1[%c0_3, %c0_4, %c0_5] : memref<3x16x256xbf16, #tpu.memory_space<vmem>>, vector<1x16x256xbf16>
    %4 = vector.shape_cast %3 : vector<1x16x256xbf16> to vector<16x256xbf16>
    %c0_6 = arith.constant 0 : index
    %c128 = arith.constant 128 : index
    %5 = vector.load %arg8[%c0_6, %c128] : memref<16x1024xbf16, #tpu.memory_space<vmem>>, vector<16x256xbf16>
    tpu.vector_store %arg8[%c0_6, %c128], %4 {strides = array<i32>} : memref<16x1024xbf16, #tpu.memory_space<vmem>>, vector<16x256xbf16>,
    %c1 = arith.constant 1 : index
    %c0_7 = arith.constant 0 : index
    %c0_8 = arith.constant 0 : index
    %6 = vector.load %arg1[%c1, %c0_7, %c0_8] : memref<3x16x256xbf16, #tpu.memory_space<vmem>>, vector<1x16x256xbf16>
    %7 = vector.shape_cast %6 : vector<1x16x256xbf16> to vector<16x256xbf16>
    %c0_9 = arith.constant 0 : index
    %c384 = arith.constant 384 : index
    %8 = vector.load %arg8[%c0_9, %c384] : memref<16x1024xbf16, #tpu.memory_space<vmem>>, vector<16x256xbf16>
    tpu.vector_store %arg8[%c0_9, %c384], %7 {strides = array<i32>} : memref<16x1024xbf16, #tpu.memory_space<vmem>>, vector<16x256xbf16>,
    %c2 = arith.constant 2 : index
    %c0_10 = arith.constant 0 : index
    %c0_11 = arith.constant 0 : index
    %9 = vector.load %arg1[%c2, %c0_10, %c0_11] : memref<3x16x256xbf16, #tpu.memory_space<vmem>>, vector<1x16x256xbf16>
    %10 = vector.shape_cast %9 : vector<1x16x256xbf16> to vector<16x256xbf16>
    %c0_12 = arith.constant 0 : index
    %c640 = arith.constant 640 : index
    %11 = vector.load %arg8[%c0_12, %c640] : memref<16x1024xbf16, #tpu.memory_space<vmem>>, vector<16x256xbf16>
    tpu.vector_store %arg8[%c0_12, %c640], %10 {strides = array<i32>} : memref<16x1024xbf16, #tpu.memory_space<vmem>>, vector<16x256xbf16>,
    %c0_13 = arith.constant 0 : index
    %c111 = arith.constant 111 : index
    %12 = vector.load %arg8[%c0_13, %c111] : memref<16x1024xbf16, #tpu.memory_space<vmem>>, vector<16x768xbf16>
    %c1_i32 = arith.constant 1 : i32
    %13 = vector.broadcast %c1_i32 : i32 to vector<1x768xi32>
    %14 = arith.cmpi sge, %0, %13 : vector<1x768xi32>
    %c1_i32_14 = arith.constant 1 : i32
    %15 = vector.broadcast %c1_i32_14 : i32 to vector<1x768xi32>
    %16 = arith.cmpi sge, %1, %15 : vector<1x768xi32>
    %17 = arith.andi %14, %16 : vector<1x768xi1>
    %cst = arith.constant 0.000000e+00 : f32
    %18 = arith.truncf %cst : f32 to bf16
    %19 = vector.shape_cast %17 : vector<1x768xi1> to vector<1x768xi1>
    %20 = vector.broadcast %19 : vector<1x768xi1> to vector<16x768xi1>
    %21 = vector.broadcast %18 : bf16 to vector<16x768xbf16>
    %22 = arith.select %20, %12, %21 : vector<16x768xi1>, vector<16x768xbf16>
    %c0_15 = arith.constant 0 : index
    %c0_16 = arith.constant 0 : index
    %23 = vector.load %arg9[%c0_15, %c0_16] : memref<144x768xbf16, #tpu.memory_space<vmem>>, vector<16x768xbf16>
    tpu.vector_store %arg9[%c0_15, %c0_16], %22 {strides = array<i32>} : memref<144x768xbf16, #tpu.memory_space<vmem>>, vector<16x768xbf16>,
    %c0_17 = arith.constant 0 : index
    %c112 = arith.constant 112 : index
    %24 = vector.load %arg8[%c0_17, %c112] : memref<16x1024xbf16, #tpu.memory_space<vmem>>, vector<16x768xbf16>
    %c1_i32_18 = arith.constant 1 : i32
    %25 = vector.broadcast %c1_i32_18 : i32 to vector<1x768xi32>
    %26 = arith.cmpi sge, %0, %25 : vector<1x768xi32>
    %cst_19 = arith.constant 0.000000e+00 : f32
    %27 = arith.truncf %cst_19 : f32 to bf16
    %28 = vector.shape_cast %26 : vector<1x768xi1> to vector<1x768xi1>
    %29 = vector.broadcast %28 : vector<1x768xi1> to vector<16x768xi1>
    %30 = vector.broadcast %27 : bf16 to vector<16x768xbf16>
    %31 = arith.select %29, %24, %30 : vector<16x768xi1>, vector<16x768xbf16>
    %c16 = arith.constant 16 : index
    %c0_20 = arith.constant 0 : index
    %32 = vector.load %arg9[%c16, %c0_20] : memref<144x768xbf16, #tpu.memory_space<vmem>>, vector<16x768xbf16>
    tpu.vector_store %arg9[%c16, %c0_20], %31 {strides = array<i32>} : memref<144x768xbf16, #tpu.memory_space<vmem>>, vector<16x768xbf16>,
    %c0_21 = arith.constant 0 : index
    %c113 = arith.constant 113 : index
    %33 = vector.load %arg8[%c0_21, %c113] : memref<16x1024xbf16, #tpu.memory_space<vmem>>, vector<16x768xbf16>
    %c1_i32_22 = arith.constant 1 : i32
    %34 = vector.broadcast %c1_i32_22 : i32 to vector<1x768xi32>
    %35 = arith.cmpi sge, %0, %34 : vector<1x768xi32>
    %c15_i32 = arith.constant 15 : i32
    %36 = vector.broadcast %c15_i32 : i32 to vector<1x768xi32>
    %37 = arith.cmpi slt, %1, %36 : vector<1x768xi32>
    %38 = arith.andi %35, %37 : vector<1x768xi1>
    %cst_23 = arith.constant 0.000000e+00 : f32
    %39 = arith.truncf %cst_23 : f32 to bf16
    %40 = vector.shape_cast %38 : vector<1x768xi1> to vector<1x768xi1>
    %41 = vector.broadcast %40 : vector<1x768xi1> to vector<16x768xi1>
    %42 = vector.broadcast %39 : bf16 to vector<16x768xbf16>
    %43 = arith.select %41, %33, %42 : vector<16x768xi1>, vector<16x768xbf16>
    %c32 = arith.constant 32 : index
    %c0_24 = arith.constant 0 : index
    %44 = vector.load %arg9[%c32, %c0_24] : memref<144x768xbf16, #tpu.memory_space<vmem>>, vector<16x768xbf16>
    tpu.vector_store %arg9[%c32, %c0_24], %43 {strides = array<i32>} : memref<144x768xbf16, #tpu.memory_space<vmem>>, vector<16x768xbf16>,
    %c0_25 = arith.constant 0 : index
    %c127 = arith.constant 127 : index
    %45 = vector.load %arg8[%c0_25, %c127] : memref<16x1024xbf16, #tpu.memory_space<vmem>>, vector<16x768xbf16>
    %c1_i32_26 = arith.constant 1 : i32
    %46 = vector.broadcast %c1_i32_26 : i32 to vector<1x768xi32>
    %47 = arith.cmpi sge, %1, %46 : vector<1x768xi32>
    %cst_27 = arith.constant 0.000000e+00 : f32
    %48 = arith.truncf %cst_27 : f32 to bf16
    %49 = vector.shape_cast %47 : vector<1x768xi1> to vector<1x768xi1>
    %50 = vector.broadcast %49 : vector<1x768xi1> to vector<16x768xi1>
    %51 = vector.broadcast %48 : bf16 to vector<16x768xbf16>
    %52 = arith.select %50, %45, %51 : vector<16x768xi1>, vector<16x768xbf16>
    %c48 = arith.constant 48 : index
    %c0_28 = arith.constant 0 : index
    %53 = vector.load %arg9[%c48, %c0_28] : memref<144x768xbf16, #tpu.memory_space<vmem>>, vector<16x768xbf16>
    tpu.vector_store %arg9[%c48, %c0_28], %52 {strides = array<i32>} : memref<144x768xbf16, #tpu.memory_space<vmem>>, vector<16x768xbf16>,
    %c0_29 = arith.constant 0 : index
    %c128_30 = arith.constant 128 : index
    %54 = vector.load %arg8[%c0_29, %c128_30] : memref<16x1024xbf16, #tpu.memory_space<vmem>>, vector<16x768xbf16>
    %c64 = arith.constant 64 : index
    %c0_31 = arith.constant 0 : index
    %55 = vector.load %arg9[%c64, %c0_31] : memref<144x768xbf16, #tpu.memory_space<vmem>>, vector<16x768xbf16>
    tpu.vector_store %arg9[%c64, %c0_31], %54 {strides = array<i32>} : memref<144x768xbf16, #tpu.memory_space<vmem>>, vector<16x768xbf16>,
    %c0_32 = arith.constant 0 : index
    %c129 = arith.constant 129 : index
    %56 = vector.load %arg8[%c0_32, %c129] : memref<16x1024xbf16, #tpu.memory_space<vmem>>, vector<16x768xbf16>
    %c15_i32_33 = arith.constant 15 : i32
    %57 = vector.broadcast %c15_i32_33 : i32 to vector<1x768xi32>
    %58 = arith.cmpi slt, %1, %57 : vector<1x768xi32>
    %cst_34 = arith.constant 0.000000e+00 : f32
    %59 = arith.truncf %cst_34 : f32 to bf16
    %60 = vector.shape_cast %58 : vector<1x768xi1> to vector<1x768xi1>
    %61 = vector.broadcast %60 : vector<1x768xi1> to vector<16x768xi1>
    %62 = vector.broadcast %59 : bf16 to vector<16x768xbf16>
    %63 = arith.select %61, %56, %62 : vector<16x768xi1>, vector<16x768xbf16>
    %c80 = arith.constant 80 : index
    %c0_35 = arith.constant 0 : index
    %64 = vector.load %arg9[%c80, %c0_35] : memref<144x768xbf16, #tpu.memory_space<vmem>>, vector<16x768xbf16>
    tpu.vector_store %arg9[%c80, %c0_35], %63 {strides = array<i32>} : memref<144x768xbf16, #tpu.memory_space<vmem>>, vector<16x768xbf16>,
    %c0_36 = arith.constant 0 : index
    %c143 = arith.constant 143 : index
    %65 = vector.load %arg8[%c0_36, %c143] : memref<16x1024xbf16, #tpu.memory_space<vmem>>, vector<16x768xbf16>
    %c15_i32_37 = arith.constant 15 : i32
    %66 = vector.broadcast %c15_i32_37 : i32 to vector<1x768xi32>
    %67 = arith.cmpi slt, %0, %66 : vector<1x768xi32>
    %c1_i32_38 = arith.constant 1 : i32
    %68 = vector.broadcast %c1_i32_38 : i32 to vector<1x768xi32>
    %69 = arith.cmpi sge, %1, %68 : vector<1x768xi32>
    %70 = arith.andi %67, %69 : vector<1x768xi1>
    %cst_39 = arith.constant 0.000000e+00 : f32
    %71 = arith.truncf %cst_39 : f32 to bf16
    %72 = vector.shape_cast %70 : vector<1x768xi1> to vector<1x768xi1>
    %73 = vector.broadcast %72 : vector<1x768xi1> to vector<16x768xi1>
    %74 = vector.broadcast %71 : bf16 to vector<16x768xbf16>
    %75 = arith.select %73, %65, %74 : vector<16x768xi1>, vector<16x768xbf16>
    %c96 = arith.constant 96 : index
    %c0_40 = arith.constant 0 : index
    %76 = vector.load %arg9[%c96, %c0_40] : memref<144x768xbf16, #tpu.memory_space<vmem>>, vector<16x768xbf16>
    tpu.vector_store %arg9[%c96, %c0_40], %75 {strides = array<i32>} : memref<144x768xbf16, #tpu.memory_space<vmem>>, vector<16x768xbf16>,
    %c0_41 = arith.constant 0 : index
    %c144 = arith.constant 144 : index
    %77 = vector.load %arg8[%c0_41, %c144] : memref<16x1024xbf16, #tpu.memory_space<vmem>>, vector<16x768xbf16>
    %c15_i32_42 = arith.constant 15 : i32
    %78 = vector.broadcast %c15_i32_42 : i32 to vector<1x768xi32>
    %79 = arith.cmpi slt, %0, %78 : vector<1x768xi32>
    %cst_43 = arith.constant 0.000000e+00 : f32
    %80 = arith.truncf %cst_43 : f32 to bf16
    %81 = vector.shape_cast %79 : vector<1x768xi1> to vector<1x768xi1>
    %82 = vector.broadcast %81 : vector<1x768xi1> to vector<16x768xi1>
    %83 = vector.broadcast %80 : bf16 to vector<16x768xbf16>
    %84 = arith.select %82, %77, %83 : vector<16x768xi1>, vector<16x768xbf16>
    %c112_44 = arith.constant 112 : index
    %c0_45 = arith.constant 0 : index
    %85 = vector.load %arg9[%c112_44, %c0_45] : memref<144x768xbf16, #tpu.memory_space<vmem>>, vector<16x768xbf16>
    tpu.vector_store %arg9[%c112_44, %c0_45], %84 {strides = array<i32>} : memref<144x768xbf16, #tpu.memory_space<vmem>>, vector<16x768xbf16>,
    %c0_46 = arith.constant 0 : index
    %c145 = arith.constant 145 : index
    %86 = vector.load %arg8[%c0_46, %c145] : memref<16x1024xbf16, #tpu.memory_space<vmem>>, vector<16x768xbf16>
    %c15_i32_47 = arith.constant 15 : i32
    %87 = vector.broadcast %c15_i32_47 : i32 to vector<1x768xi32>
    %88 = arith.cmpi slt, %0, %87 : vector<1x768xi32>
    %c15_i32_48 = arith.constant 15 : i32
    %89 = vector.broadcast %c15_i32_48 : i32 to vector<1x768xi32>
    %90 = arith.cmpi slt, %1, %89 : vector<1x768xi32>
    %91 = arith.andi %88, %90 : vector<1x768xi1>
    %cst_49 = arith.constant 0.000000e+00 : f32
    %92 = arith.truncf %cst_49 : f32 to bf16
    %93 = vector.shape_cast %91 : vector<1x768xi1> to vector<1x768xi1>
    %94 = vector.broadcast %93 : vector<1x768xi1> to vector<16x768xi1>
    %95 = vector.broadcast %92 : bf16 to vector<16x768xbf16>
    %96 = arith.select %94, %86, %95 : vector<16x768xi1>, vector<16x768xbf16>
    %c128_50 = arith.constant 128 : index
    %c0_51 = arith.constant 0 : index
    %97 = vector.load %arg9[%c128_50, %c0_51] : memref<144x768xbf16, #tpu.memory_space<vmem>>, vector<16x768xbf16>
    tpu.vector_store %arg9[%c128_50, %c0_51], %96 {strides = array<i32>} : memref<144x768xbf16, #tpu.memory_space<vmem>>, vector<16x768xbf16>,
    %c0_52 = arith.constant 0 : index
    %c0_53 = arith.constant 0 : index
    %98 = vector.load %arg2[%c0_52, %c0_53] : memref<8x144xbf16, #tpu.memory_space<vmem>>, vector<8x144xbf16>
    %c0_54 = arith.constant 0 : index
    %c0_55 = arith.constant 0 : index
    %99 = vector.load %arg9[%c0_54, %c0_55] : memref<144x768xbf16, #tpu.memory_space<vmem>>, vector<144x768xbf16>
    %cst_56 = arith.constant dense<0.000000e+00> : vector<8x768xf32>
    %100 = tpu.matmul %98, %99, %cst_56 {dimension_numbers = #tpu.dot_dimension_numbers<[1], [0], [0], [1], [0, 0, 1, 1], [], []>} : vector<8x144xbf16>, vector<144x768xbf16>, vector<8x768xf32> -> vector<8x768xf32>
    %c0_57 = arith.constant 0 : index
    %c0_58 = arith.constant 0 : index
    %101 = vector.load %arg4[%c0_57, %c0_58] : memref<8x16xbf16, #tpu.memory_space<vmem>>, vector<8x16xbf16>
    %c0_59 = arith.constant 0 : index
    %c128_60 = arith.constant 128 : index
    %102 = vector.load %arg8[%c0_59, %c128_60] : memref<16x1024xbf16, #tpu.memory_space<vmem>>, vector<16x768xbf16>
    %cst_61 = arith.constant dense<0.000000e+00> : vector<8x768xf32>
    %103 = tpu.matmul %101, %102, %cst_61 {dimension_numbers = #tpu.dot_dimension_numbers<[1], [0], [0], [1], [0, 0, 1, 1], [], []>} : vector<8x16xbf16>, vector<16x768xbf16>, vector<8x768xf32> -> vector<8x768xf32>
    %104 = vector.extract_strided_slice %100 {offsets = [0, 0], sizes = [8, 256], strides = [1, 1]} : vector<8x768xf32> to vector<8x256xf32>
    %105 = arith.mulf %104, %104 : vector<8x256xf32>
    %106 = tpu.concatenate %104, %105 in 0 : vector<8x256xf32>, vector<8x256xf32> -> vector<16x256xf32>
    %cst_62 = arith.constant dense<0.000000e+00> : vector<16xf32>
    %107 = vector.multi_reduction <add>, %106, %cst_62 [1] : vector<16x256xf32> to vector<16xf32>
    %108 = vector.shape_cast %107 : vector<16xf32> to vector<16x1xf32>
    %109 = vector.extract_strided_slice %108 {offsets = [0, 0], sizes = [8, 1], strides = [1, 1]} : vector<16x1xf32> to vector<8x1xf32>
    %cst_63 = arith.constant 3.906250e-03 : f32
    %110 = vector.broadcast %cst_63 : f32 to vector<8x1xf32>
    %111 = arith.mulf %109, %110 : vector<8x1xf32>
    %112 = vector.extract_strided_slice %108 {offsets = [8, 0], sizes = [8, 1], strides = [1, 1]} : vector<16x1xf32> to vector<8x1xf32>
    %cst_64 = arith.constant 3.906250e-03 : f32
    %113 = vector.broadcast %cst_64 : f32 to vector<8x1xf32>
    %114 = arith.mulf %112, %113 : vector<8x1xf32>
    %115 = arith.mulf %111, %111 : vector<8x1xf32>
    %116 = arith.subf %114, %115 : vector<8x1xf32>
    %cst_65 = arith.constant 0.000000e+00 : f32
    %117 = vector.broadcast %cst_65 : f32 to vector<8x1xf32>
    %118 = arith.maximumf %116, %117 : vector<8x1xf32>
    %119 = vector.broadcast %111 : vector<8x1xf32> to vector<8x256xf32>
    %120 = arith.subf %104, %119 : vector<8x256xf32>
    %cst_66 = arith.constant 9.99999974E-6 : f32
    %121 = vector.broadcast %cst_66 : f32 to vector<8x1xf32>
    %122 = arith.addf %118, %121 : vector<8x1xf32>
    %123 = math.rsqrt %122 : vector<8x1xf32>
    %124 = vector.broadcast %123 : vector<8x1xf32> to vector<8x256xf32>
    %125 = arith.mulf %120, %124 : vector<8x256xf32>
    %cst_67 = arith.constant 0.000000e+00 : f32
    %126 = vector.broadcast %cst_67 : f32 to vector<8x256xf32>
    %127 = arith.cmpf oge, %125, %126 : vector<8x256xf32>
    %cst_68 = arith.constant 2.000000e-01 : f32
    %128 = vector.broadcast %cst_68 : f32 to vector<8x256xf32>
    %129 = arith.mulf %128, %125 : vector<8x256xf32>
    %130 = arith.select %127, %125, %129 : vector<8x256xi1>, vector<8x256xf32>
    %131 = arith.truncf %130 : vector<8x256xf32> to vector<8x256xbf16>
    %c0_69 = arith.constant 0 : index
    %c128_70 = arith.constant 128 : index
    %132 = vector.load %arg8[%c0_69, %c128_70] : memref<16x1024xbf16, #tpu.memory_space<vmem>>, vector<8x256xbf16>
    tpu.vector_store %arg8[%c0_69, %c128_70], %131 {strides = array<i32>} : memref<16x1024xbf16, #tpu.memory_space<vmem>>, vector<8x256xbf16>,
    %133 = vector.extract_strided_slice %100 {offsets = [0, 256], sizes = [8, 256], strides = [1, 1]} : vector<8x768xf32> to vector<8x256xf32>
    %134 = arith.mulf %133, %133 : vector<8x256xf32>
    %135 = tpu.concatenate %133, %134 in 0 : vector<8x256xf32>, vector<8x256xf32> -> vector<16x256xf32>
    %cst_71 = arith.constant dense<0.000000e+00> : vector<16xf32>
    %136 = vector.multi_reduction <add>, %135, %cst_71 [1] : vector<16x256xf32> to vector<16xf32>
    %137 = vector.shape_cast %136 : vector<16xf32> to vector<16x1xf32>
    %138 = vector.extract_strided_slice %137 {offsets = [0, 0], sizes = [8, 1], strides = [1, 1]} : vector<16x1xf32> to vector<8x1xf32>
    %cst_72 = arith.constant 3.906250e-03 : f32
    %139 = vector.broadcast %cst_72 : f32 to vector<8x1xf32>
    %140 = arith.mulf %138, %139 : vector<8x1xf32>
    %141 = vector.extract_strided_slice %137 {offsets = [8, 0], sizes = [8, 1], strides = [1, 1]} : vector<16x1xf32> to vector<8x1xf32>
    %cst_73 = arith.constant 3.906250e-03 : f32
    %142 = vector.broadcast %cst_73 : f32 to vector<8x1xf32>
    %143 = arith.mulf %141, %142 : vector<8x1xf32>
    %144 = arith.mulf %140, %140 : vector<8x1xf32>
    %145 = arith.subf %143, %144 : vector<8x1xf32>
    %cst_74 = arith.constant 0.000000e+00 : f32
    %146 = vector.broadcast %cst_74 : f32 to vector<8x1xf32>
    %147 = arith.maximumf %145, %146 : vector<8x1xf32>
    %148 = vector.broadcast %140 : vector<8x1xf32> to vector<8x256xf32>
    %149 = arith.subf %133, %148 : vector<8x256xf32>
    %cst_75 = arith.constant 9.99999974E-6 : f32
    %150 = vector.broadcast %cst_75 : f32 to vector<8x1xf32>
    %151 = arith.addf %147, %150 : vector<8x1xf32>
    %152 = math.rsqrt %151 : vector<8x1xf32>
    %153 = vector.broadcast %152 : vector<8x1xf32> to vector<8x256xf32>
    %154 = arith.mulf %149, %153 : vector<8x256xf32>
    %cst_76 = arith.constant 0.000000e+00 : f32
    %155 = vector.broadcast %cst_76 : f32 to vector<8x256xf32>
    %156 = arith.cmpf oge, %154, %155 : vector<8x256xf32>
    %cst_77 = arith.constant 2.000000e-01 : f32
    %157 = vector.broadcast %cst_77 : f32 to vector<8x256xf32>
    %158 = arith.mulf %157, %154 : vector<8x256xf32>
    %159 = arith.select %156, %154, %158 : vector<8x256xi1>, vector<8x256xf32>
    %160 = arith.truncf %159 : vector<8x256xf32> to vector<8x256xbf16>
    %c0_78 = arith.constant 0 : index
    %c384_79 = arith.constant 384 : index
    %161 = vector.load %arg8[%c0_78, %c384_79] : memref<16x1024xbf16, #tpu.memory_space<vmem>>, vector<8x256xbf16>
    tpu.vector_store %arg8[%c0_78, %c384_79], %160 {strides = array<i32>} : memref<16x1024xbf16, #tpu.memory_space<vmem>>, vector<8x256xbf16>,
    %162 = vector.extract_strided_slice %100 {offsets = [0, 512], sizes = [8, 256], strides = [1, 1]} : vector<8x768xf32> to vector<8x256xf32>
    %163 = arith.mulf %162, %162 : vector<8x256xf32>
    %164 = tpu.concatenate %162, %163 in 0 : vector<8x256xf32>, vector<8x256xf32> -> vector<16x256xf32>
    %cst_80 = arith.constant dense<0.000000e+00> : vector<16xf32>
    %165 = vector.multi_reduction <add>, %164, %cst_80 [1] : vector<16x256xf32> to vector<16xf32>
    %166 = vector.shape_cast %165 : vector<16xf32> to vector<16x1xf32>
    %167 = vector.extract_strided_slice %166 {offsets = [0, 0], sizes = [8, 1], strides = [1, 1]} : vector<16x1xf32> to vector<8x1xf32>
    %cst_81 = arith.constant 3.906250e-03 : f32
    %168 = vector.broadcast %cst_81 : f32 to vector<8x1xf32>
    %169 = arith.mulf %167, %168 : vector<8x1xf32>
    %170 = vector.extract_strided_slice %166 {offsets = [8, 0], sizes = [8, 1], strides = [1, 1]} : vector<16x1xf32> to vector<8x1xf32>
    %cst_82 = arith.constant 3.906250e-03 : f32
    %171 = vector.broadcast %cst_82 : f32 to vector<8x1xf32>
    %172 = arith.mulf %170, %171 : vector<8x1xf32>
    %173 = arith.mulf %169, %169 : vector<8x1xf32>
    %174 = arith.subf %172, %173 : vector<8x1xf32>
    %cst_83 = arith.constant 0.000000e+00 : f32
    %175 = vector.broadcast %cst_83 : f32 to vector<8x1xf32>
    %176 = arith.maximumf %174, %175 : vector<8x1xf32>
    %177 = vector.broadcast %169 : vector<8x1xf32> to vector<8x256xf32>
    %178 = arith.subf %162, %177 : vector<8x256xf32>
    %cst_84 = arith.constant 9.99999974E-6 : f32
    %179 = vector.broadcast %cst_84 : f32 to vector<8x1xf32>
    %180 = arith.addf %176, %179 : vector<8x1xf32>
    %181 = math.rsqrt %180 : vector<8x1xf32>
    %182 = vector.broadcast %181 : vector<8x1xf32> to vector<8x256xf32>
    %183 = arith.mulf %178, %182 : vector<8x256xf32>
    %cst_85 = arith.constant 0.000000e+00 : f32
    %184 = vector.broadcast %cst_85 : f32 to vector<8x256xf32>
    %185 = arith.cmpf oge, %183, %184 : vector<8x256xf32>
    %cst_86 = arith.constant 2.000000e-01 : f32
    %186 = vector.broadcast %cst_86 : f32 to vector<8x256xf32>
    %187 = arith.mulf %186, %183 : vector<8x256xf32>
    %188 = arith.select %185, %183, %187 : vector<8x256xi1>, vector<8x256xf32>
    %189 = arith.truncf %188 : vector<8x256xf32> to vector<8x256xbf16>
    %c0_87 = arith.constant 0 : index
    %c640_88 = arith.constant 640 : index
    %190 = vector.load %arg8[%c0_87, %c640_88] : memref<16x1024xbf16, #tpu.memory_space<vmem>>, vector<8x256xbf16>
    tpu.vector_store %arg8[%c0_87, %c640_88], %189 {strides = array<i32>} : memref<16x1024xbf16, #tpu.memory_space<vmem>>, vector<8x256xbf16>,
    %c0_89 = arith.constant 0 : index
    %c111_90 = arith.constant 111 : index
    %191 = vector.load %arg8[%c0_89, %c111_90] : memref<16x1024xbf16, #tpu.memory_space<vmem>>, vector<16x768xbf16>
    %c1_i32_91 = arith.constant 1 : i32
    %192 = vector.broadcast %c1_i32_91 : i32 to vector<1x768xi32>
    %193 = arith.cmpi sge, %0, %192 : vector<1x768xi32>
    %c1_i32_92 = arith.constant 1 : i32
    %194 = vector.broadcast %c1_i32_92 : i32 to vector<1x768xi32>
    %195 = arith.cmpi sge, %1, %194 : vector<1x768xi32>
    %c8_i32 = arith.constant 8 : i32
    %196 = vector.broadcast %c8_i32 : i32 to vector<16x1xi32>
    %197 = arith.cmpi slt, %2, %196 : vector<16x1xi32>
    %198 = arith.andi %193, %195 : vector<1x768xi1>
    %199 = vector.broadcast %198 : vector<1x768xi1> to vector<16x768xi1>
    %200 = vector.broadcast %197 : vector<16x1xi1> to vector<16x768xi1>
    %201 = arith.andi %199, %200 : vector<16x768xi1>
    %cst_93 = arith.constant 0.000000e+00 : f32
    %202 = arith.truncf %cst_93 : f32 to bf16
    %203 = vector.broadcast %202 : bf16 to vector<16x768xbf16>
    %204 = arith.select %201, %191, %203 : vector<16x768xi1>, vector<16x768xbf16>
    %c0_94 = arith.constant 0 : index
    %c0_95 = arith.constant 0 : index
    %205 = vector.load %arg9[%c0_94, %c0_95] : memref<144x768xbf16, #tpu.memory_space<vmem>>, vector<16x768xbf16>
    tpu.vector_store %arg9[%c0_94, %c0_95], %204 {strides = array<i32>} : memref<144x768xbf16, #tpu.memory_space<vmem>>, vector<16x768xbf16>,
    %c0_96 = arith.constant 0 : index
    %c112_97 = arith.constant 112 : index
    %206 = vector.load %arg8[%c0_96, %c112_97] : memref<16x1024xbf16, #tpu.memory_space<vmem>>, vector<16x768xbf16>
    %c1_i32_98 = arith.constant 1 : i32
    %207 = vector.broadcast %c1_i32_98 : i32 to vector<1x768xi32>
    %208 = arith.cmpi sge, %0, %207 : vector<1x768xi32>
    %c8_i32_99 = arith.constant 8 : i32
    %209 = vector.broadcast %c8_i32_99 : i32 to vector<16x1xi32>
    %210 = arith.cmpi slt, %2, %209 : vector<16x1xi32>
    %211 = vector.broadcast %208 : vector<1x768xi1> to vector<16x768xi1>
    %212 = vector.broadcast %210 : vector<16x1xi1> to vector<16x768xi1>
    %213 = arith.andi %211, %212 : vector<16x768xi1>
    %cst_100 = arith.constant 0.000000e+00 : f32
    %214 = arith.truncf %cst_100 : f32 to bf16
    %215 = vector.broadcast %214 : bf16 to vector<16x768xbf16>
    %216 = arith.select %213, %206, %215 : vector<16x768xi1>, vector<16x768xbf16>
    %c16_101 = arith.constant 16 : index
    %c0_102 = arith.constant 0 : index
    %217 = vector.load %arg9[%c16_101, %c0_102] : memref<144x768xbf16, #tpu.memory_space<vmem>>, vector<16x768xbf16>
    tpu.vector_store %arg9[%c16_101, %c0_102], %216 {strides = array<i32>} : memref<144x768xbf16, #tpu.memory_space<vmem>>, vector<16x768xbf16>,
    %c0_103 = arith.constant 0 : index
    %c113_104 = arith.constant 113 : index
    %218 = vector.load %arg8[%c0_103, %c113_104] : memref<16x1024xbf16, #tpu.memory_space<vmem>>, vector<16x768xbf16>
    %c1_i32_105 = arith.constant 1 : i32
    %219 = vector.broadcast %c1_i32_105 : i32 to vector<1x768xi32>
    %220 = arith.cmpi sge, %0, %219 : vector<1x768xi32>
    %c15_i32_106 = arith.constant 15 : i32
    %221 = vector.broadcast %c15_i32_106 : i32 to vector<1x768xi32>
    %222 = arith.cmpi slt, %1, %221 : vector<1x768xi32>
    %c8_i32_107 = arith.constant 8 : i32
    %223 = vector.broadcast %c8_i32_107 : i32 to vector<16x1xi32>
    %224 = arith.cmpi slt, %2, %223 : vector<16x1xi32>
    %225 = arith.andi %220, %222 : vector<1x768xi1>
    %226 = vector.broadcast %225 : vector<1x768xi1> to vector<16x768xi1>
    %227 = vector.broadcast %224 : vector<16x1xi1> to vector<16x768xi1>
    %228 = arith.andi %226, %227 : vector<16x768xi1>
    %cst_108 = arith.constant 0.000000e+00 : f32
    %229 = arith.truncf %cst_108 : f32 to bf16
    %230 = vector.broadcast %229 : bf16 to vector<16x768xbf16>
    %231 = arith.select %228, %218, %230 : vector<16x768xi1>, vector<16x768xbf16>
    %c32_109 = arith.constant 32 : index
    %c0_110 = arith.constant 0 : index
    %232 = vector.load %arg9[%c32_109, %c0_110] : memref<144x768xbf16, #tpu.memory_space<vmem>>, vector<16x768xbf16>
    tpu.vector_store %arg9[%c32_109, %c0_110], %231 {strides = array<i32>} : memref<144x768xbf16, #tpu.memory_space<vmem>>, vector<16x768xbf16>,
    %c0_111 = arith.constant 0 : index
    %c127_112 = arith.constant 127 : index
    %233 = vector.load %arg8[%c0_111, %c127_112] : memref<16x1024xbf16, #tpu.memory_space<vmem>>, vector<16x768xbf16>
    %c1_i32_113 = arith.constant 1 : i32
    %234 = vector.broadcast %c1_i32_113 : i32 to vector<1x768xi32>
    %235 = arith.cmpi sge, %1, %234 : vector<1x768xi32>
    %c8_i32_114 = arith.constant 8 : i32
    %236 = vector.broadcast %c8_i32_114 : i32 to vector<16x1xi32>
    %237 = arith.cmpi slt, %2, %236 : vector<16x1xi32>
    %238 = vector.broadcast %235 : vector<1x768xi1> to vector<16x768xi1>
    %239 = vector.broadcast %237 : vector<16x1xi1> to vector<16x768xi1>
    %240 = arith.andi %238, %239 : vector<16x768xi1>
    %cst_115 = arith.constant 0.000000e+00 : f32
    %241 = arith.truncf %cst_115 : f32 to bf16
    %242 = vector.broadcast %241 : bf16 to vector<16x768xbf16>
    %243 = arith.select %240, %233, %242 : vector<16x768xi1>, vector<16x768xbf16>
    %c48_116 = arith.constant 48 : index
    %c0_117 = arith.constant 0 : index
    %244 = vector.load %arg9[%c48_116, %c0_117] : memref<144x768xbf16, #tpu.memory_space<vmem>>, vector<16x768xbf16>
    tpu.vector_store %arg9[%c48_116, %c0_117], %243 {strides = array<i32>} : memref<144x768xbf16, #tpu.memory_space<vmem>>, vector<16x768xbf16>,
    %c0_118 = arith.constant 0 : index
    %c128_119 = arith.constant 128 : index
    %245 = vector.load %arg8[%c0_118, %c128_119] : memref<16x1024xbf16, #tpu.memory_space<vmem>>, vector<16x768xbf16>
    %c8_i32_120 = arith.constant 8 : i32
    %246 = vector.broadcast %c8_i32_120 : i32 to vector<16x1xi32>
    %247 = arith.cmpi slt, %2, %246 : vector<16x1xi32>
    %cst_121 = arith.constant 0.000000e+00 : f32
    %248 = arith.truncf %cst_121 : f32 to bf16
    %249 = vector.shape_cast %247 : vector<16x1xi1> to vector<16x1xi1>
    %250 = vector.broadcast %249 : vector<16x1xi1> to vector<16x768xi1>
    %251 = vector.broadcast %248 : bf16 to vector<16x768xbf16>
    %252 = arith.select %250, %245, %251 : vector<16x768xi1>, vector<16x768xbf16>
    %c64_122 = arith.constant 64 : index
    %c0_123 = arith.constant 0 : index
    %253 = vector.load %arg9[%c64_122, %c0_123] : memref<144x768xbf16, #tpu.memory_space<vmem>>, vector<16x768xbf16>
    tpu.vector_store %arg9[%c64_122, %c0_123], %252 {strides = array<i32>} : memref<144x768xbf16, #tpu.memory_space<vmem>>, vector<16x768xbf16>,
    %c0_124 = arith.constant 0 : index
    %c129_125 = arith.constant 129 : index
    %254 = vector.load %arg8[%c0_124, %c129_125] : memref<16x1024xbf16, #tpu.memory_space<vmem>>, vector<16x768xbf16>
    %c15_i32_126 = arith.constant 15 : i32
    %255 = vector.broadcast %c15_i32_126 : i32 to vector<1x768xi32>
    %256 = arith.cmpi slt, %1, %255 : vector<1x768xi32>
    %c8_i32_127 = arith.constant 8 : i32
    %257 = vector.broadcast %c8_i32_127 : i32 to vector<16x1xi32>
    %258 = arith.cmpi slt, %2, %257 : vector<16x1xi32>
    %259 = vector.broadcast %256 : vector<1x768xi1> to vector<16x768xi1>
    %260 = vector.broadcast %258 : vector<16x1xi1> to vector<16x768xi1>
    %261 = arith.andi %259, %260 : vector<16x768xi1>
    %cst_128 = arith.constant 0.000000e+00 : f32
    %262 = arith.truncf %cst_128 : f32 to bf16
    %263 = vector.broadcast %262 : bf16 to vector<16x768xbf16>
    %264 = arith.select %261, %254, %263 : vector<16x768xi1>, vector<16x768xbf16>
    %c80_129 = arith.constant 80 : index
    %c0_130 = arith.constant 0 : index
    %265 = vector.load %arg9[%c80_129, %c0_130] : memref<144x768xbf16, #tpu.memory_space<vmem>>, vector<16x768xbf16>
    tpu.vector_store %arg9[%c80_129, %c0_130], %264 {strides = array<i32>} : memref<144x768xbf16, #tpu.memory_space<vmem>>, vector<16x768xbf16>,
    %c0_131 = arith.constant 0 : index
    %c143_132 = arith.constant 143 : index
    %266 = vector.load %arg8[%c0_131, %c143_132] : memref<16x1024xbf16, #tpu.memory_space<vmem>>, vector<16x768xbf16>
    %c15_i32_133 = arith.constant 15 : i32
    %267 = vector.broadcast %c15_i32_133 : i32 to vector<1x768xi32>
    %268 = arith.cmpi slt, %0, %267 : vector<1x768xi32>
    %c1_i32_134 = arith.constant 1 : i32
    %269 = vector.broadcast %c1_i32_134 : i32 to vector<1x768xi32>
    %270 = arith.cmpi sge, %1, %269 : vector<1x768xi32>
    %c8_i32_135 = arith.constant 8 : i32
    %271 = vector.broadcast %c8_i32_135 : i32 to vector<16x1xi32>
    %272 = arith.cmpi slt, %2, %271 : vector<16x1xi32>
    %273 = arith.andi %268, %270 : vector<1x768xi1>
    %274 = vector.broadcast %273 : vector<1x768xi1> to vector<16x768xi1>
    %275 = vector.broadcast %272 : vector<16x1xi1> to vector<16x768xi1>
    %276 = arith.andi %274, %275 : vector<16x768xi1>
    %cst_136 = arith.constant 0.000000e+00 : f32
    %277 = arith.truncf %cst_136 : f32 to bf16
    %278 = vector.broadcast %277 : bf16 to vector<16x768xbf16>
    %279 = arith.select %276, %266, %278 : vector<16x768xi1>, vector<16x768xbf16>
    %c96_137 = arith.constant 96 : index
    %c0_138 = arith.constant 0 : index
    %280 = vector.load %arg9[%c96_137, %c0_138] : memref<144x768xbf16, #tpu.memory_space<vmem>>, vector<16x768xbf16>
    tpu.vector_store %arg9[%c96_137, %c0_138], %279 {strides = array<i32>} : memref<144x768xbf16, #tpu.memory_space<vmem>>, vector<16x768xbf16>,
    %c0_139 = arith.constant 0 : index
    %c144_140 = arith.constant 144 : index
    %281 = vector.load %arg8[%c0_139, %c144_140] : memref<16x1024xbf16, #tpu.memory_space<vmem>>, vector<16x768xbf16>
    %c15_i32_141 = arith.constant 15 : i32
    %282 = vector.broadcast %c15_i32_141 : i32 to vector<1x768xi32>
    %283 = arith.cmpi slt, %0, %282 : vector<1x768xi32>
    %c8_i32_142 = arith.constant 8 : i32
    %284 = vector.broadcast %c8_i32_142 : i32 to vector<16x1xi32>
    %285 = arith.cmpi slt, %2, %284 : vector<16x1xi32>
    %286 = vector.broadcast %283 : vector<1x768xi1> to vector<16x768xi1>
    %287 = vector.broadcast %285 : vector<16x1xi1> to vector<16x768xi1>
    %288 = arith.andi %286, %287 : vector<16x768xi1>
    %cst_143 = arith.constant 0.000000e+00 : f32
    %289 = arith.truncf %cst_143 : f32 to bf16
    %290 = vector.broadcast %289 : bf16 to vector<16x768xbf16>
    %291 = arith.select %288, %281, %290 : vector<16x768xi1>, vector<16x768xbf16>
    %c112_144 = arith.constant 112 : index
    %c0_145 = arith.constant 0 : index
    %292 = vector.load %arg9[%c112_144, %c0_145] : memref<144x768xbf16, #tpu.memory_space<vmem>>, vector<16x768xbf16>
    tpu.vector_store %arg9[%c112_144, %c0_145], %291 {strides = array<i32>} : memref<144x768xbf16, #tpu.memory_space<vmem>>, vector<16x768xbf16>,
    %c0_146 = arith.constant 0 : index
    %c145_147 = arith.constant 145 : index
    %293 = vector.load %arg8[%c0_146, %c145_147] : memref<16x1024xbf16, #tpu.memory_space<vmem>>, vector<16x768xbf16>
    %c15_i32_148 = arith.constant 15 : i32
    %294 = vector.broadcast %c15_i32_148 : i32 to vector<1x768xi32>
    %295 = arith.cmpi slt, %0, %294 : vector<1x768xi32>
    %c15_i32_149 = arith.constant 15 : i32
    %296 = vector.broadcast %c15_i32_149 : i32 to vector<1x768xi32>
    %297 = arith.cmpi slt, %1, %296 : vector<1x768xi32>
    %c8_i32_150 = arith.constant 8 : i32
    %298 = vector.broadcast %c8_i32_150 : i32 to vector<16x1xi32>
    %299 = arith.cmpi slt, %2, %298 : vector<16x1xi32>
    %300 = arith.andi %295, %297 : vector<1x768xi1>
    %301 = vector.broadcast %300 : vector<1x768xi1> to vector<16x768xi1>
    %302 = vector.broadcast %299 : vector<16x1xi1> to vector<16x768xi1>
    %303 = arith.andi %301, %302 : vector<16x768xi1>
    %cst_151 = arith.constant 0.000000e+00 : f32
    %304 = arith.truncf %cst_151 : f32 to bf16
    %305 = vector.broadcast %304 : bf16 to vector<16x768xbf16>
    %306 = arith.select %303, %293, %305 : vector<16x768xi1>, vector<16x768xbf16>
    %c128_152 = arith.constant 128 : index
    %c0_153 = arith.constant 0 : index
    %307 = vector.load %arg9[%c128_152, %c0_153] : memref<144x768xbf16, #tpu.memory_space<vmem>>, vector<16x768xbf16>
    tpu.vector_store %arg9[%c128_152, %c0_153], %306 {strides = array<i32>} : memref<144x768xbf16, #tpu.memory_space<vmem>>, vector<16x768xbf16>,
    %c0_154 = arith.constant 0 : index
    %c0_155 = arith.constant 0 : index
    %308 = vector.load %arg3[%c0_154, %c0_155] : memref<8x144xbf16, #tpu.memory_space<vmem>>, vector<8x144xbf16>
    %c0_156 = arith.constant 0 : index
    %c0_157 = arith.constant 0 : index
    %309 = vector.load %arg9[%c0_156, %c0_157] : memref<144x768xbf16, #tpu.memory_space<vmem>>, vector<144x768xbf16>
    %cst_158 = arith.constant dense<0.000000e+00> : vector<8x768xf32>
    %310 = tpu.matmul %308, %309, %cst_158 {dimension_numbers = #tpu.dot_dimension_numbers<[1], [0], [0], [1], [0, 0, 1, 1], [], []>} : vector<8x144xbf16>, vector<144x768xbf16>, vector<8x768xf32> -> vector<8x768xf32>
    %311 = vector.extract_strided_slice %310 {offsets = [0, 0], sizes = [8, 256], strides = [1, 1]} : vector<8x768xf32> to vector<8x256xf32>
    %312 = vector.extract_strided_slice %103 {offsets = [0, 0], sizes = [8, 256], strides = [1, 1]} : vector<8x768xf32> to vector<8x256xf32>
    %313 = arith.mulf %312, %312 : vector<8x256xf32>
    %314 = tpu.concatenate %312, %313 in 0 : vector<8x256xf32>, vector<8x256xf32> -> vector<16x256xf32>
    %cst_159 = arith.constant dense<0.000000e+00> : vector<16xf32>
    %315 = vector.multi_reduction <add>, %314, %cst_159 [1] : vector<16x256xf32> to vector<16xf32>
    %316 = vector.shape_cast %315 : vector<16xf32> to vector<16x1xf32>
    %317 = vector.extract_strided_slice %316 {offsets = [0, 0], sizes = [8, 1], strides = [1, 1]} : vector<16x1xf32> to vector<8x1xf32>
    %cst_160 = arith.constant 3.906250e-03 : f32
    %318 = vector.broadcast %cst_160 : f32 to vector<8x1xf32>
    %319 = arith.mulf %317, %318 : vector<8x1xf32>
    %320 = vector.extract_strided_slice %316 {offsets = [8, 0], sizes = [8, 1], strides = [1, 1]} : vector<16x1xf32> to vector<8x1xf32>
    %cst_161 = arith.constant 3.906250e-03 : f32
    %321 = vector.broadcast %cst_161 : f32 to vector<8x1xf32>
    %322 = arith.mulf %320, %321 : vector<8x1xf32>
    %323 = arith.mulf %319, %319 : vector<8x1xf32>
    %324 = arith.subf %322, %323 : vector<8x1xf32>
    %cst_162 = arith.constant 0.000000e+00 : f32
    %325 = vector.broadcast %cst_162 : f32 to vector<8x1xf32>
    %326 = arith.maximumf %324, %325 : vector<8x1xf32>
    %327 = vector.broadcast %319 : vector<8x1xf32> to vector<8x256xf32>
    %328 = arith.subf %312, %327 : vector<8x256xf32>
    %cst_163 = arith.constant 9.99999974E-6 : f32
    %329 = vector.broadcast %cst_163 : f32 to vector<8x1xf32>
    %330 = arith.addf %326, %329 : vector<8x1xf32>
    %331 = math.rsqrt %330 : vector<8x1xf32>
    %332 = vector.broadcast %331 : vector<8x1xf32> to vector<8x256xf32>
    %333 = arith.mulf %328, %332 : vector<8x256xf32>
    %334 = arith.addf %311, %333 : vector<8x256xf32>
    %335 = arith.mulf %334, %334 : vector<8x256xf32>
    %336 = tpu.concatenate %334, %335 in 0 : vector<8x256xf32>, vector<8x256xf32> -> vector<16x256xf32>
    %cst_164 = arith.constant dense<0.000000e+00> : vector<16xf32>
    %337 = vector.multi_reduction <add>, %336, %cst_164 [1] : vector<16x256xf32> to vector<16xf32>
    %338 = vector.shape_cast %337 : vector<16xf32> to vector<16x1xf32>
    %339 = vector.extract_strided_slice %338 {offsets = [0, 0], sizes = [8, 1], strides = [1, 1]} : vector<16x1xf32> to vector<8x1xf32>
    %cst_165 = arith.constant 3.906250e-03 : f32
    %340 = vector.broadcast %cst_165 : f32 to vector<8x1xf32>
    %341 = arith.mulf %339, %340 : vector<8x1xf32>
    %342 = vector.extract_strided_slice %338 {offsets = [8, 0], sizes = [8, 1], strides = [1, 1]} : vector<16x1xf32> to vector<8x1xf32>
    %cst_166 = arith.constant 3.906250e-03 : f32
    %343 = vector.broadcast %cst_166 : f32 to vector<8x1xf32>
    %344 = arith.mulf %342, %343 : vector<8x1xf32>
    %345 = arith.mulf %341, %341 : vector<8x1xf32>
    %346 = arith.subf %344, %345 : vector<8x1xf32>
    %cst_167 = arith.constant 0.000000e+00 : f32
    %347 = vector.broadcast %cst_167 : f32 to vector<8x1xf32>
    %348 = arith.maximumf %346, %347 : vector<8x1xf32>
    %349 = vector.broadcast %341 : vector<8x1xf32> to vector<8x256xf32>
    %350 = arith.subf %334, %349 : vector<8x256xf32>
    %cst_168 = arith.constant 9.99999974E-6 : f32
    %351 = vector.broadcast %cst_168 : f32 to vector<8x1xf32>
    %352 = arith.addf %348, %351 : vector<8x1xf32>
    %353 = math.rsqrt %352 : vector<8x1xf32>
    %354 = vector.broadcast %353 : vector<8x1xf32> to vector<8x256xf32>
    %355 = arith.mulf %350, %354 : vector<8x256xf32>
    %cst_169 = arith.constant 0.000000e+00 : f32
    %356 = vector.broadcast %cst_169 : f32 to vector<8x256xf32>
    %357 = arith.cmpf oge, %355, %356 : vector<8x256xf32>
    %cst_170 = arith.constant 2.000000e-01 : f32
    %358 = vector.broadcast %cst_170 : f32 to vector<8x256xf32>
    %359 = arith.mulf %358, %355 : vector<8x256xf32>
    %360 = arith.select %357, %355, %359 : vector<8x256xi1>, vector<8x256xf32>
    %c0_171 = arith.constant 0 : index
    %c0_172 = arith.constant 0 : index
    %c0_173 = arith.constant 0 : index
    %361 = vector.load %arg7[%c0_171, %c0_172, %c0_173] : memref<3x8x256xf32, #tpu.memory_space<vmem>>, vector<1x8x256xf32>
    %362 = vector.shape_cast %361 : vector<1x8x256xf32> to vector<8x256xf32>
    %363 = vector.shape_cast %360 : vector<8x256xf32> to vector<1x8x256xf32>
    tpu.vector_store %arg7[%c0_171, %c0_172, %c0_173], %363 {strides = array<i32>} : memref<3x8x256xf32, #tpu.memory_space<vmem>>, vector<1x8x256xf32>,
    %364 = vector.extract_strided_slice %310 {offsets = [0, 256], sizes = [8, 256], strides = [1, 1]} : vector<8x768xf32> to vector<8x256xf32>
    %365 = vector.extract_strided_slice %103 {offsets = [0, 256], sizes = [8, 256], strides = [1, 1]} : vector<8x768xf32> to vector<8x256xf32>
    %366 = arith.mulf %365, %365 : vector<8x256xf32>
    %367 = tpu.concatenate %365, %366 in 0 : vector<8x256xf32>, vector<8x256xf32> -> vector<16x256xf32>
    %cst_174 = arith.constant dense<0.000000e+00> : vector<16xf32>
    %368 = vector.multi_reduction <add>, %367, %cst_174 [1] : vector<16x256xf32> to vector<16xf32>
    %369 = vector.shape_cast %368 : vector<16xf32> to vector<16x1xf32>
    %370 = vector.extract_strided_slice %369 {offsets = [0, 0], sizes = [8, 1], strides = [1, 1]} : vector<16x1xf32> to vector<8x1xf32>
    %cst_175 = arith.constant 3.906250e-03 : f32
    %371 = vector.broadcast %cst_175 : f32 to vector<8x1xf32>
    %372 = arith.mulf %370, %371 : vector<8x1xf32>
    %373 = vector.extract_strided_slice %369 {offsets = [8, 0], sizes = [8, 1], strides = [1, 1]} : vector<16x1xf32> to vector<8x1xf32>
    %cst_176 = arith.constant 3.906250e-03 : f32
    %374 = vector.broadcast %cst_176 : f32 to vector<8x1xf32>
    %375 = arith.mulf %373, %374 : vector<8x1xf32>
    %376 = arith.mulf %372, %372 : vector<8x1xf32>
    %377 = arith.subf %375, %376 : vector<8x1xf32>
    %cst_177 = arith.constant 0.000000e+00 : f32
    %378 = vector.broadcast %cst_177 : f32 to vector<8x1xf32>
    %379 = arith.maximumf %377, %378 : vector<8x1xf32>
    %380 = vector.broadcast %372 : vector<8x1xf32> to vector<8x256xf32>
    %381 = arith.subf %365, %380 : vector<8x256xf32>
    %cst_178 = arith.constant 9.99999974E-6 : f32
    %382 = vector.broadcast %cst_178 : f32 to vector<8x1xf32>
    %383 = arith.addf %379, %382 : vector<8x1xf32>
    %384 = math.rsqrt %383 : vector<8x1xf32>
    %385 = vector.broadcast %384 : vector<8x1xf32> to vector<8x256xf32>
    %386 = arith.mulf %381, %385 : vector<8x256xf32>
    %387 = arith.addf %364, %386 : vector<8x256xf32>
    %388 = arith.mulf %387, %387 : vector<8x256xf32>
    %389 = tpu.concatenate %387, %388 in 0 : vector<8x256xf32>, vector<8x256xf32> -> vector<16x256xf32>
    %cst_179 = arith.constant dense<0.000000e+00> : vector<16xf32>
    %390 = vector.multi_reduction <add>, %389, %cst_179 [1] : vector<16x256xf32> to vector<16xf32>
    %391 = vector.shape_cast %390 : vector<16xf32> to vector<16x1xf32>
    %392 = vector.extract_strided_slice %391 {offsets = [0, 0], sizes = [8, 1], strides = [1, 1]} : vector<16x1xf32> to vector<8x1xf32>
    %cst_180 = arith.constant 3.906250e-03 : f32
    %393 = vector.broadcast %cst_180 : f32 to vector<8x1xf32>
    %394 = arith.mulf %392, %393 : vector<8x1xf32>
    %395 = vector.extract_strided_slice %391 {offsets = [8, 0], sizes = [8, 1], strides = [1, 1]} : vector<16x1xf32> to vector<8x1xf32>
    %cst_181 = arith.constant 3.906250e-03 : f32
    %396 = vector.broadcast %cst_181 : f32 to vector<8x1xf32>
    %397 = arith.mulf %395, %396 : vector<8x1xf32>
    %398 = arith.mulf %394, %394 : vector<8x1xf32>
    %399 = arith.subf %397, %398 : vector<8x1xf32>
    %cst_182 = arith.constant 0.000000e+00 : f32
    %400 = vector.broadcast %cst_182 : f32 to vector<8x1xf32>
    %401 = arith.maximumf %399, %400 : vector<8x1xf32>
    %402 = vector.broadcast %394 : vector<8x1xf32> to vector<8x256xf32>
    %403 = arith.subf %387, %402 : vector<8x256xf32>
    %cst_183 = arith.constant 9.99999974E-6 : f32
    %404 = vector.broadcast %cst_183 : f32 to vector<8x1xf32>
    %405 = arith.addf %401, %404 : vector<8x1xf32>
    %406 = math.rsqrt %405 : vector<8x1xf32>
    %407 = vector.broadcast %406 : vector<8x1xf32> to vector<8x256xf32>
    %408 = arith.mulf %403, %407 : vector<8x256xf32>
    %cst_184 = arith.constant 0.000000e+00 : f32
    %409 = vector.broadcast %cst_184 : f32 to vector<8x256xf32>
    %410 = arith.cmpf oge, %408, %409 : vector<8x256xf32>
    %cst_185 = arith.constant 2.000000e-01 : f32
    %411 = vector.broadcast %cst_185 : f32 to vector<8x256xf32>
    %412 = arith.mulf %411, %408 : vector<8x256xf32>
    %413 = arith.select %410, %408, %412 : vector<8x256xi1>, vector<8x256xf32>
    %c1_186 = arith.constant 1 : index
    %c0_187 = arith.constant 0 : index
    %c0_188 = arith.constant 0 : index
    %414 = vector.load %arg7[%c1_186, %c0_187, %c0_188] : memref<3x8x256xf32, #tpu.memory_space<vmem>>, vector<1x8x256xf32>
    %415 = vector.shape_cast %414 : vector<1x8x256xf32> to vector<8x256xf32>
    %416 = vector.shape_cast %413 : vector<8x256xf32> to vector<1x8x256xf32>
    tpu.vector_store %arg7[%c1_186, %c0_187, %c0_188], %416 {strides = array<i32>} : memref<3x8x256xf32, #tpu.memory_space<vmem>>, vector<1x8x256xf32>,
    %417 = vector.extract_strided_slice %310 {offsets = [0, 512], sizes = [8, 256], strides = [1, 1]} : vector<8x768xf32> to vector<8x256xf32>
    %418 = vector.extract_strided_slice %103 {offsets = [0, 512], sizes = [8, 256], strides = [1, 1]} : vector<8x768xf32> to vector<8x256xf32>
    %419 = arith.mulf %418, %418 : vector<8x256xf32>
    %420 = tpu.concatenate %418, %419 in 0 : vector<8x256xf32>, vector<8x256xf32> -> vector<16x256xf32>
    %cst_189 = arith.constant dense<0.000000e+00> : vector<16xf32>
    %421 = vector.multi_reduction <add>, %420, %cst_189 [1] : vector<16x256xf32> to vector<16xf32>
    %422 = vector.shape_cast %421 : vector<16xf32> to vector<16x1xf32>
    %423 = vector.extract_strided_slice %422 {offsets = [0, 0], sizes = [8, 1], strides = [1, 1]} : vector<16x1xf32> to vector<8x1xf32>
    %cst_190 = arith.constant 3.906250e-03 : f32
    %424 = vector.broadcast %cst_190 : f32 to vector<8x1xf32>
    %425 = arith.mulf %423, %424 : vector<8x1xf32>
    %426 = vector.extract_strided_slice %422 {offsets = [8, 0], sizes = [8, 1], strides = [1, 1]} : vector<16x1xf32> to vector<8x1xf32>
    %cst_191 = arith.constant 3.906250e-03 : f32
    %427 = vector.broadcast %cst_191 : f32 to vector<8x1xf32>
    %428 = arith.mulf %426, %427 : vector<8x1xf32>
    %429 = arith.mulf %425, %425 : vector<8x1xf32>
    %430 = arith.subf %428, %429 : vector<8x1xf32>
    %cst_192 = arith.constant 0.000000e+00 : f32
    %431 = vector.broadcast %cst_192 : f32 to vector<8x1xf32>
    %432 = arith.maximumf %430, %431 : vector<8x1xf32>
    %433 = vector.broadcast %425 : vector<8x1xf32> to vector<8x256xf32>
    %434 = arith.subf %418, %433 : vector<8x256xf32>
    %cst_193 = arith.constant 9.99999974E-6 : f32
    %435 = vector.broadcast %cst_193 : f32 to vector<8x1xf32>
    %436 = arith.addf %432, %435 : vector<8x1xf32>
    %437 = math.rsqrt %436 : vector<8x1xf32>
    %438 = vector.broadcast %437 : vector<8x1xf32> to vector<8x256xf32>
    %439 = arith.mulf %434, %438 : vector<8x256xf32>
    %440 = arith.addf %417, %439 : vector<8x256xf32>
    %441 = arith.mulf %440, %440 : vector<8x256xf32>
    %442 = tpu.concatenate %440, %441 in 0 : vector<8x256xf32>, vector<8x256xf32> -> vector<16x256xf32>
    %cst_194 = arith.constant dense<0.000000e+00> : vector<16xf32>
    %443 = vector.multi_reduction <add>, %442, %cst_194 [1] : vector<16x256xf32> to vector<16xf32>
    %444 = vector.shape_cast %443 : vector<16xf32> to vector<16x1xf32>
    %445 = vector.extract_strided_slice %444 {offsets = [0, 0], sizes = [8, 1], strides = [1, 1]} : vector<16x1xf32> to vector<8x1xf32>
    %cst_195 = arith.constant 3.906250e-03 : f32
    %446 = vector.broadcast %cst_195 : f32 to vector<8x1xf32>
    %447 = arith.mulf %445, %446 : vector<8x1xf32>
    %448 = vector.extract_strided_slice %444 {offsets = [8, 0], sizes = [8, 1], strides = [1, 1]} : vector<16x1xf32> to vector<8x1xf32>
    %cst_196 = arith.constant 3.906250e-03 : f32
    %449 = vector.broadcast %cst_196 : f32 to vector<8x1xf32>
    %450 = arith.mulf %448, %449 : vector<8x1xf32>
    %451 = arith.mulf %447, %447 : vector<8x1xf32>
    %452 = arith.subf %450, %451 : vector<8x1xf32>
    %cst_197 = arith.constant 0.000000e+00 : f32
    %453 = vector.broadcast %cst_197 : f32 to vector<8x1xf32>
    %454 = arith.maximumf %452, %453 : vector<8x1xf32>
    %455 = vector.broadcast %447 : vector<8x1xf32> to vector<8x256xf32>
    %456 = arith.subf %440, %455 : vector<8x256xf32>
    %cst_198 = arith.constant 9.99999974E-6 : f32
    %457 = vector.broadcast %cst_198 : f32 to vector<8x1xf32>
    %458 = arith.addf %454, %457 : vector<8x1xf32>
    %459 = math.rsqrt %458 : vector<8x1xf32>
    %460 = vector.broadcast %459 : vector<8x1xf32> to vector<8x256xf32>
    %461 = arith.mulf %456, %460 : vector<8x256xf32>
    %cst_199 = arith.constant 0.000000e+00 : f32
    %462 = vector.broadcast %cst_199 : f32 to vector<8x256xf32>
    %463 = arith.cmpf oge, %461, %462 : vector<8x256xf32>
    %cst_200 = arith.constant 2.000000e-01 : f32
    %464 = vector.broadcast %cst_200 : f32 to vector<8x256xf32>
    %465 = arith.mulf %464, %461 : vector<8x256xf32>
    %466 = arith.select %463, %461, %465 : vector<8x256xi1>, vector<8x256xf32>
    %c2_201 = arith.constant 2 : index
    %c0_202 = arith.constant 0 : index
    %c0_203 = arith.constant 0 : index
    %467 = vector.load %arg7[%c2_201, %c0_202, %c0_203] : memref<3x8x256xf32, #tpu.memory_space<vmem>>, vector<1x8x256xf32>
    %468 = vector.shape_cast %467 : vector<1x8x256xf32> to vector<8x256xf32>
    %469 = vector.shape_cast %466 : vector<8x256xf32> to vector<1x8x256xf32>
    tpu.vector_store %arg7[%c2_201, %c0_202, %c0_203], %469 {strides = array<i32>} : memref<3x8x256xf32, #tpu.memory_space<vmem>>, vector<1x8x256xf32>,
    return
  }
  func.func @transform_0(%arg0: i32) -> (i32, i32, i32) {
    %c0_i32 = arith.constant 0 : i32
    %c0_i32_0 = arith.constant 0 : i32
    %c0_i32_1 = arith.constant 0 : i32
    return %arg0, %c0_i32, %c0_i32_0 : i32, i32, i32
  }
  func.func @transform_1(%arg0: i32) -> (i32, i32) {
    %c0_i32 = arith.constant 0 : i32
    %c0_i32_0 = arith.constant 0 : i32
    %c0_i32_1 = arith.constant 0 : i32
    return %c0_i32, %c0_i32_0 : i32, i32
  }
  func.func @transform_2(%arg0: i32) -> (i32, i32) {
    %c0_i32 = arith.constant 0 : i32
    %c0_i32_0 = arith.constant 0 : i32
    %c0_i32_1 = arith.constant 0 : i32
    return %c0_i32, %c0_i32_0 : i32, i32
  }
  func.func @transform_3(%arg0: i32) -> (i32, i32) {
    %c0_i32 = arith.constant 0 : i32
    %c0_i32_0 = arith.constant 0 : i32
    %c0_i32_1 = arith.constant 0 : i32
    return %c0_i32, %c0_i32_0 : i32, i32
  }
  func.func @transform_4(%arg0: i32) -> (i32, i32) {
    %c0_i32 = arith.constant 0 : i32
    %c0_i32_0 = arith.constant 0 : i32
    %c0_i32_1 = arith.constant 0 : i32
    return %c0_i32, %c0_i32_0 : i32, i32
  }
  func.func @transform_5(%arg0: i32) -> (i32, i32) {
    %c0_i32 = arith.constant 0 : i32
    %c0_i32_0 = arith.constant 0 : i32
    %c0_i32_1 = arith.constant 0 : i32
    return %c0_i32, %c0_i32_0 : i32, i32
  }
  func.func @transform_6(%arg0: i32) -> (i32, i32, i32) {
    %c0_i32 = arith.constant 0 : i32
    %c0_i32_0 = arith.constant 0 : i32
    %c0_i32_1 = arith.constant 0 : i32
    return %arg0, %c0_i32, %c0_i32_0 : i32, i32, i32
  }
}

</mosaic_0001>

<llo_original>
// kernel: tpu_custom_call.1
$region0: #{tpu_custom_call.1}
  #allocation0 [shape = 'u32[]', space=smem, size = 0x4, offset = 0x4, fixed_abs, tag = 'smem constant byte address 0x4 - core index']
  #allocation1 [shape = 'u32[144,128]{1,0:T(1,128)}', space=vmem, size = 0x12000, scoped, tag = 'internal scratch']
  #allocation2 [shape = 'bf16[16,1024]{1,0:T(8,128)(2,1)}', space=vmem, size = 0x8000, scoped, tag = 'scratch operand']
  #allocation3 [shape = 'bf16[144,768]{1,0:T(8,128)(2,1)}', space=vmem, size = 0x36000, scoped, tag = 'scratch operand']
  %s0 = inlined_call_operand.hbm [shape: bf16[6,16,256], index: 0, kind: input, shape index: {}]
  %s1 = inlined_call_operand.hbm [shape: bf16[8,144], index: 1, kind: input, shape index: {}]
  %s2 = inlined_call_operand.hbm [shape: bf16[8,144], index: 2, kind: input, shape index: {}]
  %s3 = inlined_call_operand.hbm [shape: bf16[8,16], index: 3, kind: input, shape index: {}]
  %s4 = inlined_call_operand.vmem [shape: s32[1,768], index: 4, kind: input, shape index: {}]
  %s5 = inlined_call_operand.hbm [shape: s32[1,768], index: 5, kind: input, shape index: {}]
  %s6 = inlined_call_operand.hbm [shape: f32[6,8,256], index: 6, kind: output, shape index: {}]
  %s7 = sld [smem:[#allocation0]]
  $region77: #{tpu_custom_call.1} parent=0
    _
  %s9 = ssub.s32 1, %s7
  %s10 = scalar_select 0, %s9, %s7
  $region1: #{tpu_custom_call.1} parent=0
    #allocation4 [shape = 'u8[49152]{0}', space=vmem, size = 0xc000, scoped, tag = 'input window, operand 0']
    #allocation5 [shape = 's32[2]{0}', space=sflag, size = 0x8, scoped, tag = 'scoped memory for tpu_custom_call.1']
    #allocation6 [shape = 's32[2]{0}', space=sflag, size = 0x8, scoped, tag = 'scoped memory for tpu_custom_call.1']
    #allocation7 [shape = 'u8[4096]{0}', space=vmem, size = 0x1000, scoped, tag = 'input window, operand 1, single buffered']
    #allocation8 [shape = 's32[1]{0}', space=sflag, size = 0x4, scoped, tag = 'scoped memory for tpu_custom_call.1']
    #allocation9 [shape = 'u8[4096]{0}', space=vmem, size = 0x1000, scoped, tag = 'input window, operand 2, single buffered']
    #allocation10 [shape = 'u8[2048]{0}', space=vmem, size = 0x800, scoped, tag = 'input window, operand 3, single buffered']
    #allocation11 [shape = 's32[1]{0}', space=sflag, size = 0x4, scoped, tag = 'scoped memory for tpu_custom_call.1']
    #allocation12 [shape = 'u8[3072]{0}', space=vmem, size = 0xc00, scoped, tag = 'input window, operand 5, single buffered']
    #allocation13 [shape = 'u8[49152]{0}', space=vmem, size = 0xc000, scoped, tag = 'output window, operand 0']
    %11 = vsyncpa [#allocation5], 0
    %s12 = scalar_lea.sflag [#allocation5], 1
    %13 = vsyncpa %s12, 0
    %14 = vsyncpa [#allocation8], 0
    %15 = vsyncpa [#allocation11], 0
    %16 = vsyncpa [#allocation6], 0
    %s17 = scalar_lea.sflag [#allocation6], 1
    %18 = vsyncpa %s17, 0
    loop: start=0, step=1, limit=4
    $region2: #{tpu_custom_call.1} parent=1 // loop_pre_header
      _
    $region3: #{tpu_custom_call.1} parent=1 // loop_header
      %s20 = sphi 0, %s24
      %p21 = scmp.ge.s32.totalorder %s20, 4
      %s30 = sphi 0, %s32
      %s33 = sphi 0, %s30
      %s34 = sphi 0, %s33
      %s50 = sphi 0, %s34
      %s54 = sphi 0, %s54
      %s56 = sphi 0, %s54
      %s57 = sphi 0, %s56
      %s71 = sphi 0, %s57
      %s75 = sphi 0, %s75
      %s77 = sphi 0, %s75
      %s78 = sphi 0, %s77
      %s92 = sphi 0, %s78
      %s96 = sphi 0, %s96
      %s98 = sphi 0, %s96
      %s99 = sphi 0, %s98
      %s113 = sphi 0, %s99
      %s117 = sphi 0, %s117
      %s119 = sphi 0, %s117
      %s120 = sphi 0, %s119
      %s134 = sphi 0, %s120
      %s138 = sphi 0, %s138
      %s140 = sphi 0, %s138
      %s141 = sphi 0, %s140
      %s155 = sphi 0, %s141
      %s161 = sphi 0, %s163
      %s164 = sphi 0, %s161
      %s165 = sphi 0, %s164
      %s181 = sphi 0, %s165
    $region4: #{tpu_custom_call.1} parent=1 // loop_header_branch
      %23 = sbr.rel (%p21) target = $region8
    $region5: #{tpu_custom_call.1} parent=1 // loop_body
      %s25 = ssub.s32 %s20, 1
      %s26 = ssub.s32 %s20, 2
      %s27 = sadd.s32 %s20, 1
      %s28 = ssub.s32 %s20, %s27
      %p29 = scmp.eq.s32.totalorder %s28, 0
      %s31 = sadd.s32 %s30, 1
      %s32 = scalar_select %p29, %s30, %s31
      %p35 = pneg %p29
      %p36 = scmp.eq.s32.totalorder %s20, 1
      %p37 = por %p35, %p36
      %p38 = scmp.ne.s32.totalorder %s30, %s33
      %p39 = scmp.eq.s32.totalorder %s20, 0
      %p40 = por %p38, %p39
      %p41 = scmp.ne.s32.totalorder %s30, %s33
      %p42 = scmp.eq.s32.totalorder %s25, 1
      %p43 = por %p41, %p42
      %p44 = scmp.ne.s32.totalorder %s33, %s34
      %p45 = scmp.eq.s32.totalorder %s25, 0
      %p46 = por %p44, %p45
      %p47 = scmp.ne.s32.totalorder %s33, %s34
      %p48 = scmp.eq.s32.totalorder %s26, 1
      %p49 = por %p47, %p48
      %p51 = scmp.ne.s32.totalorder %s34, %s50
      %p52 = scmp.eq.s32.totalorder %s26, 0
      %p53 = por %p51, %p52
      %s55 = sadd.s32 %s54, 1
      %p58 = scmp.eq.s32.totalorder %s20, 1
      %p59 = scmp.ne.s32.totalorder %s54, %s56
      %p60 = scmp.eq.s32.totalorder %s20, 0
      %p61 = por %p59, %p60
      %p62 = scmp.ne.s32.totalorder %s54, %s56
      %p63 = scmp.eq.s32.totalorder %s25, 1
      %p64 = por %p62, %p63
      %p65 = scmp.ne.s32.totalorder %s56, %s57
      %p66 = scmp.eq.s32.totalorder %s25, 0
      %p67 = por %p65, %p66
      %p68 = scmp.ne.s32.totalorder %s56, %s57
      %p69 = scmp.eq.s32.totalorder %s26, 1
      %p70 = por %p68, %p69
      %p72 = scmp.ne.s32.totalorder %s57, %s71
      %p73 = scmp.eq.s32.totalorder %s26, 0
      %p74 = por %p72, %p73
      %s76 = sadd.s32 %s75, 1
      %p79 = scmp.eq.s32.totalorder %s20, 1
      %p80 = scmp.ne.s32.totalorder %s75, %s77
      %p81 = scmp.eq.s32.totalorder %s20, 0
      %p82 = por %p80, %p81
      %p83 = scmp.ne.s32.totalorder %s75, %s77
      %p84 = scmp.eq.s32.totalorder %s25, 1
      %p85 = por %p83, %p84
      %p86 = scmp.ne.s32.totalorder %s77, %s78
      %p87 = scmp.eq.s32.totalorder %s25, 0
      %p88 = por %p86, %p87
      %p89 = scmp.ne.s32.totalorder %s77, %s78
      %p90 = scmp.eq.s32.totalorder %s26, 1
      %p91 = por %p89, %p90
      %p93 = scmp.ne.s32.totalorder %s78, %s92
      %p94 = scmp.eq.s32.totalorder %s26, 0
      %p95 = por %p93, %p94
      %s97 = sadd.s32 %s96, 1
      %p100 = scmp.eq.s32.totalorder %s20, 1
      %p101 = scmp.ne.s32.totalorder %s96, %s98
      %p102 = scmp.eq.s32.totalorder %s20, 0
      %p103 = por %p101, %p102
      %p104 = scmp.ne.s32.totalorder %s96, %s98
      %p105 = scmp.eq.s32.totalorder %s25, 1
      %p106 = por %p104, %p105
      %p107 = scmp.ne.s32.totalorder %s98, %s99
      %p108 = scmp.eq.s32.totalorder %s25, 0
      %p109 = por %p107, %p108
      %p110 = scmp.ne.s32.totalorder %s98, %s99
      %p111 = scmp.eq.s32.totalorder %s26, 1
      %p112 = por %p110, %p111
      %p114 = scmp.ne.s32.totalorder %s99, %s113
      %p115 = scmp.eq.s32.totalorder %s26, 0
      %p116 = por %p114, %p115
      %s118 = sadd.s32 %s117, 1
      %p121 = scmp.eq.s32.totalorder %s20, 1
      %p122 = scmp.ne.s32.totalorder %s117, %s119
      %p123 = scmp.eq.s32.totalorder %s20, 0
      %p124 = por %p122, %p123
      %p125 = scmp.ne.s32.totalorder %s117, %s119
      %p126 = scmp.eq.s32.totalorder %s25, 1
      %p127 = por %p125, %p126
      %p128 = scmp.ne.s32.totalorder %s119, %s120
      %p129 = scmp.eq.s32.totalorder %s25, 0
      %p130 = por %p128, %p129
      %p131 = scmp.ne.s32.totalorder %s119, %s120
      %p132 = scmp.eq.s32.totalorder %s26, 1
      %p133 = por %p131, %p132
      %p135 = scmp.ne.s32.totalorder %s120, %s134
      %p136 = scmp.eq.s32.totalorder %s26, 0
      %p137 = por %p135, %p136
      %s139 = sadd.s32 %s138, 1
      %p142 = scmp.eq.s32.totalorder %s20, 1
      %p143 = scmp.ne.s32.totalorder %s138, %s140
      %p144 = scmp.eq.s32.totalorder %s20, 0
      %p145 = por %p143, %p144
      %p146 = scmp.ne.s32.totalorder %s138, %s140
      %p147 = scmp.eq.s32.totalorder %s25, 1
      %p148 = por %p146, %p147
      %p149 = scmp.ne.s32.totalorder %s140, %s141
      %p150 = scmp.eq.s32.totalorder %s25, 0
      %p151 = por %p149, %p150
      %p152 = scmp.ne.s32.totalorder %s140, %s141
      %p153 = scmp.eq.s32.totalorder %s26, 1
      %p154 = por %p152, %p153
      %p156 = scmp.ne.s32.totalorder %s141, %s155
      %p157 = scmp.eq.s32.totalorder %s26, 0
      %p158 = por %p156, %p157
      %s159 = ssub.s32 %s20, %s27
      %p160 = scmp.eq.s32.totalorder %s159, 0
      %s162 = sadd.s32 %s161, 1
      %s163 = scalar_select %p160, %s161, %s162
      %p166 = pneg %p160
      %p167 = scmp.eq.s32.totalorder %s20, 1
      %p168 = por %p166, %p167
      %p169 = scmp.ne.s32.totalorder %s161, %s164
      %p170 = scmp.eq.s32.totalorder %s20, 0
      %p171 = por %p169, %p170
      %p172 = scmp.ne.s32.totalorder %s161, %s164
      %p173 = scmp.eq.s32.totalorder %s25, 1
      %p174 = por %p172, %p173
      %p175 = scmp.ne.s32.totalorder %s164, %s165
      %p176 = scmp.eq.s32.totalorder %s25, 0
      %p177 = por %p175, %p176
      %p178 = scmp.ne.s32.totalorder %s164, %s165
      %p179 = scmp.eq.s32.totalorder %s26, 1
      %p180 = por %p178, %p179
      %p182 = scmp.ne.s32.totalorder %s165, %s181
      %p183 = scmp.eq.s32.totalorder %s26, 0
      %p184 = por %p182, %p183
      %p185 = scmp.le.s32.totalorder 1, %s20
      %p186 = scmp.lt.s32.totalorder %s20, 3
      %p187 = pnand %p185, %p186
      %p188 = pneg %p187
      // Predicated region
      $region9: #{tpu_custom_call.1} parent=5 // pred_check
        _
      $region10: #{tpu_custom_call.1} parent=5 // pred_check_branch
        %190 = sbr.rel (%p187) target = $region12
      $region11: #{tpu_custom_call.1} parent=5 // pred_region
        %s191 = ssub.s32 %s20, 1
        // Predicated region
        $region13: #{tpu_custom_call.1} parent=11 // pred_check
          %p192 = pneg %p67
        $region14: #{tpu_custom_call.1} parent=11 // pred_check_branch
          %194 = sbr.rel (%p192) target = $region16
        $region15: #{tpu_custom_call.1} parent=11 // pred_region
          %s196 = ssub.s32 128, 128
          %197 = vsyncadd [#allocation8], %s196
          %s199 = sshll.u32 [#allocation7], 4
          %s200 = int_to_ptr.vmem [resolvable:$true] %s199
          %202 = dma.hbm_to_vmem [thread:$0]  %s1, 128, %s200, [#allocation8]
        $region16: #{tpu_custom_call.1} parent=11 // pred_fallthru
          _
        // Predicated region
        $region17: #{tpu_custom_call.1} parent=11 // pred_check
          %p203 = pneg %p88
        $region18: #{tpu_custom_call.1} parent=11 // pred_check_branch
          %205 = sbr.rel (%p203) target = $region20
        $region19: #{tpu_custom_call.1} parent=11 // pred_region
          %s207 = ssub.s32 128, 128
          %208 = vsyncadd [#allocation8], %s207
          %s210 = sshll.u32 [#allocation9], 4
          %s211 = int_to_ptr.vmem [resolvable:$true] %s210
          %213 = dma.hbm_to_vmem [thread:$0]  %s2, 128, %s211, [#allocation8]
        $region20: #{tpu_custom_call.1} parent=11 // pred_fallthru
          _
        // Predicated region
        $region21: #{tpu_custom_call.1} parent=11 // pred_check
          %p214 = pneg %p109
        $region22: #{tpu_custom_call.1} parent=11 // pred_check_branch
          %216 = sbr.rel (%p214) target = $region24
        $region23: #{tpu_custom_call.1} parent=11 // pred_region
          %s218 = ssub.s32 64, 64
          %219 = vsyncadd [#allocation11], %s218
          %s221 = sshll.u32 [#allocation10], 4
          %s222 = int_to_ptr.vmem [resolvable:$true] %s221
          %224 = dma.hbm_to_vmem [thread:$0]  %s3, 64, %s222, [#allocation11]
        $region24: #{tpu_custom_call.1} parent=11 // pred_fallthru
          _
        // Predicated region
        $region25: #{tpu_custom_call.1} parent=11 // pred_check
          %p225 = pneg %p130
        $region26: #{tpu_custom_call.1} parent=11 // pred_check_branch
          %227 = sbr.rel (%p225) target = $region28
        $region27: #{tpu_custom_call.1} parent=11 // pred_region
          _
        $region28: #{tpu_custom_call.1} parent=11 // pred_fallthru
          _
        // Predicated region
        $region29: #{tpu_custom_call.1} parent=11 // pred_check
          %p228 = pneg %p151
        $region30: #{tpu_custom_call.1} parent=11 // pred_check_branch
          %230 = sbr.rel (%p228) target = $region32
        $region31: #{tpu_custom_call.1} parent=11 // pred_region
          %s232 = ssub.s32 96, 96
          %233 = vsyncadd [#allocation11], %s232
          %s235 = sshll.u32 [#allocation12], 4
          %s236 = int_to_ptr.vmem [resolvable:$true] %s235
          %238 = dma.hbm_to_vmem [thread:$0]  %s5, 96, %s236, [#allocation11]
        $region32: #{tpu_custom_call.1} parent=11 // pred_fallthru
          _
      $region12: #{tpu_custom_call.1} parent=5 // pred_fallthru
        _
      %p239 = scmp.lt.s32.totalorder %s20, 2
      // Predicated region
      $region33: #{tpu_custom_call.1} parent=5 // pred_check
        %p240 = pneg %p239
      $region34: #{tpu_custom_call.1} parent=5 // pred_check_branch
        %242 = sbr.rel (%p240) target = $region36
      $region35: #{tpu_custom_call.1} parent=5 // pred_region
        // Predicated region
        $region37: #{tpu_custom_call.1} parent=35 // pred_check
          %p243 = pneg %p40
        $region38: #{tpu_custom_call.1} parent=35 // pred_check_branch
          %245 = sbr.rel (%p243) target = $region40
        $region39: #{tpu_custom_call.1} parent=35 // pred_region
          %s246 = sand.u32 %s30, 1
          %s247 = scalar_lea.sflag [#allocation5], %s246
          %s248 = sand.u32 %s30, 1
          %s249 = smul.addr %s248, 48
          %s250 = scalar_lea.vmem [#allocation4], %s249
          %s251 = smul.u32 3, %s20
          %s253 = ssub.s32 768, 768
          %254 = vsyncadd %s247, %s253
          %s255 = smul.addr %s251, 4
          %s256 = smul.addr %s255, 64
          %s257 = scalar_lea.hbm %s0, %s256
          %s258 = sshll.u32 %s250, 4
          %s259 = int_to_ptr.vmem [resolvable:$true] %s258
          %264 = dma.hbm_to_vmem [thread:$0]  %s257, 768, %s259, %s247, 128, 128, 8
        $region40: #{tpu_custom_call.1} parent=35 // pred_fallthru
          _
      $region36: #{tpu_custom_call.1} parent=5 // pred_fallthru
        _
      %p265 = scmp.le.s32.totalorder 1, %s20
      %p266 = scmp.lt.s32.totalorder %s20, 3
      %p267 = pnand %p265, %p266
      %p268 = pneg %p267
      // Predicated region
      $region41: #{tpu_custom_call.1} parent=5 // pred_check
        _
      $region42: #{tpu_custom_call.1} parent=5 // pred_check_branch
        %270 = sbr.rel (%p267) target = $region44
      $region43: #{tpu_custom_call.1} parent=5 // pred_region
        %s271 = ssub.s32 %s20, 1
        %s272 = sand.u32 %s33, 1
        %s273 = scalar_lea.sflag [#allocation5], %s272
        %s274 = sand.u32 %s33, 1
        %s275 = smul.addr %s274, 48
        %s276 = scalar_lea.vmem [#allocation4], %s275
        // Predicated region
        $region45: #{tpu_custom_call.1} parent=43 // pred_check
          %p277 = pneg %p46
        $region46: #{tpu_custom_call.1} parent=43 // pred_check_branch
          %279 = sbr.rel (%p277) target = $region48
        $region47: #{tpu_custom_call.1} parent=43 // pred_region
          %280 = dma.done %s273, 768
        $region48: #{tpu_custom_call.1} parent=43 // pred_fallthru
          _
        // Predicated region
        $region49: #{tpu_custom_call.1} parent=43 // pred_check
          %p281 = pneg %p67
        $region50: #{tpu_custom_call.1} parent=43 // pred_check_branch
          %283 = sbr.rel (%p281) target = $region52
        $region51: #{tpu_custom_call.1} parent=43 // pred_region
          %284 = dma.done [#allocation8], 128
        $region52: #{tpu_custom_call.1} parent=43 // pred_fallthru
          _
        // Predicated region
        $region53: #{tpu_custom_call.1} parent=43 // pred_check
          %p285 = pneg %p88
        $region54: #{tpu_custom_call.1} parent=43 // pred_check_branch
          %287 = sbr.rel (%p285) target = $region56
        $region55: #{tpu_custom_call.1} parent=43 // pred_region
          %288 = dma.done [#allocation8], 128
        $region56: #{tpu_custom_call.1} parent=43 // pred_fallthru
          _
        // Predicated region
        $region57: #{tpu_custom_call.1} parent=43 // pred_check
          %p289 = pneg %p109
        $region58: #{tpu_custom_call.1} parent=43 // pred_check_branch
          %291 = sbr.rel (%p289) target = $region60
        $region59: #{tpu_custom_call.1} parent=43 // pred_region
          %292 = dma.done [#allocation11], 64
        $region60: #{tpu_custom_call.1} parent=43 // pred_fallthru
          _
        // Predicated region
        $region61: #{tpu_custom_call.1} parent=43 // pred_check
          %p293 = pneg %p151
        $region62: #{tpu_custom_call.1} parent=43 // pred_check_branch
          %295 = sbr.rel (%p293) target = $region64
        $region63: #{tpu_custom_call.1} parent=43 // pred_region
          %296 = dma.done [#allocation11], 96
        $region64: #{tpu_custom_call.1} parent=43 // pred_fallthru
          _
        %s297 = sand.u32 %s33, 1
        %s298 = scalar_lea.sflag [#allocation5], %s297
        %s299 = sand.u32 %s33, 1
        %s300 = smul.addr %s299, 48
        %s301 = scalar_lea.vmem [#allocation4], %s300
        %p302 = pneg %p46
        %p303 = pneg %p43
        %p304 = pneg %p67
        %p305 = pneg %p64
        %p306 = pneg %p88
        %p307 = pneg %p85
        %p308 = pneg %p109
        %p309 = pneg %p106
        %p310 = pneg %p130
        %p311 = pneg %p127
        %p312 = pneg %p151
        %p313 = pneg %p148
        %p314 = pneg %p177
        %p315 = pneg %p174
        %s316 = sand.u32 %s164, 1
        %s317 = scalar_lea.sflag [#allocation6], %s316
        %s318 = sand.u32 %s164, 1
        %s319 = smul.addr %s318, 48
        %s320 = scalar_lea.vmem [#allocation13], %s319
        %s321 = smul.u32 3, %s25
        %s322 = smul.u32 3, %s25
        %v326 = vld [vmem:[%s4] sm:$0x3f]
        %v327 = vld [vmem:[#allocation12] sm:$0x3f]
        %v328 = vlaneseq
        %v329 = vshrl.u32 %v328, 7
        %v330 = vadd.s32 %v329, 8
        %v331 = vld [vmem:[%s276] sm:$0xff]
        %v332 = vld [vmem:[%s276 + $0x8] sm:$0xff]
        %333 = vst [vmem:[#allocation2 + $0x4] sm:$0xff] %v331
        %334 = vst [vmem:[#allocation2 + $0x24] sm:$0xff] %v332
        %s335 = scalar_lea.vmem %s276, 16 [#allocation4]
        %v336 = vld [vmem:[%s335] sm:$0xff]
        %v337 = vld [vmem:[%s335 + $0x8] sm:$0xff]
        %338 = vst [vmem:[#allocation2 + $0xc] sm:$0xff] %v336
        %339 = vst [vmem:[#allocation2 + $0x2c] sm:$0xff] %v337
        %s340 = scalar_lea.vmem %s276, 32 [#allocation4]
        %v341 = vld [vmem:[%s340] sm:$0xff]
        %v342 = vld [vmem:[%s340 + $0x8] sm:$0xff]
        %343 = vst [vmem:[#allocation2 + $0x14] sm:$0xff] %v341
        %344 = vst [vmem:[#allocation2 + $0x34] sm:$0xff] %v342
        %v345 = vld [vmem:[#allocation2] sm:$0xff]
        %v346 = vld [vmem:[#allocation2 + $0x8] sm:$0xff]
        %v347 = vld [vmem:[#allocation2 + $0x10] sm:$0xff]
        %v348 = vld [vmem:[#allocation2 + $0x18] sm:$0xf]
        %v349 = vld [vmem:[#allocation2 + $0x20] sm:$0xff]
        %v350 = vld [vmem:[#allocation2 + $0x28] sm:$0xff]
        %v351 = vld [vmem:[#allocation2 + $0x30] sm:$0xff]
        %v352 = vld [vmem:[#allocation2 + $0x38] sm:$0xf]
        %vm353 = vcmp.ge.s32.totalorder %v326, 1
        %vm354 = vcmp.ge.s32.totalorder %v327, 1
        %vm355 = vmand %vm353, %vm354
        %v356 = vsel %vm355, 1, 0
        %v357 = vlaneseq
        %v358 = vshrl.u32 %v357, 7
        %v359 = vsub.s32 0, %v358
        %v360 = vrot.slane %v356, %v359
        %v361 = vlaneseq
        %v362 = vshrl.u32 %v361, 7
        %v363 = vsub.s32 1, %v362
        %v364 = vrot.slane %v356, %v363
        %v365 = vlaneseq
        %v366 = vshrl.u32 %v365, 7
        %v367 = vsub.s32 2, %v366
        %v368 = vrot.slane %v356, %v367
        %v369 = vlaneseq
        %v370 = vshrl.u32 %v369, 7
        %v371 = vsub.s32 3, %v370
        %v372 = vrot.slane %v356, %v371
        %v373 = vlaneseq
        %v374 = vshrl.u32 %v373, 7
        %v375 = vsub.s32 4, %v374
        %v376 = vrot.slane %v356, %v375
        %v377 = vlaneseq
        %v378 = vshrl.u32 %v377, 7
        %v379 = vsub.s32 5, %v378
        %v380 = vrot.slane %v356, %v379
        %vm381 = vcmp.eq.s32.totalorder %v360, 1
        %vm382 = vcmp.eq.s32.totalorder %v364, 1
        %vm383 = vcmp.eq.s32.totalorder %v368, 1
        %vm384 = vcmp.eq.s32.totalorder %v372, 1
        %vm385 = vcmp.eq.s32.totalorder %v376, 1
        %vm386 = vcmp.eq.s32.totalorder %v380, 1
        %vm387 = vmpackc.low %vm382, %vm381
        %vm388 = vmpackc.low %vm384, %vm383
        %vm389 = vmpackc.low %vm386, %vm385
        %v390 = vsel %vm387, 65537, 0
        %v391 = vsel %vm388, 65537, 0
        %v392 = vsel %vm389, 65537, 0
        %393 = vrot.lane.b32.xlu0 %v390, 111
        %v394 = vpop.permute.xlu0 %393
        %395 = vrot.lane.b32.xlu0 %v391, 111
        %v396 = vpop.permute.xlu0 %395
        %397 = vrot.lane.b32.xlu0 %v392, 111
        %v398 = vpop.permute.xlu0 %397
        %v399 = vrot.slane %v394, 4
        %v400 = vrot.slane %v396, 4
        %v401 = vrot.slane %v398, 4
        %vm402 = vcmask 908288
        %v403 = vsel %vm402, %v399, %v394
        %vm404 = vcmask 1043456
        %v405 = vsel %vm404, %v399, %v400
        %v406 = vsel %vm402, %v405, %v396
        %v407 = vsel %vm404, %v400, %v401
        %v408 = vsel %vm402, %v407, %v398
        %vm409 = vcmp.ne.s16.totalorder %v403, 0
        %vm410 = vcmp.ne.s16.totalorder %v406, 0
        %vm411 = vcmp.ne.s16.totalorder %v408, 0
        %vm412 = vcmp.ne.s16.totalorder %v401, 0
        %v413 = vsel %vm409, %v345, 0
        %v414 = vsel %vm410, %v346, 0
        %v415 = vsel %vm411, %v347, 0
        %v416 = vsel %vm412, %v348, 0
        %v417 = vsel %vm409, %v349, 0
        %v418 = vsel %vm410, %v350, 0
        %v419 = vsel %vm411, %v351, 0
        %v420 = vsel %vm412, %v352, 0
        %429 = vrot.lane.b32.xlu0 %v413, 17
        %v430 = vpop.permute.xlu0 %429
        %431 = vrot.lane.b32.xlu0 %v414, 17
        %v432 = vpop.permute.xlu0 %431
        %433 = vrot.lane.b32.xlu0 %v415, 17
        %v434 = vpop.permute.xlu0 %433
        %435 = vrot.lane.b32.xlu0 %v416, 17
        %v436 = vpop.permute.xlu0 %435
        %437 = vrot.lane.b32.xlu0 %v417, 17
        %v438 = vpop.permute.xlu0 %437
        %439 = vrot.lane.b32.xlu0 %v418, 17
        %v440 = vpop.permute.xlu0 %439
        %441 = vrot.lane.b32.xlu0 %v419, 17
        %v442 = vpop.permute.xlu0 %441
        %443 = vrot.lane.b32.xlu0 %v420, 17
        %v444 = vpop.permute.xlu0 %443
        %v445 = vrot.slane %v430, 4
        %v446 = vrot.slane %v432, 4
        %v447 = vrot.slane %v434, 4
        %v448 = vrot.slane %v436, 4
        %v449 = vrot.slane %v438, 4
        %v450 = vrot.slane %v440, 4
        %v451 = vrot.slane %v442, 4
        %v452 = vrot.slane %v444, 4
        %v453 = vsel %vm404, %v445, %v446
        %vm454 = vcmask 138240
        %v455 = vsel %vm454, %v430, %v453
        %v456 = vsel %vm404, %v446, %v447
        %v457 = vsel %vm454, %v432, %v456
        %v458 = vsel %vm404, %v447, %v448
        %v459 = vsel %vm454, %v434, %v458
        %v460 = vsel %vm404, %v449, %v450
        %v461 = vsel %vm454, %v438, %v460
        %v462 = vsel %vm404, %v450, %v451
        %v463 = vsel %vm454, %v440, %v462
        %v464 = vsel %vm404, %v451, %v452
        %v465 = vsel %vm454, %v442, %v464
        %472 = vst [vmem:[#allocation3] sm:$0xff] %v455
        %473 = vst [vmem:[#allocation3 + $0x8] sm:$0xff] %v457
        %474 = vst [vmem:[#allocation3 + $0x10] sm:$0xff] %v459
        %475 = vst [vmem:[#allocation3 + $0x18] sm:$0xff] %v461
        %476 = vst [vmem:[#allocation3 + $0x20] sm:$0xff] %v463
        %477 = vst [vmem:[#allocation3 + $0x28] sm:$0xff] %v465
        %v478 = vld [vmem:[#allocation2] sm:$0xff]
        %v479 = vld [vmem:[#allocation2 + $0x8] sm:$0xff]
        %v480 = vld [vmem:[#allocation2 + $0x10] sm:$0xff]
        %v481 = vld [vmem:[#allocation2 + $0x18] sm:$0xf]
        %v482 = vld [vmem:[#allocation2 + $0x20] sm:$0xff]
        %v483 = vld [vmem:[#allocation2 + $0x28] sm:$0xff]
        %v484 = vld [vmem:[#allocation2 + $0x30] sm:$0xff]
        %v485 = vld [vmem:[#allocation2 + $0x38] sm:$0xf]
        %v486 = vsel %vm353, 1, 0
        %v487 = vlaneseq
        %v488 = vshrl.u32 %v487, 7
        %v489 = vsub.s32 0, %v488
        %v490 = vrot.slane %v486, %v489
        %v491 = vlaneseq
        %v492 = vshrl.u32 %v491, 7
        %v493 = vsub.s32 1, %v492
        %v494 = vrot.slane %v486, %v493
        %v495 = vlaneseq
        %v496 = vshrl.u32 %v495, 7
        %v497 = vsub.s32 2, %v496
        %v498 = vrot.slane %v486, %v497
        %v499 = vlaneseq
        %v500 = vshrl.u32 %v499, 7
        %v501 = vsub.s32 3, %v500
        %v502 = vrot.slane %v486, %v501
        %v503 = vlaneseq
        %v504 = vshrl.u32 %v503, 7
        %v505 = vsub.s32 4, %v504
        %v506 = vrot.slane %v486, %v505
        %v507 = vlaneseq
        %v508 = vshrl.u32 %v507, 7
        %v509 = vsub.s32 5, %v508
        %v510 = vrot.slane %v486, %v509
        %vm511 = vcmp.eq.s32.totalorder %v490, 1
        %vm512 = vcmp.eq.s32.totalorder %v494, 1
        %vm513 = vcmp.eq.s32.totalorder %v498, 1
        %vm514 = vcmp.eq.s32.totalorder %v502, 1
        %vm515 = vcmp.eq.s32.totalorder %v506, 1
        %vm516 = vcmp.eq.s32.totalorder %v510, 1
        %vm517 = vmpackc.low %vm512, %vm511
        %vm518 = vmpackc.low %vm514, %vm513
        %vm519 = vmpackc.low %vm516, %vm515
        %v520 = vsel %vm517, 65537, 0
        %v521 = vsel %vm518, 65537, 0
        %v522 = vsel %vm519, 65537, 0
        %523 = vrot.lane.b32.xlu0 %v520, 112
        %v524 = vpop.permute.xlu0 %523
        %525 = vrot.lane.b32.xlu0 %v521, 112
        %v526 = vpop.permute.xlu0 %525
        %527 = vrot.lane.b32.xlu0 %v522, 112
        %v528 = vpop.permute.xlu0 %527
        %v529 = vrot.slane %v524, 4
        %v530 = vrot.slane %v526, 4
        %v531 = vrot.slane %v528, 4
        %vm532 = vcmask 916480
        %v533 = vsel %vm532, %v529, %v524
        %v534 = vsel %vm404, %v529, %v530
        %v535 = vsel %vm532, %v534, %v526
        %v536 = vsel %vm404, %v530, %v531
        %v537 = vsel %vm532, %v536, %v528
        %vm538 = vcmp.ne.s16.totalorder %v533, 0
        %vm539 = vcmp.ne.s16.totalorder %v535, 0
        %vm540 = vcmp.ne.s16.totalorder %v537, 0
        %vm541 = vcmp.ne.s16.totalorder %v531, 0
        %v542 = vsel %vm538, %v478, 0
        %v543 = vsel %vm539, %v479, 0
        %v544 = vsel %vm540, %v480, 0
        %v545 = vsel %vm541, %v481, 0
        %v546 = vsel %vm538, %v482, 0
        %v547 = vsel %vm539, %v483, 0
        %v548 = vsel %vm540, %v484, 0
        %v549 = vsel %vm541, %v485, 0
        %558 = vrot.lane.b32.xlu0 %v542, 16
        %v559 = vpop.permute.xlu0 %558
        %560 = vrot.lane.b32.xlu0 %v543, 16
        %v561 = vpop.permute.xlu0 %560
        %562 = vrot.lane.b32.xlu0 %v544, 16
        %v563 = vpop.permute.xlu0 %562
        %564 = vrot.lane.b32.xlu0 %v545, 16
        %v565 = vpop.permute.xlu0 %564
        %566 = vrot.lane.b32.xlu0 %v546, 16
        %v567 = vpop.permute.xlu0 %566
        %568 = vrot.lane.b32.xlu0 %v547, 16
        %v569 = vpop.permute.xlu0 %568
        %570 = vrot.lane.b32.xlu0 %v548, 16
        %v571 = vpop.permute.xlu0 %570
        %572 = vrot.lane.b32.xlu0 %v549, 16
        %v573 = vpop.permute.xlu0 %572
        %v574 = vrot.slane %v559, 4
        %v575 = vrot.slane %v561, 4
        %v576 = vrot.slane %v563, 4
        %v577 = vrot.slane %v565, 4
        %v578 = vrot.slane %v567, 4
        %v579 = vrot.slane %v569, 4
        %v580 = vrot.slane %v571, 4
        %v581 = vrot.slane %v573, 4
        %v582 = vsel %vm404, %v574, %v575
        %vm583 = vcmask 130048
        %v584 = vsel %vm583, %v559, %v582
        %v585 = vsel %vm404, %v575, %v576
        %v586 = vsel %vm583, %v561, %v585
        %v587 = vsel %vm404, %v576, %v577
        %v588 = vsel %vm583, %v563, %v587
        %v589 = vsel %vm404, %v578, %v579
        %v590 = vsel %vm583, %v567, %v589
        %v591 = vsel %vm404, %v579, %v580
        %v592 = vsel %vm583, %v569, %v591
        %v593 = vsel %vm404, %v580, %v581
        %v594 = vsel %vm583, %v571, %v593
        %601 = vst [vmem:[#allocation3 + $0x30] sm:$0xff] %v584
        %602 = vst [vmem:[#allocation3 + $0x38] sm:$0xff] %v586
        %603 = vst [vmem:[#allocation3 + $0x40] sm:$0xff] %v588
        %604 = vst [vmem:[#allocation3 + $0x48] sm:$0xff] %v590
        %605 = vst [vmem:[#allocation3 + $0x50] sm:$0xff] %v592
        %606 = vst [vmem:[#allocation3 + $0x58] sm:$0xff] %v594
        %v607 = vld [vmem:[#allocation2] sm:$0xff]
        %v608 = vld [vmem:[#allocation2 + $0x8] sm:$0xff]
        %v609 = vld [vmem:[#allocation2 + $0x10] sm:$0xff]
        %v610 = vld [vmem:[#allocation2 + $0x18] sm:$0xf]
        %v611 = vld [vmem:[#allocation2 + $0x20] sm:$0xff]
        %v612 = vld [vmem:[#allocation2 + $0x28] sm:$0xff]
        %v613 = vld [vmem:[#allocation2 + $0x30] sm:$0xff]
        %v614 = vld [vmem:[#allocation2 + $0x38] sm:$0xf]
        %vm615 = vcmp.lt.s32.totalorder %v327, 15
        %vm616 = vmand %vm353, %vm615
        %v617 = vsel %vm616, 1, 0
        %v618 = vlaneseq
        %v619 = vshrl.u32 %v618, 7
        %v620 = vsub.s32 0, %v619
        %v621 = vrot.slane %v617, %v620
        %v622 = vlaneseq
        %v623 = vshrl.u32 %v622, 7
        %v624 = vsub.s32 1, %v623
        %v625 = vrot.slane %v617, %v624
        %v626 = vlaneseq
        %v627 = vshrl.u32 %v626, 7
        %v628 = vsub.s32 2, %v627
        %v629 = vrot.slane %v617, %v628
        %v630 = vlaneseq
        %v631 = vshrl.u32 %v630, 7
        %v632 = vsub.s32 3, %v631
        %v633 = vrot.slane %v617, %v632
        %v634 = vlaneseq
        %v635 = vshrl.u32 %v634, 7
        %v636 = vsub.s32 4, %v635
        %v637 = vrot.slane %v617, %v636
        %v638 = vlaneseq
        %v639 = vshrl.u32 %v638, 7
        %v640 = vsub.s32 5, %v639
        %v641 = vrot.slane %v617, %v640
        %vm642 = vcmp.eq.s32.totalorder %v621, 1
        %vm643 = vcmp.eq.s32.totalorder %v625, 1
        %vm644 = vcmp.eq.s32.totalorder %v629, 1
        %vm645 = vcmp.eq.s32.totalorder %v633, 1
        %vm646 = vcmp.eq.s32.totalorder %v637, 1
        %vm647 = vcmp.eq.s32.totalorder %v641, 1
        %vm648 = vmpackc.low %vm643, %vm642
        %vm649 = vmpackc.low %vm645, %vm644
        %vm650 = vmpackc.low %vm647, %vm646
        %v651 = vsel %vm648, 65537, 0
        %v652 = vsel %vm649, 65537, 0
        %v653 = vsel %vm650, 65537, 0
        %654 = vrot.lane.b32.xlu0 %v651, 113
        %v655 = vpop.permute.xlu0 %654
        %656 = vrot.lane.b32.xlu0 %v652, 113
        %v657 = vpop.permute.xlu0 %656
        %658 = vrot.lane.b32.xlu0 %v653, 113
        %v659 = vpop.permute.xlu0 %658
        %v660 = vrot.slane %v655, 4
        %v661 = vrot.slane %v657, 4
        %v662 = vrot.slane %v659, 4
        %vm663 = vcmask 924672
        %v664 = vsel %vm663, %v660, %v655
        %v665 = vsel %vm404, %v660, %v661
        %v666 = vsel %vm663, %v665, %v657
        %v667 = vsel %vm404, %v661, %v662
        %v668 = vsel %vm663, %v667, %v659
        %vm669 = vcmp.ne.s16.totalorder %v664, 0
        %vm670 = vcmp.ne.s16.totalorder %v666, 0
        %vm671 = vcmp.ne.s16.totalorder %v668, 0
        %vm672 = vcmp.ne.s16.totalorder %v662, 0
        %v673 = vsel %vm669, %v607, 0
        %v674 = vsel %vm670, %v608, 0
        %v675 = vsel %vm671, %v609, 0
        %v676 = vsel %vm672, %v610, 0
        %v677 = vsel %vm669, %v611, 0
        %v678 = vsel %vm670, %v612, 0
        %v679 = vsel %vm671, %v613, 0
        %v680 = vsel %vm672, %v614, 0
        %689 = vrot.lane.b32.xlu0 %v673, 15
        %v690 = vpop.permute.xlu0 %689
        %691 = vrot.lane.b32.xlu0 %v674, 15
        %v692 = vpop.permute.xlu0 %691
        %693 = vrot.lane.b32.xlu0 %v675, 15
        %v694 = vpop.permute.xlu0 %693
        %695 = vrot.lane.b32.xlu0 %v676, 15
        %v696 = vpop.permute.xlu0 %695
        %697 = vrot.lane.b32.xlu0 %v677, 15
        %v698 = vpop.permute.xlu0 %697
        %699 = vrot.lane.b32.xlu0 %v678, 15
        %v700 = vpop.permute.xlu0 %699
        %701 = vrot.lane.b32.xlu0 %v679, 15
        %v702 = vpop.permute.xlu0 %701
        %703 = vrot.lane.b32.xlu0 %v680, 15
        %v704 = vpop.permute.xlu0 %703
        %v705 = vrot.slane %v690, 4
        %v706 = vrot.slane %v692, 4
        %v707 = vrot.slane %v694, 4
        %v708 = vrot.slane %v696, 4
        %v709 = vrot.slane %v698, 4
        %v710 = vrot.slane %v700, 4
        %v711 = vrot.slane %v702, 4
        %v712 = vrot.slane %v704, 4
        %v713 = vsel %vm404, %v705, %v706
        %vm714 = vcmask 121856
        %v715 = vsel %vm714, %v690, %v713
        %v716 = vsel %vm404, %v706, %v707
        %v717 = vsel %vm714, %v692, %v716
        %v718 = vsel %vm404, %v707, %v708
        %v719 = vsel %vm714, %v694, %v718
        %v720 = vsel %vm404, %v709, %v710
        %v721 = vsel %vm714, %v698, %v720
        %v722 = vsel %vm404, %v710, %v711
        %v723 = vsel %vm714, %v700, %v722
        %v724 = vsel %vm404, %v711, %v712
        %v725 = vsel %vm714, %v702, %v724
        %732 = vst [vmem:[#allocation3 + $0x60] sm:$0xff] %v715
        %733 = vst [vmem:[#allocation3 + $0x68] sm:$0xff] %v717
        %734 = vst [vmem:[#allocation3 + $0x70] sm:$0xff] %v719
        %735 = vst [vmem:[#allocation3 + $0x78] sm:$0xff] %v721
        %736 = vst [vmem:[#allocation3 + $0x80] sm:$0xff] %v723
        %737 = vst [vmem:[#allocation3 + $0x88] sm:$0xff] %v725
        %v738 = vld [vmem:[#allocation2] sm:$0xff]
        %v739 = vld [vmem:[#allocation2 + $0x8] sm:$0xff]
        %v740 = vld [vmem:[#allocation2 + $0x10] sm:$0xff]
        %v741 = vld [vmem:[#allocation2 + $0x18] sm:$0xf]
        %v742 = vld [vmem:[#allocation2 + $0x20] sm:$0xff]
        %v743 = vld [vmem:[#allocation2 + $0x28] sm:$0xff]
        %v744 = vld [vmem:[#allocation2 + $0x30] sm:$0xff]
        %v745 = vld [vmem:[#allocation2 + $0x38] sm:$0xf]
        %v746 = vsel %vm354, 1, 0
        %v747 = vlaneseq
        %v748 = vshrl.u32 %v747, 7
        %v749 = vsub.s32 0, %v748
        %v750 = vrot.slane %v746, %v749
        %v751 = vlaneseq
        %v752 = vshrl.u32 %v751, 7
        %v753 = vsub.s32 1, %v752
        %v754 = vrot.slane %v746, %v753
        %v755 = vlaneseq
        %v756 = vshrl.u32 %v755, 7
        %v757 = vsub.s32 2, %v756
        %v758 = vrot.slane %v746, %v757
        %v759 = vlaneseq
        %v760 = vshrl.u32 %v759, 7
        %v761 = vsub.s32 3, %v760
        %v762 = vrot.slane %v746, %v761
        %v763 = vlaneseq
        %v764 = vshrl.u32 %v763, 7
        %v765 = vsub.s32 4, %v764
        %v766 = vrot.slane %v746, %v765
        %v767 = vlaneseq
        %v768 = vshrl.u32 %v767, 7
        %v769 = vsub.s32 5, %v768
        %v770 = vrot.slane %v746, %v769
        %vm771 = vcmp.eq.s32.totalorder %v750, 1
        %vm772 = vcmp.eq.s32.totalorder %v754, 1
        %vm773 = vcmp.eq.s32.totalorder %v758, 1
        %vm774 = vcmp.eq.s32.totalorder %v762, 1
        %vm775 = vcmp.eq.s32.totalorder %v766, 1
        %vm776 = vcmp.eq.s32.totalorder %v770, 1
        %vm777 = vmpackc.low %vm772, %vm771
        %vm778 = vmpackc.low %vm774, %vm773
        %vm779 = vmpackc.low %vm776, %vm775
        %v780 = vsel %vm777, 65537, 0
        %v781 = vsel %vm778, 65537, 0
        %v782 = vsel %vm779, 65537, 0
        %783 = vrot.lane.b32.xlu0 %v780, 127
        %v784 = vpop.permute.xlu0 %783
        %785 = vrot.lane.b32.xlu0 %v781, 127
        %v786 = vpop.permute.xlu0 %785
        %787 = vrot.lane.b32.xlu0 %v782, 127
        %v788 = vpop.permute.xlu0 %787
        %v789 = vrot.slane %v784, 4
        %v790 = vrot.slane %v786, 4
        %v791 = vrot.slane %v788, 4
        %vm792 = vcmask 1039360
        %v793 = vsel %vm792, %v789, %v784
        %v794 = vsel %vm404, %v789, %v790
        %v795 = vsel %vm792, %v794, %v786
        %v796 = vsel %vm404, %v790, %v791
        %v797 = vsel %vm792, %v796, %v788
        %vm798 = vcmp.ne.s16.totalorder %v793, 0
        %vm799 = vcmp.ne.s16.totalorder %v795, 0
        %vm800 = vcmp.ne.s16.totalorder %v797, 0
        %vm801 = vcmp.ne.s16.totalorder %v791, 0
        %v802 = vsel %vm798, %v738, 0
        %v803 = vsel %vm799, %v739, 0
        %v804 = vsel %vm800, %v740, 0
        %v805 = vsel %vm801, %v741, 0
        %v806 = vsel %vm798, %v742, 0
        %v807 = vsel %vm799, %v743, 0
        %v808 = vsel %vm800, %v744, 0
        %v809 = vsel %vm801, %v745, 0
        %818 = vrot.lane.b32.xlu0 %v802, 1
        %v819 = vpop.permute.xlu0 %818
        %820 = vrot.lane.b32.xlu0 %v803, 1
        %v821 = vpop.permute.xlu0 %820
        %822 = vrot.lane.b32.xlu0 %v804, 1
        %v823 = vpop.permute.xlu0 %822
        %824 = vrot.lane.b32.xlu0 %v805, 1
        %v825 = vpop.permute.xlu0 %824
        %826 = vrot.lane.b32.xlu0 %v806, 1
        %v827 = vpop.permute.xlu0 %826
        %828 = vrot.lane.b32.xlu0 %v807, 1
        %v829 = vpop.permute.xlu0 %828
        %830 = vrot.lane.b32.xlu0 %v808, 1
        %v831 = vpop.permute.xlu0 %830
        %832 = vrot.lane.b32.xlu0 %v809, 1
        %v833 = vpop.permute.xlu0 %832
        %v834 = vrot.slane %v819, 4
        %v835 = vrot.slane %v821, 4
        %v836 = vrot.slane %v823, 4
        %v837 = vrot.slane %v825, 4
        %v838 = vrot.slane %v827, 4
        %v839 = vrot.slane %v829, 4
        %v840 = vrot.slane %v831, 4
        %v841 = vrot.slane %v833, 4
        %v842 = vsel %vm404, %v834, %v835
        %vm843 = vcmask 7168
        %v844 = vsel %vm843, %v819, %v842
        %v845 = vsel %vm404, %v835, %v836
        %v846 = vsel %vm843, %v821, %v845
        %v847 = vsel %vm404, %v836, %v837
        %v848 = vsel %vm843, %v823, %v847
        %v849 = vsel %vm404, %v838, %v839
        %v850 = vsel %vm843, %v827, %v849
        %v851 = vsel %vm404, %v839, %v840
        %v852 = vsel %vm843, %v829, %v851
        %v853 = vsel %vm404, %v840, %v841
        %v854 = vsel %vm843, %v831, %v853
        %861 = vst [vmem:[#allocation3 + $0x90] sm:$0xff] %v844
        %862 = vst [vmem:[#allocation3 + $0x98] sm:$0xff] %v846
        %863 = vst [vmem:[#allocation3 + $0xa0] sm:$0xff] %v848
        %864 = vst [vmem:[#allocation3 + $0xa8] sm:$0xff] %v850
        %865 = vst [vmem:[#allocation3 + $0xb0] sm:$0xff] %v852
        %866 = vst [vmem:[#allocation3 + $0xb8] sm:$0xff] %v854
        %v867 = vld [vmem:[#allocation2 + $0x4] sm:$0xff]
        %v868 = vld [vmem:[#allocation2 + $0xc] sm:$0xff]
        %v869 = vld [vmem:[#allocation2 + $0x14] sm:$0xff]
        %v870 = vld [vmem:[#allocation2 + $0x24] sm:$0xff]
        %v871 = vld [vmem:[#allocation2 + $0x2c] sm:$0xff]
        %v872 = vld [vmem:[#allocation2 + $0x34] sm:$0xff]
        %873 = vst [vmem:[#allocation3 + $0xc0] sm:$0xff] %v867
        %874 = vst [vmem:[#allocation3 + $0xc8] sm:$0xff] %v868
        %875 = vst [vmem:[#allocation3 + $0xd0] sm:$0xff] %v869
        %876 = vst [vmem:[#allocation3 + $0xd8] sm:$0xff] %v870
        %877 = vst [vmem:[#allocation3 + $0xe0] sm:$0xff] %v871
        %878 = vst [vmem:[#allocation3 + $0xe8] sm:$0xff] %v872
        %v879 = vld [vmem:[#allocation2 + $0x4] sm:$0xff]
        %v880 = vld [vmem:[#allocation2 + $0xc] sm:$0xff]
        %v881 = vld [vmem:[#allocation2 + $0x14] sm:$0xff]
        %v882 = vld [vmem:[#allocation2 + $0x1c] sm:$0xf]
        %v883 = vld [vmem:[#allocation2 + $0x24] sm:$0xff]
        %v884 = vld [vmem:[#allocation2 + $0x2c] sm:$0xff]
        %v885 = vld [vmem:[#allocation2 + $0x34] sm:$0xff]
        %v886 = vld [vmem:[#allocation2 + $0x3c] sm:$0xf]
        %v887 = vsel %vm615, 1, 0
        %v888 = vlaneseq
        %v889 = vshrl.u32 %v888, 7
        %v890 = vsub.s32 0, %v889
        %v891 = vrot.slane %v887, %v890
        %v892 = vlaneseq
        %v893 = vshrl.u32 %v892, 7
        %v894 = vsub.s32 1, %v893
        %v895 = vrot.slane %v887, %v894
        %v896 = vlaneseq
        %v897 = vshrl.u32 %v896, 7
        %v898 = vsub.s32 2, %v897
        %v899 = vrot.slane %v887, %v898
        %v900 = vlaneseq
        %v901 = vshrl.u32 %v900, 7
        %v902 = vsub.s32 3, %v901
        %v903 = vrot.slane %v887, %v902
        %v904 = vlaneseq
        %v905 = vshrl.u32 %v904, 7
        %v906 = vsub.s32 4, %v905
        %v907 = vrot.slane %v887, %v906
        %v908 = vlaneseq
        %v909 = vshrl.u32 %v908, 7
        %v910 = vsub.s32 5, %v909
        %v911 = vrot.slane %v887, %v910
        %vm912 = vcmp.eq.s32.totalorder %v891, 1
        %vm913 = vcmp.eq.s32.totalorder %v895, 1
        %vm914 = vcmp.eq.s32.totalorder %v899, 1
        %vm915 = vcmp.eq.s32.totalorder %v903, 1
        %vm916 = vcmp.eq.s32.totalorder %v907, 1
        %vm917 = vcmp.eq.s32.totalorder %v911, 1
        %vm918 = vmpackc.low %vm913, %vm912
        %vm919 = vmpackc.low %vm915, %vm914
        %vm920 = vmpackc.low %vm917, %vm916
        %v921 = vsel %vm918, 65537, 0
        %v922 = vsel %vm919, 65537, 0
        %v923 = vsel %vm920, 65537, 0
        %924 = vrot.lane.b32.xlu0 %v921, 1
        %v925 = vpop.permute.xlu0 %924
        %926 = vrot.lane.b32.xlu0 %v922, 1
        %v927 = vpop.permute.xlu0 %926
        %928 = vrot.lane.b32.xlu0 %v923, 1
        %v929 = vpop.permute.xlu0 %928
        %v930 = vrot.slane %v925, 4
        %v931 = vrot.slane %v927, 4
        %v932 = vrot.slane %v929, 4
        %v933 = vsel %vm843, %v930, %v925
        %v934 = vsel %vm404, %v930, %v931
        %v935 = vsel %vm843, %v934, %v927
        %v936 = vsel %vm404, %v931, %v932
        %v937 = vsel %vm843, %v936, %v929
        %vm938 = vcmp.ne.s16.totalorder %v933, 0
        %vm939 = vcmp.ne.s16.totalorder %v935, 0
        %vm940 = vcmp.ne.s16.totalorder %v937, 0
        %vm941 = vcmp.ne.s16.totalorder %v932, 0
        %v942 = vsel %vm938, %v879, 0
        %v943 = vsel %vm939, %v880, 0
        %v944 = vsel %vm940, %v881, 0
        %v945 = vsel %vm941, %v882, 0
        %v946 = vsel %vm938, %v883, 0
        %v947 = vsel %vm939, %v884, 0
        %v948 = vsel %vm940, %v885, 0
        %v949 = vsel %vm941, %v886, 0
        %958 = vrot.lane.b32.xlu0 %v942, 127
        %v959 = vpop.permute.xlu0 %958
        %960 = vrot.lane.b32.xlu0 %v943, 127
        %v961 = vpop.permute.xlu0 %960
        %962 = vrot.lane.b32.xlu0 %v944, 127
        %v963 = vpop.permute.xlu0 %962
        %964 = vrot.lane.b32.xlu0 %v945, 127
        %v965 = vpop.permute.xlu0 %964
        %966 = vrot.lane.b32.xlu0 %v946, 127
        %v967 = vpop.permute.xlu0 %966
        %968 = vrot.lane.b32.xlu0 %v947, 127
        %v969 = vpop.permute.xlu0 %968
        %970 = vrot.lane.b32.xlu0 %v948, 127
        %v971 = vpop.permute.xlu0 %970
        %972 = vrot.lane.b32.xlu0 %v949, 127
        %v973 = vpop.permute.xlu0 %972
        %v974 = vrot.slane %v959, 4
        %v975 = vrot.slane %v961, 4
        %v976 = vrot.slane %v963, 4
        %v977 = vrot.slane %v965, 4
        %v978 = vrot.slane %v967, 4
        %v979 = vrot.slane %v969, 4
        %v980 = vrot.slane %v971, 4
        %v981 = vrot.slane %v973, 4
        %v982 = vsel %vm404, %v974, %v975
        %v983 = vsel %vm792, %v959, %v982
        %v984 = vsel %vm404, %v975, %v976
        %v985 = vsel %vm792, %v961, %v984
        %v986 = vsel %vm404, %v976, %v977
        %v987 = vsel %vm792, %v963, %v986
        %v988 = vsel %vm404, %v978, %v979
        %v989 = vsel %vm792, %v967, %v988
        %v990 = vsel %vm404, %v979, %v980
        %v991 = vsel %vm792, %v969, %v990
        %v992 = vsel %vm404, %v980, %v981
        %v993 = vsel %vm792, %v971, %v992
        %1000 = vst [vmem:[#allocation3 + $0xf0] sm:$0xff] %v983
        %1001 = vst [vmem:[#allocation3 + $0xf8] sm:$0xff] %v985
        %1002 = vst [vmem:[#allocation3 + $0x100] sm:$0xff] %v987
        %1003 = vst [vmem:[#allocation3 + $0x108] sm:$0xff] %v989
        %1004 = vst [vmem:[#allocation3 + $0x110] sm:$0xff] %v991
        %1005 = vst [vmem:[#allocation3 + $0x118] sm:$0xff] %v993
        %v1006 = vld [vmem:[#allocation2 + $0x4] sm:$0xff]
        %v1007 = vld [vmem:[#allocation2 + $0xc] sm:$0xff]
        %v1008 = vld [vmem:[#allocation2 + $0x14] sm:$0xff]
        %v1009 = vld [vmem:[#allocation2 + $0x1c] sm:$0xf]
        %v1010 = vld [vmem:[#allocation2 + $0x24] sm:$0xff]
        %v1011 = vld [vmem:[#allocation2 + $0x2c] sm:$0xff]
        %v1012 = vld [vmem:[#allocation2 + $0x34] sm:$0xff]
        %v1013 = vld [vmem:[#allocation2 + $0x3c] sm:$0xf]
        %vm1014 = vcmp.lt.s32.totalorder %v326, 15
        %vm1015 = vmand %vm1014, %vm354
        %v1016 = vsel %vm1015, 1, 0
        %v1017 = vlaneseq
        %v1018 = vshrl.u32 %v1017, 7
        %v1019 = vsub.s32 0, %v1018
        %v1020 = vrot.slane %v1016, %v1019
        %v1021 = vlaneseq
        %v1022 = vshrl.u32 %v1021, 7
        %v1023 = vsub.s32 1, %v1022
        %v1024 = vrot.slane %v1016, %v1023
        %v1025 = vlaneseq
        %v1026 = vshrl.u32 %v1025, 7
        %v1027 = vsub.s32 2, %v1026
        %v1028 = vrot.slane %v1016, %v1027
        %v1029 = vlaneseq
        %v1030 = vshrl.u32 %v1029, 7
        %v1031 = vsub.s32 3, %v1030
        %v1032 = vrot.slane %v1016, %v1031
        %v1033 = vlaneseq
        %v1034 = vshrl.u32 %v1033, 7
        %v1035 = vsub.s32 4, %v1034
        %v1036 = vrot.slane %v1016, %v1035
        %v1037 = vlaneseq
        %v1038 = vshrl.u32 %v1037, 7
        %v1039 = vsub.s32 5, %v1038
        %v1040 = vrot.slane %v1016, %v1039
        %vm1041 = vcmp.eq.s32.totalorder %v1020, 1
        %vm1042 = vcmp.eq.s32.totalorder %v1024, 1
        %vm1043 = vcmp.eq.s32.totalorder %v1028, 1
        %vm1044 = vcmp.eq.s32.totalorder %v1032, 1
        %vm1045 = vcmp.eq.s32.totalorder %v1036, 1
        %vm1046 = vcmp.eq.s32.totalorder %v1040, 1
        %vm1047 = vmpackc.low %vm1042, %vm1041
        %vm1048 = vmpackc.low %vm1044, %vm1043
        %vm1049 = vmpackc.low %vm1046, %vm1045
        %v1050 = vsel %vm1047, 65537, 0
        %v1051 = vsel %vm1048, 65537, 0
        %v1052 = vsel %vm1049, 65537, 0
        %1053 = vrot.lane.b32.xlu0 %v1050, 15
        %v1054 = vpop.permute.xlu0 %1053
        %1055 = vrot.lane.b32.xlu0 %v1051, 15
        %v1056 = vpop.permute.xlu0 %1055
        %1057 = vrot.lane.b32.xlu0 %v1052, 15
        %v1058 = vpop.permute.xlu0 %1057
        %v1059 = vrot.slane %v1054, 4
        %v1060 = vrot.slane %v1056, 4
        %v1061 = vrot.slane %v1058, 4
        %v1062 = vsel %vm714, %v1059, %v1054
        %v1063 = vsel %vm404, %v1059, %v1060
        %v1064 = vsel %vm714, %v1063, %v1056
        %v1065 = vsel %vm404, %v1060, %v1061
        %v1066 = vsel %vm714, %v1065, %v1058
        %vm1067 = vcmp.ne.s16.totalorder %v1062, 0
        %vm1068 = vcmp.ne.s16.totalorder %v1064, 0
        %vm1069 = vcmp.ne.s16.totalorder %v1066, 0
        %vm1070 = vcmp.ne.s16.totalorder %v1061, 0
        %v1071 = vsel %vm1067, %v1006, 0
        %v1072 = vsel %vm1068, %v1007, 0
        %v1073 = vsel %vm1069, %v1008, 0
        %v1074 = vsel %vm1070, %v1009, 0
        %v1075 = vsel %vm1067, %v1010, 0
        %v1076 = vsel %vm1068, %v1011, 0
        %v1077 = vsel %vm1069, %v1012, 0
        %v1078 = vsel %vm1070, %v1013, 0
        %1087 = vrot.lane.b32.xlu0 %v1071, 113
        %v1088 = vpop.permute.xlu0 %1087
        %1089 = vrot.lane.b32.xlu0 %v1072, 113
        %v1090 = vpop.permute.xlu0 %1089
        %1091 = vrot.lane.b32.xlu0 %v1073, 113
        %v1092 = vpop.permute.xlu0 %1091
        %1093 = vrot.lane.b32.xlu0 %v1074, 113
        %v1094 = vpop.permute.xlu0 %1093
        %1095 = vrot.lane.b32.xlu0 %v1075, 113
        %v1096 = vpop.permute.xlu0 %1095
        %1097 = vrot.lane.b32.xlu0 %v1076, 113
        %v1098 = vpop.permute.xlu0 %1097
        %1099 = vrot.lane.b32.xlu0 %v1077, 113
        %v1100 = vpop.permute.xlu0 %1099
        %1101 = vrot.lane.b32.xlu0 %v1078, 113
        %v1102 = vpop.permute.xlu0 %1101
        %v1103 = vrot.slane %v1088, 4
        %v1104 = vrot.slane %v1090, 4
        %v1105 = vrot.slane %v1092, 4
        %v1106 = vrot.slane %v1094, 4
        %v1107 = vrot.slane %v1096, 4
        %v1108 = vrot.slane %v1098, 4
        %v1109 = vrot.slane %v1100, 4
        %v1110 = vrot.slane %v1102, 4
        %v1111 = vsel %vm404, %v1103, %v1104
        %v1112 = vsel %vm663, %v1088, %v1111
        %v1113 = vsel %vm404, %v1104, %v1105
        %v1114 = vsel %vm663, %v1090, %v1113
        %v1115 = vsel %vm404, %v1105, %v1106
        %v1116 = vsel %vm663, %v1092, %v1115
        %v1117 = vsel %vm404, %v1107, %v1108
        %v1118 = vsel %vm663, %v1096, %v1117
        %v1119 = vsel %vm404, %v1108, %v1109
        %v1120 = vsel %vm663, %v1098, %v1119
        %v1121 = vsel %vm404, %v1109, %v1110
        %v1122 = vsel %vm663, %v1100, %v1121
        %1129 = vst [vmem:[#allocation3 + $0x120] sm:$0xff] %v1112
        %1130 = vst [vmem:[#allocation3 + $0x128] sm:$0xff] %v1114
        %1131 = vst [vmem:[#allocation3 + $0x130] sm:$0xff] %v1116
        %1132 = vst [vmem:[#allocation3 + $0x138] sm:$0xff] %v1118
        %1133 = vst [vmem:[#allocation3 + $0x140] sm:$0xff] %v1120
        %1134 = vst [vmem:[#allocation3 + $0x148] sm:$0xff] %v1122
        %v1135 = vld [vmem:[#allocation2 + $0x4] sm:$0xff]
        %v1136 = vld [vmem:[#allocation2 + $0xc] sm:$0xff]
        %v1137 = vld [vmem:[#allocation2 + $0x14] sm:$0xff]
        %v1138 = vld [vmem:[#allocation2 + $0x1c] sm:$0xf]
        %v1139 = vld [vmem:[#allocation2 + $0x24] sm:$0xff]
        %v1140 = vld [vmem:[#allocation2 + $0x2c] sm:$0xff]
        %v1141 = vld [vmem:[#allocation2 + $0x34] sm:$0xff]
        %v1142 = vld [vmem:[#allocation2 + $0x3c] sm:$0xf]
        %v1143 = vsel %vm1014, 1, 0
        %v1144 = vlaneseq
        %v1145 = vshrl.u32 %v1144, 7
        %v1146 = vsub.s32 0, %v1145
        %v1147 = vrot.slane %v1143, %v1146
        %v1148 = vlaneseq
        %v1149 = vshrl.u32 %v1148, 7
        %v1150 = vsub.s32 1, %v1149
        %v1151 = vrot.slane %v1143, %v1150
        %v1152 = vlaneseq
        %v1153 = vshrl.u32 %v1152, 7
        %v1154 = vsub.s32 2, %v1153
        %v1155 = vrot.slane %v1143, %v1154
        %v1156 = vlaneseq
        %v1157 = vshrl.u32 %v1156, 7
        %v1158 = vsub.s32 3, %v1157
        %v1159 = vrot.slane %v1143, %v1158
        %v1160 = vlaneseq
        %v1161 = vshrl.u32 %v1160, 7
        %v1162 = vsub.s32 4, %v1161
        %v1163 = vrot.slane %v1143, %v1162
        %v1164 = vlaneseq
        %v1165 = vshrl.u32 %v1164, 7
        %v1166 = vsub.s32 5, %v1165
        %v1167 = vrot.slane %v1143, %v1166
        %vm1168 = vcmp.eq.s32.totalorder %v1147, 1
        %vm1169 = vcmp.eq.s32.totalorder %v1151, 1
        %vm1170 = vcmp.eq.s32.totalorder %v1155, 1
        %vm1171 = vcmp.eq.s32.totalorder %v1159, 1
        %vm1172 = vcmp.eq.s32.totalorder %v1163, 1
        %vm1173 = vcmp.eq.s32.totalorder %v1167, 1
        %vm1174 = vmpackc.low %vm1169, %vm1168
        %vm1175 = vmpackc.low %vm1171, %vm1170
        %vm1176 = vmpackc.low %vm1173, %vm1172
        %v1177 = vsel %vm1174, 65537, 0
        %v1178 = vsel %vm1175, 65537, 0
        %v1179 = vsel %vm1176, 65537, 0
        %1180 = vrot.lane.b32.xlu0 %v1177, 16
        %v1181 = vpop.permute.xlu0 %1180
        %1182 = vrot.lane.b32.xlu0 %v1178, 16
        %v1183 = vpop.permute.xlu0 %1182
        %1184 = vrot.lane.b32.xlu0 %v1179, 16
        %v1185 = vpop.permute.xlu0 %1184
        %v1186 = vrot.slane %v1181, 4
        %v1187 = vrot.slane %v1183, 4
        %v1188 = vrot.slane %v1185, 4
        %v1189 = vsel %vm583, %v1186, %v1181
        %v1190 = vsel %vm404, %v1186, %v1187
        %v1191 = vsel %vm583, %v1190, %v1183
        %v1192 = vsel %vm404, %v1187, %v1188
        %v1193 = vsel %vm583, %v1192, %v1185
        %vm1194 = vcmp.ne.s16.totalorder %v1189, 0
        %vm1195 = vcmp.ne.s16.totalorder %v1191, 0
        %vm1196 = vcmp.ne.s16.totalorder %v1193, 0
        %vm1197 = vcmp.ne.s16.totalorder %v1188, 0
        %v1198 = vsel %vm1194, %v1135, 0
        %v1199 = vsel %vm1195, %v1136, 0
        %v1200 = vsel %vm1196, %v1137, 0
        %v1201 = vsel %vm1197, %v1138, 0
        %v1202 = vsel %vm1194, %v1139, 0
        %v1203 = vsel %vm1195, %v1140, 0
        %v1204 = vsel %vm1196, %v1141, 0
        %v1205 = vsel %vm1197, %v1142, 0
        %1214 = vrot.lane.b32.xlu0 %v1198, 112
        %v1215 = vpop.permute.xlu0 %1214
        %1216 = vrot.lane.b32.xlu0 %v1199, 112
        %v1217 = vpop.permute.xlu0 %1216
        %1218 = vrot.lane.b32.xlu0 %v1200, 112
        %v1219 = vpop.permute.xlu0 %1218
        %1220 = vrot.lane.b32.xlu0 %v1201, 112
        %v1221 = vpop.permute.xlu0 %1220
        %1222 = vrot.lane.b32.xlu0 %v1202, 112
        %v1223 = vpop.permute.xlu0 %1222
        %1224 = vrot.lane.b32.xlu0 %v1203, 112
        %v1225 = vpop.permute.xlu0 %1224
        %1226 = vrot.lane.b32.xlu0 %v1204, 112
        %v1227 = vpop.permute.xlu0 %1226
        %1228 = vrot.lane.b32.xlu0 %v1205, 112
        %v1229 = vpop.permute.xlu0 %1228
        %v1230 = vrot.slane %v1215, 4
        %v1231 = vrot.slane %v1217, 4
        %v1232 = vrot.slane %v1219, 4
        %v1233 = vrot.slane %v1221, 4
        %v1234 = vrot.slane %v1223, 4
        %v1235 = vrot.slane %v1225, 4
        %v1236 = vrot.slane %v1227, 4
        %v1237 = vrot.slane %v1229, 4
        %v1238 = vsel %vm404, %v1230, %v1231
        %v1239 = vsel %vm532, %v1215, %v1238
        %v1240 = vsel %vm404, %v1231, %v1232
        %v1241 = vsel %vm532, %v1217, %v1240
        %v1242 = vsel %vm404, %v1232, %v1233
        %v1243 = vsel %vm532, %v1219, %v1242
        %v1244 = vsel %vm404, %v1234, %v1235
        %v1245 = vsel %vm532, %v1223, %v1244
        %v1246 = vsel %vm404, %v1235, %v1236
        %v1247 = vsel %vm532, %v1225, %v1246
        %v1248 = vsel %vm404, %v1236, %v1237
        %v1249 = vsel %vm532, %v1227, %v1248
        %1256 = vst [vmem:[#allocation3 + $0x150] sm:$0xff] %v1239
        %1257 = vst [vmem:[#allocation3 + $0x158] sm:$0xff] %v1241
        %1258 = vst [vmem:[#allocation3 + $0x160] sm:$0xff] %v1243
        %1259 = vst [vmem:[#allocation3 + $0x168] sm:$0xff] %v1245
        %1260 = vst [vmem:[#allocation3 + $0x170] sm:$0xff] %v1247
        %1261 = vst [vmem:[#allocation3 + $0x178] sm:$0xff] %v1249
        %v1262 = vld [vmem:[#allocation2 + $0x4] sm:$0xff]
        %v1263 = vld [vmem:[#allocation2 + $0xc] sm:$0xff]
        %v1264 = vld [vmem:[#allocation2 + $0x14] sm:$0xff]
        %v1265 = vld [vmem:[#allocation2 + $0x1c] sm:$0xf]
        %v1266 = vld [vmem:[#allocation2 + $0x24] sm:$0xff]
        %v1267 = vld [vmem:[#allocation2 + $0x2c] sm:$0xff]
        %v1268 = vld [vmem:[#allocation2 + $0x34] sm:$0xff]
        %v1269 = vld [vmem:[#allocation2 + $0x3c] sm:$0xf]
        %vm1270 = vmand %vm1014, %vm615
        %v1271 = vsel %vm1270, 1, 0
        %v1272 = vlaneseq
        %v1273 = vshrl.u32 %v1272, 7
        %v1274 = vsub.s32 0, %v1273
        %v1275 = vrot.slane %v1271, %v1274
        %v1276 = vlaneseq
        %v1277 = vshrl.u32 %v1276, 7
        %v1278 = vsub.s32 1, %v1277
        %v1279 = vrot.slane %v1271, %v1278
        %v1280 = vlaneseq
        %v1281 = vshrl.u32 %v1280, 7
        %v1282 = vsub.s32 2, %v1281
        %v1283 = vrot.slane %v1271, %v1282
        %v1284 = vlaneseq
        %v1285 = vshrl.u32 %v1284, 7
        %v1286 = vsub.s32 3, %v1285
        %v1287 = vrot.slane %v1271, %v1286
        %v1288 = vlaneseq
        %v1289 = vshrl.u32 %v1288, 7
        %v1290 = vsub.s32 4, %v1289
        %v1291 = vrot.slane %v1271, %v1290
        %v1292 = vlaneseq
        %v1293 = vshrl.u32 %v1292, 7
        %v1294 = vsub.s32 5, %v1293
        %v1295 = vrot.slane %v1271, %v1294
        %vm1296 = vcmp.eq.s32.totalorder %v1275, 1
        %vm1297 = vcmp.eq.s32.totalorder %v1279, 1
        %vm1298 = vcmp.eq.s32.totalorder %v1283, 1
        %vm1299 = vcmp.eq.s32.totalorder %v1287, 1
        %vm1300 = vcmp.eq.s32.totalorder %v1291, 1
        %vm1301 = vcmp.eq.s32.totalorder %v1295, 1
        %vm1302 = vmpackc.low %vm1297, %vm1296
        %vm1303 = vmpackc.low %vm1299, %vm1298
        %vm1304 = vmpackc.low %vm1301, %vm1300
        %v1305 = vsel %vm1302, 65537, 0
        %v1306 = vsel %vm1303, 65537, 0
        %v1307 = vsel %vm1304, 65537, 0
        %1308 = vrot.lane.b32.xlu0 %v1305, 17
        %v1309 = vpop.permute.xlu0 %1308
        %1310 = vrot.lane.b32.xlu0 %v1306, 17
        %v1311 = vpop.permute.xlu0 %1310
        %1312 = vrot.lane.b32.xlu0 %v1307, 17
        %v1313 = vpop.permute.xlu0 %1312
        %v1314 = vrot.slane %v1309, 4
        %v1315 = vrot.slane %v1311, 4
        %v1316 = vrot.slane %v1313, 4
        %v1317 = vsel %vm454, %v1314, %v1309
        %v1318 = vsel %vm404, %v1314, %v1315
        %v1319 = vsel %vm454, %v1318, %v1311
        %v1320 = vsel %vm404, %v1315, %v1316
        %v1321 = vsel %vm454, %v1320, %v1313
        %vm1322 = vcmp.ne.s16.totalorder %v1317, 0
        %vm1323 = vcmp.ne.s16.totalorder %v1319, 0
        %vm1324 = vcmp.ne.s16.totalorder %v1321, 0
        %vm1325 = vcmp.ne.s16.totalorder %v1316, 0
        %v1326 = vsel %vm1322, %v1262, 0
        %v1327 = vsel %vm1323, %v1263, 0
        %v1328 = vsel %vm1324, %v1264, 0
        %v1329 = vsel %vm1325, %v1265, 0
        %v1330 = vsel %vm1322, %v1266, 0
        %v1331 = vsel %vm1323, %v1267, 0
        %v1332 = vsel %vm1324, %v1268, 0
        %v1333 = vsel %vm1325, %v1269, 0
        %1342 = vrot.lane.b32.xlu0 %v1326, 111
        %v1343 = vpop.permute.xlu0 %1342
        %1344 = vrot.lane.b32.xlu0 %v1327, 111
        %v1345 = vpop.permute.xlu0 %1344
        %1346 = vrot.lane.b32.xlu0 %v1328, 111
        %v1347 = vpop.permute.xlu0 %1346
        %1348 = vrot.lane.b32.xlu0 %v1329, 111
        %v1349 = vpop.permute.xlu0 %1348
        %1350 = vrot.lane.b32.xlu0 %v1330, 111
        %v1351 = vpop.permute.xlu0 %1350
        %1352 = vrot.lane.b32.xlu0 %v1331, 111
        %v1353 = vpop.permute.xlu0 %1352
        %1354 = vrot.lane.b32.xlu0 %v1332, 111
        %v1355 = vpop.permute.xlu0 %1354
        %1356 = vrot.lane.b32.xlu0 %v1333, 111
        %v1357 = vpop.permute.xlu0 %1356
        %v1358 = vrot.slane %v1343, 4
        %v1359 = vrot.slane %v1345, 4
        %v1360 = vrot.slane %v1347, 4
        %v1361 = vrot.slane %v1349, 4
        %v1362 = vrot.slane %v1351, 4
        %v1363 = vrot.slane %v1353, 4
        %v1364 = vrot.slane %v1355, 4
        %v1365 = vrot.slane %v1357, 4
        %v1366 = vsel %vm404, %v1358, %v1359
        %v1367 = vsel %vm402, %v1343, %v1366
        %v1368 = vsel %vm404, %v1359, %v1360
        %v1369 = vsel %vm402, %v1345, %v1368
        %v1370 = vsel %vm404, %v1360, %v1361
        %v1371 = vsel %vm402, %v1347, %v1370
        %v1372 = vsel %vm404, %v1362, %v1363
        %v1373 = vsel %vm402, %v1351, %v1372
        %v1374 = vsel %vm404, %v1363, %v1364
        %v1375 = vsel %vm402, %v1353, %v1374
        %v1376 = vsel %vm404, %v1364, %v1365
        %v1377 = vsel %vm402, %v1355, %v1376
        %1384 = vst [vmem:[#allocation3 + $0x180] sm:$0xff] %v1367
        %1385 = vst [vmem:[#allocation3 + $0x188] sm:$0xff] %v1369
        %1386 = vst [vmem:[#allocation3 + $0x190] sm:$0xff] %v1371
        %1387 = vst [vmem:[#allocation3 + $0x198] sm:$0xff] %v1373
        %1388 = vst [vmem:[#allocation3 + $0x1a0] sm:$0xff] %v1375
        %1389 = vst [vmem:[#allocation3 + $0x1a8] sm:$0xff] %v1377
        %v1390 = vld [vmem:[#allocation7] sm:$0xff]
        %v1391 = vld [vmem:[#allocation3] sm:$0xff]
        %v1392 = vld [vmem:[#allocation3 + $0x8] sm:$0xff]
        %v1393 = vld [vmem:[#allocation3 + $0x10] sm:$0xff]
        %v1394 = vld [vmem:[#allocation3 + $0x18] sm:$0xff]
        %v1395 = vld [vmem:[#allocation3 + $0x20] sm:$0xff]
        %v1396 = vld [vmem:[#allocation3 + $0x28] sm:$0xff]
        %v1397 = vld [vmem:[#allocation3 + $0x30] sm:$0xff]
        %v1398 = vld [vmem:[#allocation3 + $0x38] sm:$0xff]
        %v1399 = vld [vmem:[#allocation3 + $0x40] sm:$0xff]
        %v1400 = vld [vmem:[#allocation3 + $0x48] sm:$0xff]
        %v1401 = vld [vmem:[#allocation3 + $0x50] sm:$0xff]
        %v1402 = vld [vmem:[#allocation3 + $0x58] sm:$0xff]
        %v1403 = vld [vmem:[#allocation3 + $0x60] sm:$0xff]
        %v1404 = vld [vmem:[#allocation3 + $0x68] sm:$0xff]
        %v1405 = vld [vmem:[#allocation3 + $0x70] sm:$0xff]
        %v1406 = vld [vmem:[#allocation3 + $0x78] sm:$0xff]
        %v1407 = vld [vmem:[#allocation3 + $0x80] sm:$0xff]
        %v1408 = vld [vmem:[#allocation3 + $0x88] sm:$0xff]
        %v1409 = vld [vmem:[#allocation3 + $0x90] sm:$0xff]
        %v1410 = vld [vmem:[#allocation3 + $0x98] sm:$0xff]
        %v1411 = vld [vmem:[#allocation3 + $0xa0] sm:$0xff]
        %v1412 = vld [vmem:[#allocation3 + $0xa8] sm:$0xff]
        %v1413 = vld [vmem:[#allocation3 + $0xb0] sm:$0xff]
        %v1414 = vld [vmem:[#allocation3 + $0xb8] sm:$0xff]
        %v1415 = vld [vmem:[#allocation3 + $0xc0] sm:$0xff]
        %v1416 = vld [vmem:[#allocation3 + $0xc8] sm:$0xff]
        %v1417 = vld [vmem:[#allocation3 + $0xd0] sm:$0xff]
        %v1418 = vld [vmem:[#allocation3 + $0xd8] sm:$0xff]
        %v1419 = vld [vmem:[#allocation3 + $0xe0] sm:$0xff]
        %v1420 = vld [vmem:[#allocation3 + $0xe8] sm:$0xff]
        %v1421 = vld [vmem:[#allocation3 + $0xf0] sm:$0xff]
        %v1422 = vld [vmem:[#allocation3 + $0xf8] sm:$0xff]
        %v1423 = vld [vmem:[#allocation3 + $0x100] sm:$0xff]
        %v1424 = vld [vmem:[#allocation3 + $0x108] sm:$0xff]
        %v1425 = vld [vmem:[#allocation3 + $0x110] sm:$0xff]
        %v1426 = vld [vmem:[#allocation3 + $0x118] sm:$0xff]
        %v1427 = vld [vmem:[#allocation3 + $0x120] sm:$0xff]
        %v1428 = vld [vmem:[#allocation3 + $0x128] sm:$0xff]
        %v1429 = vld [vmem:[#allocation3 + $0x130] sm:$0xff]
        %v1430 = vld [vmem:[#allocation3 + $0x138] sm:$0xff]
        %v1431 = vld [vmem:[#allocation3 + $0x140] sm:$0xff]
        %v1432 = vld [vmem:[#allocation3 + $0x148] sm:$0xff]
        %v1433 = vld [vmem:[#allocation3 + $0x150] sm:$0xff]
        %v1434 = vld [vmem:[#allocation3 + $0x158] sm:$0xff]
        %v1435 = vld [vmem:[#allocation3 + $0x160] sm:$0xff]
        %v1436 = vld [vmem:[#allocation3 + $0x168] sm:$0xff]
        %v1437 = vld [vmem:[#allocation3 + $0x170] sm:$0xff]
        %v1438 = vld [vmem:[#allocation3 + $0x178] sm:$0xff]
        %v1439 = vld [vmem:[#allocation3 + $0x180] sm:$0xff]
        %v1440 = vld [vmem:[#allocation3 + $0x188] sm:$0xff]
        %v1441 = vld [vmem:[#allocation3 + $0x190] sm:$0xff]
        %v1442 = vld [vmem:[#allocation3 + $0x198] sm:$0xff]
        %v1443 = vld [vmem:[#allocation3 + $0x1a0] sm:$0xff]
        %v1444 = vld [vmem:[#allocation3 + $0x1a8] sm:$0xff]
        %v1446 = vunpack.c.l.b16 %v1390
        %v1447 = vunpack.c.h.b16 %v1390
        %v1448 = vpack.c.b16 %v1446, %v1446
        %v1449 = vpack.c.b16 %v1447, %v1447
        %v1505 = vunpack.c.l.b16 %v1391
        %v1506 = vunpack.c.h.b16 %v1391
        %v1507 = vunpack.c.l.b16 %v1392
        %v1508 = vunpack.c.h.b16 %v1392
        %v1509 = vunpack.c.l.b16 %v1393
        %v1510 = vunpack.c.h.b16 %v1393
        %v1511 = vunpack.c.l.b16 %v1394
        %v1512 = vunpack.c.h.b16 %v1394
        %v1513 = vunpack.c.l.b16 %v1395
        %v1514 = vunpack.c.h.b16 %v1395
        %v1515 = vunpack.c.l.b16 %v1396
        %v1516 = vunpack.c.h.b16 %v1396
        %v1517 = vunpack.c.l.b16 %v1397
        %v1518 = vunpack.c.h.b16 %v1397
        %v1519 = vunpack.c.l.b16 %v1398
        %v1520 = vunpack.c.h.b16 %v1398
        %v1521 = vunpack.c.l.b16 %v1399
        %v1522 = vunpack.c.h.b16 %v1399
        %v1523 = vunpack.c.l.b16 %v1400
        %v1524 = vunpack.c.h.b16 %v1400
        %v1525 = vunpack.c.l.b16 %v1401
        %v1526 = vunpack.c.h.b16 %v1401
        %v1527 = vunpack.c.l.b16 %v1402
        %v1528 = vunpack.c.h.b16 %v1402
        %v1529 = vunpack.c.l.b16 %v1403
        %v1530 = vunpack.c.h.b16 %v1403
        %v1531 = vunpack.c.l.b16 %v1404
        %v1532 = vunpack.c.h.b16 %v1404
        %v1533 = vunpack.c.l.b16 %v1405
        %v1534 = vunpack.c.h.b16 %v1405
        %v1535 = vunpack.c.l.b16 %v1406
        %v1536 = vunpack.c.h.b16 %v1406
        %v1537 = vunpack.c.l.b16 %v1407
        %v1538 = vunpack.c.h.b16 %v1407
        %v1539 = vunpack.c.l.b16 %v1408
        %v1540 = vunpack.c.h.b16 %v1408
        %v1541 = vunpack.c.l.b16 %v1409
        %v1542 = vunpack.c.h.b16 %v1409
        %v1543 = vunpack.c.l.b16 %v1410
        %v1544 = vunpack.c.h.b16 %v1410
        %v1545 = vunpack.c.l.b16 %v1411
        %v1546 = vunpack.c.h.b16 %v1411
        %v1547 = vunpack.c.l.b16 %v1412
        %v1548 = vunpack.c.h.b16 %v1412
        %v1549 = vunpack.c.l.b16 %v1413
        %v1550 = vunpack.c.h.b16 %v1413
        %v1551 = vunpack.c.l.b16 %v1414
        %v1552 = vunpack.c.h.b16 %v1414
        %v1553 = vunpack.c.l.b16 %v1415
        %v1554 = vunpack.c.h.b16 %v1415
        %v1555 = vunpack.c.l.b16 %v1416
        %v1556 = vunpack.c.h.b16 %v1416
        %v1557 = vunpack.c.l.b16 %v1417
        %v1558 = vunpack.c.h.b16 %v1417
        %v1559 = vunpack.c.l.b16 %v1418
        %v1560 = vunpack.c.h.b16 %v1418
        %v1561 = vunpack.c.l.b16 %v1419
        %v1562 = vunpack.c.h.b16 %v1419
        %v1563 = vunpack.c.l.b16 %v1420
        %v1564 = vunpack.c.h.b16 %v1420
        %v1565 = vunpack.c.l.b16 %v1421
        %v1566 = vunpack.c.h.b16 %v1421
        %v1567 = vunpack.c.l.b16 %v1422
        %v1568 = vunpack.c.h.b16 %v1422
        %v1569 = vunpack.c.l.b16 %v1423
        %v1570 = vunpack.c.h.b16 %v1423
        %v1571 = vunpack.c.l.b16 %v1424
        %v1572 = vunpack.c.h.b16 %v1424
        %v1573 = vunpack.c.l.b16 %v1425
        %v1574 = vunpack.c.h.b16 %v1425
        %v1575 = vunpack.c.l.b16 %v1426
        %v1576 = vunpack.c.h.b16 %v1426
        %v1577 = vunpack.c.l.b16 %v1427
        %v1578 = vunpack.c.h.b16 %v1427
        %v1579 = vunpack.c.l.b16 %v1428
        %v1580 = vunpack.c.h.b16 %v1428
        %v1581 = vunpack.c.l.b16 %v1429
        %v1582 = vunpack.c.h.b16 %v1429
        %v1583 = vunpack.c.l.b16 %v1430
        %v1584 = vunpack.c.h.b16 %v1430
        %v1585 = vunpack.c.l.b16 %v1431
        %v1586 = vunpack.c.h.b16 %v1431
        %v1587 = vunpack.c.l.b16 %v1432
        %v1588 = vunpack.c.h.b16 %v1432
        %v1589 = vunpack.c.l.b16 %v1433
        %v1590 = vunpack.c.h.b16 %v1433
        %v1591 = vunpack.c.l.b16 %v1434
        %v1592 = vunpack.c.h.b16 %v1434
        %v1593 = vunpack.c.l.b16 %v1435
        %v1594 = vunpack.c.h.b16 %v1435
        %v1595 = vunpack.c.l.b16 %v1436
        %v1596 = vunpack.c.h.b16 %v1436
        %v1597 = vunpack.c.l.b16 %v1437
        %v1598 = vunpack.c.h.b16 %v1437
        %v1599 = vunpack.c.l.b16 %v1438
        %v1600 = vunpack.c.h.b16 %v1438
        %v1601 = vunpack.c.l.b16 %v1439
        %v1602 = vunpack.c.h.b16 %v1439
        %v1603 = vunpack.c.l.b16 %v1440
        %v1604 = vunpack.c.h.b16 %v1440
        %v1605 = vunpack.c.l.b16 %v1441
        %v1606 = vunpack.c.h.b16 %v1441
        %v1607 = vunpack.c.l.b16 %v1442
        %v1608 = vunpack.c.h.b16 %v1442
        %v1609 = vunpack.c.l.b16 %v1443
        %v1610 = vunpack.c.h.b16 %v1443
        %v1611 = vunpack.c.l.b16 %v1444
        %v1612 = vunpack.c.h.b16 %v1444
        %v1613 = vpack.c.b16 %v1511, %v1505
        %v1614 = vpack.c.b16 %v1512, %v1506
        %v1615 = vpack.c.b16 %v1513, %v1507
        %v1616 = vpack.c.b16 %v1514, %v1508
        %v1617 = vpack.c.b16 %v1515, %v1509
        %v1618 = vpack.c.b16 %v1516, %v1510
        %v1619 = vpack.c.b16 %v1523, %v1517
        %v1620 = vpack.c.b16 %v1524, %v1518
        %v1621 = vpack.c.b16 %v1525, %v1519
        %v1622 = vpack.c.b16 %v1526, %v1520
        %v1623 = vpack.c.b16 %v1527, %v1521
        %v1624 = vpack.c.b16 %v1528, %v1522
        %v1625 = vpack.c.b16 %v1535, %v1529
        %v1626 = vpack.c.b16 %v1536, %v1530
        %v1627 = vpack.c.b16 %v1537, %v1531
        %v1628 = vpack.c.b16 %v1538, %v1532
        %v1629 = vpack.c.b16 %v1539, %v1533
        %v1630 = vpack.c.b16 %v1540, %v1534
        %v1631 = vpack.c.b16 %v1547, %v1541
        %v1632 = vpack.c.b16 %v1548, %v1542
        %v1633 = vpack.c.b16 %v1549, %v1543
        %v1634 = vpack.c.b16 %v1550, %v1544
        %v1635 = vpack.c.b16 %v1551, %v1545
        %v1636 = vpack.c.b16 %v1552, %v1546
        %v1637 = vpack.c.b16 %v1559, %v1553
        %v1638 = vpack.c.b16 %v1560, %v1554
        %v1639 = vpack.c.b16 %v1561, %v1555
        %v1640 = vpack.c.b16 %v1562, %v1556
        %v1641 = vpack.c.b16 %v1563, %v1557
        %v1642 = vpack.c.b16 %v1564, %v1558
        %v1643 = vpack.c.b16 %v1571, %v1565
        %v1644 = vpack.c.b16 %v1572, %v1566
        %v1645 = vpack.c.b16 %v1573, %v1567
        %v1646 = vpack.c.b16 %v1574, %v1568
        %v1647 = vpack.c.b16 %v1575, %v1569
        %v1648 = vpack.c.b16 %v1576, %v1570
        %v1649 = vpack.c.b16 %v1583, %v1577
        %v1650 = vpack.c.b16 %v1584, %v1578
        %v1651 = vpack.c.b16 %v1585, %v1579
        %v1652 = vpack.c.b16 %v1586, %v1580
        %v1653 = vpack.c.b16 %v1587, %v1581
        %v1654 = vpack.c.b16 %v1588, %v1582
        %v1655 = vpack.c.b16 %v1595, %v1589
        %v1656 = vpack.c.b16 %v1596, %v1590
        %v1657 = vpack.c.b16 %v1597, %v1591
        %v1658 = vpack.c.b16 %v1598, %v1592
        %v1659 = vpack.c.b16 %v1599, %v1593
        %v1660 = vpack.c.b16 %v1600, %v1594
        %v1661 = vpack.c.b16 %v1607, %v1601
        %v1662 = vpack.c.b16 %v1608, %v1602
        %v1663 = vpack.c.b16 %v1609, %v1603
        %v1664 = vpack.c.b16 %v1610, %v1604
        %v1665 = vpack.c.b16 %v1611, %v1605
        %v1666 = vpack.c.b16 %v1612, %v1606
        %vm1721 = vcmask 130048
        %v1723 = vsel %vm1721, %v1449, 0
        %1725 = vmatprep.subr.bf16.mxu0 %v1656
        %1726 = vmatpush1.bf16.msra.mxu0 %v1655
        %1727 = vmatprep.subr.bf16.mxu0 %v1650
        %1728 = vmatpush1.bf16.msra.mxu0 %v1649
        %1729 = vmatprep.subr.bf16.mxu0 %v1644
        %1730 = vmatpush1.bf16.msra.mxu0 %v1643
        %1731 = vmatprep.subr.bf16.mxu0 %v1638
        %1732 = vmatpush1.bf16.msra.mxu0 %v1637
        %1733 = vmatprep.subr.bf16.mxu0 %v1632
        %1734 = vmatpush1.bf16.msra.mxu0 %v1631
        %1735 = vmatprep.subr.bf16.mxu0 %v1626
        %1736 = vmatpush1.bf16.msra.mxu0 %v1625
        %1737 = vmatprep.subr.bf16.mxu0 %v1620
        %1738 = vmatpush1.bf16.msra.mxu0 %v1619
        %1739 = vmatprep.subr.bf16.mxu0 %v1614
        %1740 = vmatpush1.bf16.msra.mxu0 %v1613
        %1741 = vmatprep.subr.bf16.mxu0 0
        %1742 = vmatpush2.bf16.msra.mxu0 0
        %1743 = vmatprep.subr.bf16.mxu0 0
        %1744 = vmatpush2.bf16.msra.mxu0 0
        %1745 = vmatprep.subr.bf16.mxu0 0
        %1746 = vmatpush2.bf16.msra.mxu0 0
        %1747 = vmatprep.subr.bf16.mxu0 0
        %1748 = vmatpush2.bf16.msra.mxu0 0
        %1749 = vmatprep.subr.bf16.mxu0 0
        %1750 = vmatpush2.bf16.msra.mxu0 0
        %1751 = vmatprep.subr.bf16.mxu0 0
        %1752 = vmatpush2.bf16.msra.mxu0 0
        %1753 = vmatprep.subr.bf16.mxu0 0
        %1754 = vmatpush2.bf16.msra.mxu0 0
        %1755 = vmatprep.subr.bf16.mxu0 %v1662
        %1756 = vmatpush2.bf16.msra.mxu0 %v1661
        %1757 = vmatprep.mubr.bf16.mxu0 %v1723
        %1758 = vmatmul.mubr.bf16.gmra.mxu0 %v1448
        %v1759 = vpop.f32.mrf.mxu0
        %v1760 = vadd.f32 0.0, %v1759
        %v1761 = vpop.f32.mrf.mxu0
        %v1762 = vadd.f32 0.0, %v1761
        %v1763 = vpop.f32.mrf.mxu0
        %v1764 = vpop.f32.mrf.mxu0
        %1765 = vdwg.mxu0
        %1766 = vmatprep.subr.bf16.mxu0 %v1658
        %1767 = vmatpush1.bf16.msra.mxu0 %v1657
        %1768 = vmatprep.subr.bf16.mxu0 %v1652
        %1769 = vmatpush1.bf16.msra.mxu0 %v1651
        %1770 = vmatprep.subr.bf16.mxu0 %v1646
        %1771 = vmatpush1.bf16.msra.mxu0 %v1645
        %1772 = vmatprep.subr.bf16.mxu0 %v1640
        %1773 = vmatpush1.bf16.msra.mxu0 %v1639
        %1774 = vmatprep.subr.bf16.mxu0 %v1634
        %1775 = vmatpush1.bf16.msra.mxu0 %v1633
        %1776 = vmatprep.subr.bf16.mxu0 %v1628
        %1777 = vmatpush1.bf16.msra.mxu0 %v1627
        %1778 = vmatprep.subr.bf16.mxu0 %v1622
        %1779 = vmatpush1.bf16.msra.mxu0 %v1621
        %1780 = vmatprep.subr.bf16.mxu0 %v1616
        %1781 = vmatpush1.bf16.msra.mxu0 %v1615
        %1782 = vmatprep.subr.bf16.mxu0 0
        %1783 = vmatpush2.bf16.msra.mxu0 0
        %1784 = vmatprep.subr.bf16.mxu0 0
        %1785 = vmatpush2.bf16.msra.mxu0 0
        %1786 = vmatprep.subr.bf16.mxu0 0
        %1787 = vmatpush2.bf16.msra.mxu0 0
        %1788 = vmatprep.subr.bf16.mxu0 0
        %1789 = vmatpush2.bf16.msra.mxu0 0
        %1790 = vmatprep.subr.bf16.mxu0 0
        %1791 = vmatpush2.bf16.msra.mxu0 0
        %1792 = vmatprep.subr.bf16.mxu0 0
        %1793 = vmatpush2.bf16.msra.mxu0 0
        %1794 = vmatprep.subr.bf16.mxu0 0
        %1795 = vmatpush2.bf16.msra.mxu0 0
        %1796 = vmatprep.subr.bf16.mxu0 %v1664
        %1797 = vmatpush2.bf16.msra.mxu0 %v1663
        %1798 = vmatprep.mubr.bf16.mxu0 %v1723
        %1799 = vmatmul.mubr.bf16.gmra.mxu0 %v1448
        %v1800 = vpop.f32.mrf.mxu0
        %v1801 = vadd.f32 0.0, %v1800
        %v1802 = vpop.f32.mrf.mxu0
        %v1803 = vadd.f32 0.0, %v1802
        %v1804 = vpop.f32.mrf.mxu0
        %v1805 = vpop.f32.mrf.mxu0
        %1806 = vdwg.mxu0
        %1807 = vmatprep.subr.bf16.mxu0 %v1660
        %1808 = vmatpush1.bf16.msra.mxu0 %v1659
        %1809 = vmatprep.subr.bf16.mxu0 %v1654
        %1810 = vmatpush1.bf16.msra.mxu0 %v1653
        %1811 = vmatprep.subr.bf16.mxu0 %v1648
        %1812 = vmatpush1.bf16.msra.mxu0 %v1647
        %1813 = vmatprep.subr.bf16.mxu0 %v1642
        %1814 = vmatpush1.bf16.msra.mxu0 %v1641
        %1815 = vmatprep.subr.bf16.mxu0 %v1636
        %1816 = vmatpush1.bf16.msra.mxu0 %v1635
        %1817 = vmatprep.subr.bf16.mxu0 %v1630
        %1818 = vmatpush1.bf16.msra.mxu0 %v1629
        %1819 = vmatprep.subr.bf16.mxu0 %v1624
        %1820 = vmatpush1.bf16.msra.mxu0 %v1623
        %1821 = vmatprep.subr.bf16.mxu0 %v1618
        %1822 = vmatpush1.bf16.msra.mxu0 %v1617
        %1823 = vmatprep.subr.bf16.mxu0 0
        %1824 = vmatpush2.bf16.msra.mxu0 0
        %1825 = vmatprep.subr.bf16.mxu0 0
        %1826 = vmatpush2.bf16.msra.mxu0 0
        %1827 = vmatprep.subr.bf16.mxu0 0
        %1828 = vmatpush2.bf16.msra.mxu0 0
        %1829 = vmatprep.subr.bf16.mxu0 0
        %1830 = vmatpush2.bf16.msra.mxu0 0
        %1831 = vmatprep.subr.bf16.mxu0 0
        %1832 = vmatpush2.bf16.msra.mxu0 0
        %1833 = vmatprep.subr.bf16.mxu0 0
        %1834 = vmatpush2.bf16.msra.mxu0 0
        %1835 = vmatprep.subr.bf16.mxu0 0
        %1836 = vmatpush2.bf16.msra.mxu0 0
        %1837 = vmatprep.subr.bf16.mxu0 %v1666
        %1838 = vmatpush2.bf16.msra.mxu0 %v1665
        %1839 = vmatprep.mubr.bf16.mxu0 %v1723
        %1840 = vmatmul.mubr.bf16.gmra.mxu0 %v1448
        %v1841 = vpop.f32.mrf.mxu0
        %v1842 = vadd.f32 0.0, %v1841
        %v1843 = vpop.f32.mrf.mxu0
        %v1844 = vadd.f32 0.0, %v1843
        %v1845 = vpop.f32.mrf.mxu0
        %v1846 = vpop.f32.mrf.mxu0
        %1847 = vdwg.mxu0
        %v1848 = vld [vmem:[#allocation10] sm:$0xf]
        %v1849 = vld [vmem:[#allocation2 + $0x4] sm:$0xff]
        %v1850 = vld [vmem:[#allocation2 + $0xc] sm:$0xff]
        %v1851 = vld [vmem:[#allocation2 + $0x14] sm:$0xff]
        %v1852 = vld [vmem:[#allocation2 + $0x24] sm:$0xff]
        %v1853 = vld [vmem:[#allocation2 + $0x2c] sm:$0xff]
        %v1854 = vld [vmem:[#allocation2 + $0x34] sm:$0xff]
        %v1861 = vunpack.c.l.b16 %v1849
        %v1862 = vunpack.c.h.b16 %v1849
        %v1863 = vunpack.c.l.b16 %v1850
        %v1864 = vunpack.c.h.b16 %v1850
        %v1865 = vunpack.c.l.b16 %v1851
        %v1866 = vunpack.c.h.b16 %v1851
        %v1867 = vunpack.c.l.b16 %v1852
        %v1868 = vunpack.c.h.b16 %v1852
        %v1869 = vunpack.c.l.b16 %v1853
        %v1870 = vunpack.c.h.b16 %v1853
        %v1871 = vunpack.c.l.b16 %v1854
        %v1872 = vunpack.c.h.b16 %v1854
        %v1873 = vpack.c.b16 %v1867, %v1861
        %v1874 = vpack.c.b16 %v1868, %v1862
        %v1875 = vpack.c.b16 %v1869, %v1863
        %v1876 = vpack.c.b16 %v1870, %v1864
        %v1877 = vpack.c.b16 %v1871, %v1865
        %v1878 = vpack.c.b16 %v1872, %v1866
        %v1886 = vsel %vm1721, %v1848, 0
        %1888 = vmatprep.subr.bf16.mxu0 0
        %1889 = vmatpush1.bf16.msra.mxu0 0
        %1890 = vmatprep.subr.bf16.mxu0 0
        %1891 = vmatpush1.bf16.msra.mxu0 0
        %1892 = vmatprep.subr.bf16.mxu0 0
        %1893 = vmatpush1.bf16.msra.mxu0 0
        %1894 = vmatprep.subr.bf16.mxu0 0
        %1895 = vmatpush1.bf16.msra.mxu0 0
        %1896 = vmatprep.subr.bf16.mxu0 0
        %1897 = vmatpush1.bf16.msra.mxu0 0
        %1898 = vmatprep.subr.bf16.mxu0 0
        %1899 = vmatpush1.bf16.msra.mxu0 0
        %1900 = vmatprep.subr.bf16.mxu0 0
        %1901 = vmatpush1.bf16.msra.mxu0 0
        %1902 = vmatprep.subr.bf16.mxu0 %v1874
        %1903 = vmatpush1.bf16.msra.mxu0 %v1873
        %1904 = vmatprep.subr.bf16.mxu0 0
        %1905 = vmatpush2.bf16.msra.mxu0 0
        %1906 = vmatprep.subr.bf16.mxu0 0
        %1907 = vmatpush2.bf16.msra.mxu0 0
        %1908 = vmatprep.subr.bf16.mxu0 0
        %1909 = vmatpush2.bf16.msra.mxu0 0
        %1910 = vmatprep.subr.bf16.mxu0 0
        %1911 = vmatpush2.bf16.msra.mxu0 0
        %1912 = vmatprep.subr.bf16.mxu0 0
        %1913 = vmatpush2.bf16.msra.mxu0 0
        %1914 = vmatprep.subr.bf16.mxu0 0
        %1915 = vmatpush2.bf16.msra.mxu0 0
        %1916 = vmatprep.subr.bf16.mxu0 0
        %1917 = vmatpush2.bf16.msra.mxu0 0
        %1918 = vmatprep.subr.bf16.mxu0 0
        %1919 = vmatpush2.bf16.msra.mxu0 0
        %1920 = vmatprep.mubr.bf16.mxu0 0
        %1921 = vmatmul.mubr.bf16.gmra.mxu0 %v1886
        %v1922 = vpop.f32.mrf.mxu0
        %v1923 = vadd.f32 0.0, %v1922
        %v1924 = vpop.f32.mrf.mxu0
        %v1925 = vadd.f32 0.0, %v1924
        %v1926 = vpop.f32.mrf.mxu0
        %v1927 = vpop.f32.mrf.mxu0
        %1928 = vdwg.mxu0
        %1929 = vmatprep.subr.bf16.mxu0 0
        %1930 = vmatpush1.bf16.msra.mxu0 0
        %1931 = vmatprep.subr.bf16.mxu0 0
        %1932 = vmatpush1.bf16.msra.mxu0 0
        %1933 = vmatprep.subr.bf16.mxu0 0
        %1934 = vmatpush1.bf16.msra.mxu0 0
        %1935 = vmatprep.subr.bf16.mxu0 0
        %1936 = vmatpush1.bf16.msra.mxu0 0
        %1937 = vmatprep.subr.bf16.mxu0 0
        %1938 = vmatpush1.bf16.msra.mxu0 0
        %1939 = vmatprep.subr.bf16.mxu0 0
        %1940 = vmatpush1.bf16.msra.mxu0 0
        %1941 = vmatprep.subr.bf16.mxu0 0
        %1942 = vmatpush1.bf16.msra.mxu0 0
        %1943 = vmatprep.subr.bf16.mxu0 %v1876
        %1944 = vmatpush1.bf16.msra.mxu0 %v1875
        %1945 = vmatprep.subr.bf16.mxu0 0
        %1946 = vmatpush2.bf16.msra.mxu0 0
        %1947 = vmatprep.subr.bf16.mxu0 0
        %1948 = vmatpush2.bf16.msra.mxu0 0
        %1949 = vmatprep.subr.bf16.mxu0 0
        %1950 = vmatpush2.bf16.msra.mxu0 0
        %1951 = vmatprep.subr.bf16.mxu0 0
        %1952 = vmatpush2.bf16.msra.mxu0 0
        %1953 = vmatprep.subr.bf16.mxu0 0
        %1954 = vmatpush2.bf16.msra.mxu0 0
        %1955 = vmatprep.subr.bf16.mxu0 0
        %1956 = vmatpush2.bf16.msra.mxu0 0
        %1957 = vmatprep.subr.bf16.mxu0 0
        %1958 = vmatpush2.bf16.msra.mxu0 0
        %1959 = vmatprep.subr.bf16.mxu0 0
        %1960 = vmatpush2.bf16.msra.mxu0 0
        %1961 = vmatprep.mubr.bf16.mxu0 0
        %1962 = vmatmul.mubr.bf16.gmra.mxu0 %v1886
        %v1963 = vpop.f32.mrf.mxu0
        %v1964 = vadd.f32 0.0, %v1963
        %v1965 = vpop.f32.mrf.mxu0
        %v1966 = vadd.f32 0.0, %v1965
        %v1967 = vpop.f32.mrf.mxu0
        %v1968 = vpop.f32.mrf.mxu0
        %1969 = vdwg.mxu0
        %1970 = vmatprep.subr.bf16.mxu0 0
        %1971 = vmatpush1.bf16.msra.mxu0 0
        %1972 = vmatprep.subr.bf16.mxu0 0
        %1973 = vmatpush1.bf16.msra.mxu0 0
        %1974 = vmatprep.subr.bf16.mxu0 0
        %1975 = vmatpush1.bf16.msra.mxu0 0
        %1976 = vmatprep.subr.bf16.mxu0 0
        %1977 = vmatpush1.bf16.msra.mxu0 0
        %1978 = vmatprep.subr.bf16.mxu0 0
        %1979 = vmatpush1.bf16.msra.mxu0 0
        %1980 = vmatprep.subr.bf16.mxu0 0
        %1981 = vmatpush1.bf16.msra.mxu0 0
        %1982 = vmatprep.subr.bf16.mxu0 0
        %1983 = vmatpush1.bf16.msra.mxu0 0
        %1984 = vmatprep.subr.bf16.mxu0 %v1878
        %1985 = vmatpush1.bf16.msra.mxu0 %v1877
        %1986 = vmatprep.subr.bf16.mxu0 0
        %1987 = vmatpush2.bf16.msra.mxu0 0
        %1988 = vmatprep.subr.bf16.mxu0 0
        %1989 = vmatpush2.bf16.msra.mxu0 0
        %1990 = vmatprep.subr.bf16.mxu0 0
        %1991 = vmatpush2.bf16.msra.mxu0 0
        %1992 = vmatprep.subr.bf16.mxu0 0
        %1993 = vmatpush2.bf16.msra.mxu0 0
        %1994 = vmatprep.subr.bf16.mxu0 0
        %1995 = vmatpush2.bf16.msra.mxu0 0
        %1996 = vmatprep.subr.bf16.mxu0 0
        %1997 = vmatpush2.bf16.msra.mxu0 0
        %1998 = vmatprep.subr.bf16.mxu0 0
        %1999 = vmatpush2.bf16.msra.mxu0 0
        %2000 = vmatprep.subr.bf16.mxu0 0
        %2001 = vmatpush2.bf16.msra.mxu0 0
        %2002 = vmatprep.mubr.bf16.mxu0 0
        %2003 = vmatmul.mubr.bf16.gmra.mxu0 %v1886
        %v2004 = vpop.f32.mrf.mxu0
        %v2005 = vadd.f32 0.0, %v2004
        %v2006 = vpop.f32.mrf.mxu0
        %v2007 = vadd.f32 0.0, %v2006
        %v2008 = vpop.f32.mrf.mxu0
        %v2009 = vpop.f32.mrf.mxu0
        %2010 = vdwg.mxu0
        %v2011 = vmul.f32 %v1760, %v1760
        %v2012 = vmul.f32 %v1762, %v1762
        %v2013 = vadd.f32 %v1760, %v1762
        %2014 = vadd.xlane.f32.xlu0 %v2013
        %v2015 = vpop.xlane.xlu0 %2014
        %v2016 = vadd.f32 %v2011, %v2012
        %2017 = vadd.xlane.f32.xlu0 %v2016
        %v2018 = vpop.xlane.xlu0 %2017
        %v2019 = vmul.f32 %v2015, 0.00390625
        %v2020 = vmul.f32 %v2018, 0.00390625
        %v2021 = vmul.f32 %v2019, %v2019
        %v2022 = vsub.f32 %v2020, %v2021
        %v2023 = vmax.f32 %v2022, 0.0
        %v2024 = vsub.f32 %v1760, %v2019
        %v2025 = vsub.f32 %v1762, %v2019
        %v2026 = vadd.f32 %v2023, 1e-05
        %v2027 = vrsqrt.pop %v2026
        %v2028 = vmul.f32 %v2024, %v2027
        %v2029 = vmul.f32 %v2025, %v2027
        %vm2030 = vcmp.ge.f32.partialorder %v2028, 0.0
        %vm2031 = vcmp.ge.f32.partialorder %v2029, 0.0
        %v2032 = vmul.f32 %v2028, 0.2
        %v2033 = vmul.f32 %v2029, 0.2
        %v2034 = vsel %vm2030, %v2028, %v2032
        %v2035 = vsel %vm2031, %v2029, %v2033
        %v2036 = vpack.c.bf16 %v2034, %v2034
        %v2037 = vpack.c.bf16 %v2035, %v2035
        %v2040 = vunpack.c.l.b16 %v2036
        %v2041 = vunpack.c.l.b16 %v2037
        %v2042 = vpack.c.b16 %v2041, %v2040
        %2044 = vst [vmem:[#allocation2 + $0x4] sm:$0xff] %v2042
        %v2045 = vmul.f32 %v1801, %v1801
        %v2046 = vmul.f32 %v1803, %v1803
        %v2047 = vadd.f32 %v1801, %v1803
        %2048 = vadd.xlane.f32.xlu0 %v2047
        %v2049 = vpop.xlane.xlu0 %2048
        %v2050 = vadd.f32 %v2045, %v2046
        %2051 = vadd.xlane.f32.xlu0 %v2050
        %v2052 = vpop.xlane.xlu0 %2051
        %v2053 = vmul.f32 %v2049, 0.00390625
        %v2054 = vmul.f32 %v2052, 0.00390625
        %v2055 = vmul.f32 %v2053, %v2053
        %v2056 = vsub.f32 %v2054, %v2055
        %v2057 = vmax.f32 %v2056, 0.0
        %v2058 = vsub.f32 %v1801, %v2053
        %v2059 = vsub.f32 %v1803, %v2053
        %v2060 = vadd.f32 %v2057, 1e-05
        %v2061 = vrsqrt.pop %v2060
        %v2062 = vmul.f32 %v2058, %v2061
        %v2063 = vmul.f32 %v2059, %v2061
        %vm2064 = vcmp.ge.f32.partialorder %v2062, 0.0
        %vm2065 = vcmp.ge.f32.partialorder %v2063, 0.0
        %v2066 = vmul.f32 %v2062, 0.2
        %v2067 = vmul.f32 %v2063, 0.2
        %v2068 = vsel %vm2064, %v2062, %v2066
        %v2069 = vsel %vm2065, %v2063, %v2067
        %v2070 = vpack.c.bf16 %v2068, %v2068
        %v2071 = vpack.c.bf16 %v2069, %v2069
        %v2074 = vunpack.c.l.b16 %v2070
        %v2075 = vunpack.c.l.b16 %v2071
        %v2076 = vpack.c.b16 %v2075, %v2074
        %2078 = vst [vmem:[#allocation2 + $0xc] sm:$0xff] %v2076
        %v2079 = vmul.f32 %v1842, %v1842
        %v2080 = vmul.f32 %v1844, %v1844
        %v2081 = vadd.f32 %v1842, %v1844
        %2082 = vadd.xlane.f32.xlu0 %v2081
        %v2083 = vpop.xlane.xlu0 %2082
        %v2084 = vadd.f32 %v2079, %v2080
        %2085 = vadd.xlane.f32.xlu0 %v2084
        %v2086 = vpop.xlane.xlu0 %2085
        %v2087 = vmul.f32 %v2083, 0.00390625
        %v2088 = vmul.f32 %v2086, 0.00390625
        %v2089 = vmul.f32 %v2087, %v2087
        %v2090 = vsub.f32 %v2088, %v2089
        %v2091 = vmax.f32 %v2090, 0.0
        %v2092 = vsub.f32 %v1842, %v2087
        %v2093 = vsub.f32 %v1844, %v2087
        %v2094 = vadd.f32 %v2091, 1e-05
        %v2095 = vrsqrt.pop %v2094
        %v2096 = vmul.f32 %v2092, %v2095
        %v2097 = vmul.f32 %v2093, %v2095
        %vm2098 = vcmp.ge.f32.partialorder %v2096, 0.0
        %vm2099 = vcmp.ge.f32.partialorder %v2097, 0.0
        %v2100 = vmul.f32 %v2096, 0.2
        %v2101 = vmul.f32 %v2097, 0.2
        %v2102 = vsel %vm2098, %v2096, %v2100
        %v2103 = vsel %vm2099, %v2097, %v2101
        %v2104 = vpack.c.bf16 %v2102, %v2102
        %v2105 = vpack.c.bf16 %v2103, %v2103
        %v2108 = vunpack.c.l.b16 %v2104
        %v2109 = vunpack.c.l.b16 %v2105
        %v2110 = vpack.c.b16 %v2109, %v2108
        %2112 = vst [vmem:[#allocation2 + $0x14] sm:$0xff] %v2110
        %v2113 = vld [vmem:[#allocation2] sm:$0xff]
        %v2114 = vld [vmem:[#allocation2 + $0x8] sm:$0xff]
        %v2115 = vld [vmem:[#allocation2 + $0x10] sm:$0xff]
        %v2116 = vld [vmem:[#allocation2 + $0x18] sm:$0xf]
        %v2117 = vld [vmem:[#allocation2 + $0x20] sm:$0xff]
        %v2118 = vld [vmem:[#allocation2 + $0x28] sm:$0xff]
        %v2119 = vld [vmem:[#allocation2 + $0x30] sm:$0xff]
        %v2120 = vld [vmem:[#allocation2 + $0x38] sm:$0xf]
        %vm2121 = vcmp.lt.s32.totalorder %v329, 8
        %vm2122 = vcmp.lt.s32.totalorder %v330, 8
        %v2123 = vsel %vm2121, 1, 0
        %v2124 = vsel %vm2122, 1, 0
        %vm2125 = vcmp.eq.s32.totalorder %v2123, 1
        %vm2126 = vcmp.eq.s32.totalorder %v2124, 1
        %vm2127 = vmand %vm381, %vm2125
        %vm2128 = vmand %vm382, %vm2125
        %vm2129 = vmand %vm383, %vm2125
        %vm2130 = vmand %vm384, %vm2125
        %vm2131 = vmand %vm385, %vm2125
        %vm2132 = vmand %vm386, %vm2125
        %vm2133 = vmand %vm381, %vm2126
        %vm2134 = vmand %vm382, %vm2126
        %vm2135 = vmand %vm383, %vm2126
        %vm2136 = vmand %vm384, %vm2126
        %vm2137 = vmand %vm385, %vm2126
        %vm2138 = vmand %vm386, %vm2126
        %vm2139 = vmpackc.low %vm2128, %vm2127
        %vm2140 = vmpackc.low %vm2130, %vm2129
        %vm2141 = vmpackc.low %vm2132, %vm2131
        %vm2142 = vmpackc.low %vm2134, %vm2133
        %vm2143 = vmpackc.low %vm2136, %vm2135
        %vm2144 = vmpackc.low %vm2138, %vm2137
        %v2145 = vsel %vm2139, 65537, 0
        %v2146 = vsel %vm2140, 65537, 0
        %v2147 = vsel %vm2141, 65537, 0
        %v2148 = vsel %vm2142, 65537, 0
        %v2149 = vsel %vm2143, 65537, 0
        %v2150 = vsel %vm2144, 65537, 0
        %2151 = vrot.lane.b32.xlu0 %v2145, 111
        %v2152 = vpop.permute.xlu0 %2151
        %2153 = vrot.lane.b32.xlu0 %v2146, 111
        %v2154 = vpop.permute.xlu0 %2153
        %2155 = vrot.lane.b32.xlu0 %v2147, 111
        %v2156 = vpop.permute.xlu0 %2155
        %2157 = vrot.lane.b32.xlu0 %v2148, 111
        %v2158 = vpop.permute.xlu0 %2157
        %2159 = vrot.lane.b32.xlu0 %v2149, 111
        %v2160 = vpop.permute.xlu0 %2159
        %2161 = vrot.lane.b32.xlu0 %v2150, 111
        %v2162 = vpop.permute.xlu0 %2161
        %v2163 = vrot.slane %v2152, 4
        %v2164 = vrot.slane %v2154, 4
        %v2165 = vrot.slane %v2156, 4
        %v2166 = vrot.slane %v2158, 4
        %v2167 = vrot.slane %v2160, 4
        %v2168 = vrot.slane %v2162, 4
        %v2169 = vsel %vm402, %v2163, %v2152
        %v2170 = vsel %vm404, %v2163, %v2164
        %v2171 = vsel %vm402, %v2170, %v2154
        %v2172 = vsel %vm404, %v2164, %v2165
        %v2173 = vsel %vm402, %v2172, %v2156
        %v2174 = vsel %vm402, %v2166, %v2158
        %v2175 = vsel %vm404, %v2166, %v2167
        %v2176 = vsel %vm402, %v2175, %v2160
        %v2177 = vsel %vm404, %v2167, %v2168
        %v2178 = vsel %vm402, %v2177, %v2162
        %vm2179 = vcmp.ne.s16.totalorder %v2169, 0
        %vm2180 = vcmp.ne.s16.totalorder %v2171, 0
        %vm2181 = vcmp.ne.s16.totalorder %v2173, 0
        %vm2182 = vcmp.ne.s16.totalorder %v2165, 0
        %vm2183 = vcmp.ne.s16.totalorder %v2174, 0
        %vm2184 = vcmp.ne.s16.totalorder %v2176, 0
        %vm2185 = vcmp.ne.s16.totalorder %v2178, 0
        %vm2186 = vcmp.ne.s16.totalorder %v2168, 0
        %v2187 = vsel %vm2179, %v2113, 0
        %v2188 = vsel %vm2180, %v2114, 0
        %v2189 = vsel %vm2181, %v2115, 0
        %v2190 = vsel %vm2182, %v2116, 0
        %v2191 = vsel %vm2183, %v2117, 0
        %v2192 = vsel %vm2184, %v2118, 0
        %v2193 = vsel %vm2185, %v2119, 0
        %v2194 = vsel %vm2186, %v2120, 0
        %2203 = vrot.lane.b32.xlu0 %v2187, 17
        %v2204 = vpop.permute.xlu0 %2203
        %2205 = vrot.lane.b32.xlu0 %v2188, 17
        %v2206 = vpop.permute.xlu0 %2205
        %2207 = vrot.lane.b32.xlu0 %v2189, 17
        %v2208 = vpop.permute.xlu0 %2207
        %2209 = vrot.lane.b32.xlu0 %v2190, 17
        %v2210 = vpop.permute.xlu0 %2209
        %2211 = vrot.lane.b32.xlu0 %v2191, 17
        %v2212 = vpop.permute.xlu0 %2211
        %2213 = vrot.lane.b32.xlu0 %v2192, 17
        %v2214 = vpop.permute.xlu0 %2213
        %2215 = vrot.lane.b32.xlu0 %v2193, 17
        %v2216 = vpop.permute.xlu0 %2215
        %2217 = vrot.lane.b32.xlu0 %v2194, 17
        %v2218 = vpop.permute.xlu0 %2217
        %v2219 = vrot.slane %v2204, 4
        %v2220 = vrot.slane %v2206, 4
        %v2221 = vrot.slane %v2208, 4
        %v2222 = vrot.slane %v2210, 4
        %v2223 = vrot.slane %v2212, 4
        %v2224 = vrot.slane %v2214, 4
        %v2225 = vrot.slane %v2216, 4
        %v2226 = vrot.slane %v2218, 4
        %v2227 = vsel %vm404, %v2219, %v2220
        %v2228 = vsel %vm454, %v2204, %v2227
        %v2229 = vsel %vm404, %v2220, %v2221
        %v2230 = vsel %vm454, %v2206, %v2229
        %v2231 = vsel %vm404, %v2221, %v2222
        %v2232 = vsel %vm454, %v2208, %v2231
        %v2233 = vsel %vm404, %v2223, %v2224
        %v2234 = vsel %vm454, %v2212, %v2233
        %v2235 = vsel %vm404, %v2224, %v2225
        %v2236 = vsel %vm454, %v2214, %v2235
        %v2237 = vsel %vm404, %v2225, %v2226
        %v2238 = vsel %vm454, %v2216, %v2237
        %2245 = vst [vmem:[#allocation3] sm:$0xff] %v2228
        %2246 = vst [vmem:[#allocation3 + $0x8] sm:$0xff] %v2230
        %2247 = vst [vmem:[#allocation3 + $0x10] sm:$0xff] %v2232
        %2248 = vst [vmem:[#allocation3 + $0x18] sm:$0xff] %v2234
        %2249 = vst [vmem:[#allocation3 + $0x20] sm:$0xff] %v2236
        %2250 = vst [vmem:[#allocation3 + $0x28] sm:$0xff] %v2238
        %v2251 = vld [vmem:[#allocation2] sm:$0xff]
        %v2252 = vld [vmem:[#allocation2 + $0x8] sm:$0xff]
        %v2253 = vld [vmem:[#allocation2 + $0x10] sm:$0xff]
        %v2254 = vld [vmem:[#allocation2 + $0x18] sm:$0xf]
        %v2255 = vld [vmem:[#allocation2 + $0x20] sm:$0xff]
        %v2256 = vld [vmem:[#allocation2 + $0x28] sm:$0xff]
        %v2257 = vld [vmem:[#allocation2 + $0x30] sm:$0xff]
        %v2258 = vld [vmem:[#allocation2 + $0x38] sm:$0xf]
        %vm2259 = vmand %vm511, %vm2125
        %vm2260 = vmand %vm512, %vm2125
        %vm2261 = vmand %vm513, %vm2125
        %vm2262 = vmand %vm514, %vm2125
        %vm2263 = vmand %vm515, %vm2125
        %vm2264 = vmand %vm516, %vm2125
        %vm2265 = vmand %vm511, %vm2126
        %vm2266 = vmand %vm512, %vm2126
        %vm2267 = vmand %vm513, %vm2126
        %vm2268 = vmand %vm514, %vm2126
        %vm2269 = vmand %vm515, %vm2126
        %vm2270 = vmand %vm516, %vm2126
        %vm2271 = vmpackc.low %vm2260, %vm2259
        %vm2272 = vmpackc.low %vm2262, %vm2261
        %vm2273 = vmpackc.low %vm2264, %vm2263
        %vm2274 = vmpackc.low %vm2266, %vm2265
        %vm2275 = vmpackc.low %vm2268, %vm2267
        %vm2276 = vmpackc.low %vm2270, %vm2269
        %v2277 = vsel %vm2271, 65537, 0
        %v2278 = vsel %vm2272, 65537, 0
        %v2279 = vsel %vm2273, 65537, 0
        %v2280 = vsel %vm2274, 65537, 0
        %v2281 = vsel %vm2275, 65537, 0
        %v2282 = vsel %vm2276, 65537, 0
        %2283 = vrot.lane.b32.xlu0 %v2277, 112
        %v2284 = vpop.permute.xlu0 %2283
        %2285 = vrot.lane.b32.xlu0 %v2278, 112
        %v2286 = vpop.permute.xlu0 %2285
        %2287 = vrot.lane.b32.xlu0 %v2279, 112
        %v2288 = vpop.permute.xlu0 %2287
        %2289 = vrot.lane.b32.xlu0 %v2280, 112
        %v2290 = vpop.permute.xlu0 %2289
        %2291 = vrot.lane.b32.xlu0 %v2281, 112
        %v2292 = vpop.permute.xlu0 %2291
        %2293 = vrot.lane.b32.xlu0 %v2282, 112
        %v2294 = vpop.permute.xlu0 %2293
        %v2295 = vrot.slane %v2284, 4
        %v2296 = vrot.slane %v2286, 4
        %v2297 = vrot.slane %v2288, 4
        %v2298 = vrot.slane %v2290, 4
        %v2299 = vrot.slane %v2292, 4
        %v2300 = vrot.slane %v2294, 4
        %v2301 = vsel %vm532, %v2295, %v2284
        %v2302 = vsel %vm404, %v2295, %v2296
        %v2303 = vsel %vm532, %v2302, %v2286
        %v2304 = vsel %vm404, %v2296, %v2297
        %v2305 = vsel %vm532, %v2304, %v2288
        %v2306 = vsel %vm532, %v2298, %v2290
        %v2307 = vsel %vm404, %v2298, %v2299
        %v2308 = vsel %vm532, %v2307, %v2292
        %v2309 = vsel %vm404, %v2299, %v2300
        %v2310 = vsel %vm532, %v2309, %v2294
        %vm2311 = vcmp.ne.s16.totalorder %v2301, 0
        %vm2312 = vcmp.ne.s16.totalorder %v2303, 0
        %vm2313 = vcmp.ne.s16.totalorder %v2305, 0
        %vm2314 = vcmp.ne.s16.totalorder %v2297, 0
        %vm2315 = vcmp.ne.s16.totalorder %v2306, 0
        %vm2316 = vcmp.ne.s16.totalorder %v2308, 0
        %vm2317 = vcmp.ne.s16.totalorder %v2310, 0
        %vm2318 = vcmp.ne.s16.totalorder %v2300, 0
        %v2319 = vsel %vm2311, %v2251, 0
        %v2320 = vsel %vm2312, %v2252, 0
        %v2321 = vsel %vm2313, %v2253, 0
        %v2322 = vsel %vm2314, %v2254, 0
        %v2323 = vsel %vm2315, %v2255, 0
        %v2324 = vsel %vm2316, %v2256, 0
        %v2325 = vsel %vm2317, %v2257, 0
        %v2326 = vsel %vm2318, %v2258, 0
        %2335 = vrot.lane.b32.xlu0 %v2319, 16
        %v2336 = vpop.permute.xlu0 %2335
        %2337 = vrot.lane.b32.xlu0 %v2320, 16
        %v2338 = vpop.permute.xlu0 %2337
        %2339 = vrot.lane.b32.xlu0 %v2321, 16
        %v2340 = vpop.permute.xlu0 %2339
        %2341 = vrot.lane.b32.xlu0 %v2322, 16
        %v2342 = vpop.permute.xlu0 %2341
        %2343 = vrot.lane.b32.xlu0 %v2323, 16
        %v2344 = vpop.permute.xlu0 %2343
        %2345 = vrot.lane.b32.xlu0 %v2324, 16
        %v2346 = vpop.permute.xlu0 %2345
        %2347 = vrot.lane.b32.xlu0 %v2325, 16
        %v2348 = vpop.permute.xlu0 %2347
        %2349 = vrot.lane.b32.xlu0 %v2326, 16
        %v2350 = vpop.permute.xlu0 %2349
        %v2351 = vrot.slane %v2336, 4
        %v2352 = vrot.slane %v2338, 4
        %v2353 = vrot.slane %v2340, 4
        %v2354 = vrot.slane %v2342, 4
        %v2355 = vrot.slane %v2344, 4
        %v2356 = vrot.slane %v2346, 4
        %v2357 = vrot.slane %v2348, 4
        %v2358 = vrot.slane %v2350, 4
        %v2359 = vsel %vm404, %v2351, %v2352
        %v2360 = vsel %vm583, %v2336, %v2359
        %v2361 = vsel %vm404, %v2352, %v2353
        %v2362 = vsel %vm583, %v2338, %v2361
        %v2363 = vsel %vm404, %v2353, %v2354
        %v2364 = vsel %vm583, %v2340, %v2363
        %v2365 = vsel %vm404, %v2355, %v2356
        %v2366 = vsel %vm583, %v2344, %v2365
        %v2367 = vsel %vm404, %v2356, %v2357
        %v2368 = vsel %vm583, %v2346, %v2367
        %v2369 = vsel %vm404, %v2357, %v2358
        %v2370 = vsel %vm583, %v2348, %v2369
        %2377 = vst [vmem:[#allocation3 + $0x30] sm:$0xff] %v2360
        %2378 = vst [vmem:[#allocation3 + $0x38] sm:$0xff] %v2362
        %2379 = vst [vmem:[#allocation3 + $0x40] sm:$0xff] %v2364
        %2380 = vst [vmem:[#allocation3 + $0x48] sm:$0xff] %v2366
        %2381 = vst [vmem:[#allocation3 + $0x50] sm:$0xff] %v2368
        %2382 = vst [vmem:[#allocation3 + $0x58] sm:$0xff] %v2370
        %v2383 = vld [vmem:[#allocation2] sm:$0xff]
        %v2384 = vld [vmem:[#allocation2 + $0x8] sm:$0xff]
        %v2385 = vld [vmem:[#allocation2 + $0x10] sm:$0xff]
        %v2386 = vld [vmem:[#allocation2 + $0x18] sm:$0xf]
        %v2387 = vld [vmem:[#allocation2 + $0x20] sm:$0xff]
        %v2388 = vld [vmem:[#allocation2 + $0x28] sm:$0xff]
        %v2389 = vld [vmem:[#allocation2 + $0x30] sm:$0xff]
        %v2390 = vld [vmem:[#allocation2 + $0x38] sm:$0xf]
        %vm2391 = vmand %vm642, %vm2125
        %vm2392 = vmand %vm643, %vm2125
        %vm2393 = vmand %vm644, %vm2125
        %vm2394 = vmand %vm645, %vm2125
        %vm2395 = vmand %vm646, %vm2125
        %vm2396 = vmand %vm647, %vm2125
        %vm2397 = vmand %vm642, %vm2126
        %vm2398 = vmand %vm643, %vm2126
        %vm2399 = vmand %vm644, %vm2126
        %vm2400 = vmand %vm645, %vm2126
        %vm2401 = vmand %vm646, %vm2126
        %vm2402 = vmand %vm647, %vm2126
        %vm2403 = vmpackc.low %vm2392, %vm2391
        %vm2404 = vmpackc.low %vm2394, %vm2393
        %vm2405 = vmpackc.low %vm2396, %vm2395
        %vm2406 = vmpackc.low %vm2398, %vm2397
        %vm2407 = vmpackc.low %vm2400, %vm2399
        %vm2408 = vmpackc.low %vm2402, %vm2401
        %v2409 = vsel %vm2403, 65537, 0
        %v2410 = vsel %vm2404, 65537, 0
        %v2411 = vsel %vm2405, 65537, 0
        %v2412 = vsel %vm2406, 65537, 0
        %v2413 = vsel %vm2407, 65537, 0
        %v2414 = vsel %vm2408, 65537, 0
        %2415 = vrot.lane.b32.xlu0 %v2409, 113
        %v2416 = vpop.permute.xlu0 %2415
        %2417 = vrot.lane.b32.xlu0 %v2410, 113
        %v2418 = vpop.permute.xlu0 %2417
        %2419 = vrot.lane.b32.xlu0 %v2411, 113
        %v2420 = vpop.permute.xlu0 %2419
        %2421 = vrot.lane.b32.xlu0 %v2412, 113
        %v2422 = vpop.permute.xlu0 %2421
        %2423 = vrot.lane.b32.xlu0 %v2413, 113
        %v2424 = vpop.permute.xlu0 %2423
        %2425 = vrot.lane.b32.xlu0 %v2414, 113
        %v2426 = vpop.permute.xlu0 %2425
        %v2427 = vrot.slane %v2416, 4
        %v2428 = vrot.slane %v2418, 4
        %v2429 = vrot.slane %v2420, 4
        %v2430 = vrot.slane %v2422, 4
        %v2431 = vrot.slane %v2424, 4
        %v2432 = vrot.slane %v2426, 4
        %v2433 = vsel %vm663, %v2427, %v2416
        %v2434 = vsel %vm404, %v2427, %v2428
        %v2435 = vsel %vm663, %v2434, %v2418
        %v2436 = vsel %vm404, %v2428, %v2429
        %v2437 = vsel %vm663, %v2436, %v2420
        %v2438 = vsel %vm663, %v2430, %v2422
        %v2439 = vsel %vm404, %v2430, %v2431
        %v2440 = vsel %vm663, %v2439, %v2424
        %v2441 = vsel %vm404, %v2431, %v2432
        %v2442 = vsel %vm663, %v2441, %v2426
        %vm2443 = vcmp.ne.s16.totalorder %v2433, 0
        %vm2444 = vcmp.ne.s16.totalorder %v2435, 0
        %vm2445 = vcmp.ne.s16.totalorder %v2437, 0
        %vm2446 = vcmp.ne.s16.totalorder %v2429, 0
        %vm2447 = vcmp.ne.s16.totalorder %v2438, 0
        %vm2448 = vcmp.ne.s16.totalorder %v2440, 0
        %vm2449 = vcmp.ne.s16.totalorder %v2442, 0
        %vm2450 = vcmp.ne.s16.totalorder %v2432, 0
        %v2451 = vsel %vm2443, %v2383, 0
        %v2452 = vsel %vm2444, %v2384, 0
        %v2453 = vsel %vm2445, %v2385, 0
        %v2454 = vsel %vm2446, %v2386, 0
        %v2455 = vsel %vm2447, %v2387, 0
        %v2456 = vsel %vm2448, %v2388, 0
        %v2457 = vsel %vm2449, %v2389, 0
        %v2458 = vsel %vm2450, %v2390, 0
        %2467 = vrot.lane.b32.xlu0 %v2451, 15
        %v2468 = vpop.permute.xlu0 %2467
        %2469 = vrot.lane.b32.xlu0 %v2452, 15
        %v2470 = vpop.permute.xlu0 %2469
        %2471 = vrot.lane.b32.xlu0 %v2453, 15
        %v2472 = vpop.permute.xlu0 %2471
        %2473 = vrot.lane.b32.xlu0 %v2454, 15
        %v2474 = vpop.permute.xlu0 %2473
        %2475 = vrot.lane.b32.xlu0 %v2455, 15
        %v2476 = vpop.permute.xlu0 %2475
        %2477 = vrot.lane.b32.xlu0 %v2456, 15
        %v2478 = vpop.permute.xlu0 %2477
        %2479 = vrot.lane.b32.xlu0 %v2457, 15
        %v2480 = vpop.permute.xlu0 %2479
        %2481 = vrot.lane.b32.xlu0 %v2458, 15
        %v2482 = vpop.permute.xlu0 %2481
        %v2483 = vrot.slane %v2468, 4
        %v2484 = vrot.slane %v2470, 4
        %v2485 = vrot.slane %v2472, 4
        %v2486 = vrot.slane %v2474, 4
        %v2487 = vrot.slane %v2476, 4
        %v2488 = vrot.slane %v2478, 4
        %v2489 = vrot.slane %v2480, 4
        %v2490 = vrot.slane %v2482, 4
        %v2491 = vsel %vm404, %v2483, %v2484
        %v2492 = vsel %vm714, %v2468, %v2491
        %v2493 = vsel %vm404, %v2484, %v2485
        %v2494 = vsel %vm714, %v2470, %v2493
        %v2495 = vsel %vm404, %v2485, %v2486
        %v2496 = vsel %vm714, %v2472, %v2495
        %v2497 = vsel %vm404, %v2487, %v2488
        %v2498 = vsel %vm714, %v2476, %v2497
        %v2499 = vsel %vm404, %v2488, %v2489
        %v2500 = vsel %vm714, %v2478, %v2499
        %v2501 = vsel %vm404, %v2489, %v2490
        %v2502 = vsel %vm714, %v2480, %v2501
        %2509 = vst [vmem:[#allocation3 + $0x60] sm:$0xff] %v2492
        %2510 = vst [vmem:[#allocation3 + $0x68] sm:$0xff] %v2494
        %2511 = vst [vmem:[#allocation3 + $0x70] sm:$0xff] %v2496
        %2512 = vst [vmem:[#allocation3 + $0x78] sm:$0xff] %v2498
        %2513 = vst [vmem:[#allocation3 + $0x80] sm:$0xff] %v2500
        %2514 = vst [vmem:[#allocation3 + $0x88] sm:$0xff] %v2502
        %v2515 = vld [vmem:[#allocation2] sm:$0xff]
        %v2516 = vld [vmem:[#allocation2 + $0x8] sm:$0xff]
        %v2517 = vld [vmem:[#allocation2 + $0x10] sm:$0xff]
        %v2518 = vld [vmem:[#allocation2 + $0x18] sm:$0xf]
        %v2519 = vld [vmem:[#allocation2 + $0x20] sm:$0xff]
        %v2520 = vld [vmem:[#allocation2 + $0x28] sm:$0xff]
        %v2521 = vld [vmem:[#allocation2 + $0x30] sm:$0xff]
        %v2522 = vld [vmem:[#allocation2 + $0x38] sm:$0xf]
        %vm2523 = vmand %vm771, %vm2125
        %vm2524 = vmand %vm772, %vm2125
        %vm2525 = vmand %vm773, %vm2125
        %vm2526 = vmand %vm774, %vm2125
        %vm2527 = vmand %vm775, %vm2125
        %vm2528 = vmand %vm776, %vm2125
        %vm2529 = vmand %vm771, %vm2126
        %vm2530 = vmand %vm772, %vm2126
        %vm2531 = vmand %vm773, %vm2126
        %vm2532 = vmand %vm774, %vm2126
        %vm2533 = vmand %vm775, %vm2126
        %vm2534 = vmand %vm776, %vm2126
        %vm2535 = vmpackc.low %vm2524, %vm2523
        %vm2536 = vmpackc.low %vm2526, %vm2525
        %vm2537 = vmpackc.low %vm2528, %vm2527
        %vm2538 = vmpackc.low %vm2530, %vm2529
        %vm2539 = vmpackc.low %vm2532, %vm2531
        %vm2540 = vmpackc.low %vm2534, %vm2533
        %v2541 = vsel %vm2535, 65537, 0
        %v2542 = vsel %vm2536, 65537, 0
        %v2543 = vsel %vm2537, 65537, 0
        %v2544 = vsel %vm2538, 65537, 0
        %v2545 = vsel %vm2539, 65537, 0
        %v2546 = vsel %vm2540, 65537, 0
        %2547 = vrot.lane.b32.xlu0 %v2541, 127
        %v2548 = vpop.permute.xlu0 %2547
        %2549 = vrot.lane.b32.xlu0 %v2542, 127
        %v2550 = vpop.permute.xlu0 %2549
        %2551 = vrot.lane.b32.xlu0 %v2543, 127
        %v2552 = vpop.permute.xlu0 %2551
        %2553 = vrot.lane.b32.xlu0 %v2544, 127
        %v2554 = vpop.permute.xlu0 %2553
        %2555 = vrot.lane.b32.xlu0 %v2545, 127
        %v2556 = vpop.permute.xlu0 %2555
        %2557 = vrot.lane.b32.xlu0 %v2546, 127
        %v2558 = vpop.permute.xlu0 %2557
        %v2559 = vrot.slane %v2548, 4
        %v2560 = vrot.slane %v2550, 4
        %v2561 = vrot.slane %v2552, 4
        %v2562 = vrot.slane %v2554, 4
        %v2563 = vrot.slane %v2556, 4
        %v2564 = vrot.slane %v2558, 4
        %v2565 = vsel %vm792, %v2559, %v2548
        %v2566 = vsel %vm404, %v2559, %v2560
        %v2567 = vsel %vm792, %v2566, %v2550
        %v2568 = vsel %vm404, %v2560, %v2561
        %v2569 = vsel %vm792, %v2568, %v2552
        %v2570 = vsel %vm792, %v2562, %v2554
        %v2571 = vsel %vm404, %v2562, %v2563
        %v2572 = vsel %vm792, %v2571, %v2556
        %v2573 = vsel %vm404, %v2563, %v2564
        %v2574 = vsel %vm792, %v2573, %v2558
        %vm2575 = vcmp.ne.s16.totalorder %v2565, 0
        %vm2576 = vcmp.ne.s16.totalorder %v2567, 0
        %vm2577 = vcmp.ne.s16.totalorder %v2569, 0
        %vm2578 = vcmp.ne.s16.totalorder %v2561, 0
        %vm2579 = vcmp.ne.s16.totalorder %v2570, 0
        %vm2580 = vcmp.ne.s16.totalorder %v2572, 0
        %vm2581 = vcmp.ne.s16.totalorder %v2574, 0
        %vm2582 = vcmp.ne.s16.totalorder %v2564, 0
        %v2583 = vsel %vm2575, %v2515, 0
        %v2584 = vsel %vm2576, %v2516, 0
        %v2585 = vsel %vm2577, %v2517, 0
        %v2586 = vsel %vm2578, %v2518, 0
        %v2587 = vsel %vm2579, %v2519, 0
        %v2588 = vsel %vm2580, %v2520, 0
        %v2589 = vsel %vm2581, %v2521, 0
        %v2590 = vsel %vm2582, %v2522, 0
        %2599 = vrot.lane.b32.xlu0 %v2583, 1
        %v2600 = vpop.permute.xlu0 %2599
        %2601 = vrot.lane.b32.xlu0 %v2584, 1
        %v2602 = vpop.permute.xlu0 %2601
        %2603 = vrot.lane.b32.xlu0 %v2585, 1
        %v2604 = vpop.permute.xlu0 %2603
        %2605 = vrot.lane.b32.xlu0 %v2586, 1
        %v2606 = vpop.permute.xlu0 %2605
        %2607 = vrot.lane.b32.xlu0 %v2587, 1
        %v2608 = vpop.permute.xlu0 %2607
        %2609 = vrot.lane.b32.xlu0 %v2588, 1
        %v2610 = vpop.permute.xlu0 %2609
        %2611 = vrot.lane.b32.xlu0 %v2589, 1
        %v2612 = vpop.permute.xlu0 %2611
        %2613 = vrot.lane.b32.xlu0 %v2590, 1
        %v2614 = vpop.permute.xlu0 %2613
        %v2615 = vrot.slane %v2600, 4
        %v2616 = vrot.slane %v2602, 4
        %v2617 = vrot.slane %v2604, 4
        %v2618 = vrot.slane %v2606, 4
        %v2619 = vrot.slane %v2608, 4
        %v2620 = vrot.slane %v2610, 4
        %v2621 = vrot.slane %v2612, 4
        %v2622 = vrot.slane %v2614, 4
        %v2623 = vsel %vm404, %v2615, %v2616
        %v2624 = vsel %vm843, %v2600, %v2623
        %v2625 = vsel %vm404, %v2616, %v2617
        %v2626 = vsel %vm843, %v2602, %v2625
        %v2627 = vsel %vm404, %v2617, %v2618
        %v2628 = vsel %vm843, %v2604, %v2627
        %v2629 = vsel %vm404, %v2619, %v2620
        %v2630 = vsel %vm843, %v2608, %v2629
        %v2631 = vsel %vm404, %v2620, %v2621
        %v2632 = vsel %vm843, %v2610, %v2631
        %v2633 = vsel %vm404, %v2621, %v2622
        %v2634 = vsel %vm843, %v2612, %v2633
        %2641 = vst [vmem:[#allocation3 + $0x90] sm:$0xff] %v2624
        %2642 = vst [vmem:[#allocation3 + $0x98] sm:$0xff] %v2626
        %2643 = vst [vmem:[#allocation3 + $0xa0] sm:$0xff] %v2628
        %2644 = vst [vmem:[#allocation3 + $0xa8] sm:$0xff] %v2630
        %2645 = vst [vmem:[#allocation3 + $0xb0] sm:$0xff] %v2632
        %2646 = vst [vmem:[#allocation3 + $0xb8] sm:$0xff] %v2634
        %v2647 = vld [vmem:[#allocation2 + $0x4] sm:$0xff]
        %v2648 = vld [vmem:[#allocation2 + $0xc] sm:$0xff]
        %v2649 = vld [vmem:[#allocation2 + $0x14] sm:$0xff]
        %v2650 = vld [vmem:[#allocation2 + $0x24] sm:$0xff]
        %v2651 = vld [vmem:[#allocation2 + $0x2c] sm:$0xff]
        %v2652 = vld [vmem:[#allocation2 + $0x34] sm:$0xff]
        %vm2653 = vmpackc.low %vm2125, %vm2125
        %vm2654 = vmpackc.low %vm2126, %vm2126
        %v2655 = vsel %vm2653, %v2647, 0
        %v2656 = vsel %vm2653, %v2648, 0
        %v2657 = vsel %vm2653, %v2649, 0
        %v2658 = vsel %vm2654, %v2650, 0
        %v2659 = vsel %vm2654, %v2651, 0
        %v2660 = vsel %vm2654, %v2652, 0
        %2661 = vst [vmem:[#allocation3 + $0xc0] sm:$0xff] %v2655
        %2662 = vst [vmem:[#allocation3 + $0xc8] sm:$0xff] %v2656
        %2663 = vst [vmem:[#allocation3 + $0xd0] sm:$0xff] %v2657
        %2664 = vst [vmem:[#allocation3 + $0xd8] sm:$0xff] %v2658
        %2665 = vst [vmem:[#allocation3 + $0xe0] sm:$0xff] %v2659
        %2666 = vst [vmem:[#allocation3 + $0xe8] sm:$0xff] %v2660
        %v2667 = vld [vmem:[#allocation2 + $0x4] sm:$0xff]
        %v2668 = vld [vmem:[#allocation2 + $0xc] sm:$0xff]
        %v2669 = vld [vmem:[#allocation2 + $0x14] sm:$0xff]
        %v2670 = vld [vmem:[#allocation2 + $0x1c] sm:$0xf]
        %v2671 = vld [vmem:[#allocation2 + $0x24] sm:$0xff]
        %v2672 = vld [vmem:[#allocation2 + $0x2c] sm:$0xff]
        %v2673 = vld [vmem:[#allocation2 + $0x34] sm:$0xff]
        %v2674 = vld [vmem:[#allocation2 + $0x3c] sm:$0xf]
        %vm2675 = vmand %vm912, %vm2125
        %vm2676 = vmand %vm913, %vm2125
        %vm2677 = vmand %vm914, %vm2125
        %vm2678 = vmand %vm915, %vm2125
        %vm2679 = vmand %vm916, %vm2125
        %vm2680 = vmand %vm917, %vm2125
        %vm2681 = vmand %vm912, %vm2126
        %vm2682 = vmand %vm913, %vm2126
        %vm2683 = vmand %vm914, %vm2126
        %vm2684 = vmand %vm915, %vm2126
        %vm2685 = vmand %vm916, %vm2126
        %vm2686 = vmand %vm917, %vm2126
        %vm2687 = vmpackc.low %vm2676, %vm2675
        %vm2688 = vmpackc.low %vm2678, %vm2677
        %vm2689 = vmpackc.low %vm2680, %vm2679
        %vm2690 = vmpackc.low %vm2682, %vm2681
        %vm2691 = vmpackc.low %vm2684, %vm2683
        %vm2692 = vmpackc.low %vm2686, %vm2685
        %v2693 = vsel %vm2687, 65537, 0
        %v2694 = vsel %vm2688, 65537, 0
        %v2695 = vsel %vm2689, 65537, 0
        %v2696 = vsel %vm2690, 65537, 0
        %v2697 = vsel %vm2691, 65537, 0
        %v2698 = vsel %vm2692, 65537, 0
        %2699 = vrot.lane.b32.xlu0 %v2693, 1
        %v2700 = vpop.permute.xlu0 %2699
        %2701 = vrot.lane.b32.xlu0 %v2694, 1
        %v2702 = vpop.permute.xlu0 %2701
        %2703 = vrot.lane.b32.xlu0 %v2695, 1
        %v2704 = vpop.permute.xlu0 %2703
        %2705 = vrot.lane.b32.xlu0 %v2696, 1
        %v2706 = vpop.permute.xlu0 %2705
        %2707 = vrot.lane.b32.xlu0 %v2697, 1
        %v2708 = vpop.permute.xlu0 %2707
        %2709 = vrot.lane.b32.xlu0 %v2698, 1
        %v2710 = vpop.permute.xlu0 %2709
        %v2711 = vrot.slane %v2700, 4
        %v2712 = vrot.slane %v2702, 4
        %v2713 = vrot.slane %v2704, 4
        %v2714 = vrot.slane %v2706, 4
        %v2715 = vrot.slane %v2708, 4
        %v2716 = vrot.slane %v2710, 4
        %v2717 = vsel %vm843, %v2711, %v2700
        %v2718 = vsel %vm404, %v2711, %v2712
        %v2719 = vsel %vm843, %v2718, %v2702
        %v2720 = vsel %vm404, %v2712, %v2713
        %v2721 = vsel %vm843, %v2720, %v2704
        %v2722 = vsel %vm843, %v2714, %v2706
        %v2723 = vsel %vm404, %v2714, %v2715
        %v2724 = vsel %vm843, %v2723, %v2708
        %v2725 = vsel %vm404, %v2715, %v2716
        %v2726 = vsel %vm843, %v2725, %v2710
        %vm2727 = vcmp.ne.s16.totalorder %v2717, 0
        %vm2728 = vcmp.ne.s16.totalorder %v2719, 0
        %vm2729 = vcmp.ne.s16.totalorder %v2721, 0
        %vm2730 = vcmp.ne.s16.totalorder %v2713, 0
        %vm2731 = vcmp.ne.s16.totalorder %v2722, 0
        %vm2732 = vcmp.ne.s16.totalorder %v2724, 0
        %vm2733 = vcmp.ne.s16.totalorder %v2726, 0
        %vm2734 = vcmp.ne.s16.totalorder %v2716, 0
        %v2735 = vsel %vm2727, %v2667, 0
        %v2736 = vsel %vm2728, %v2668, 0
        %v2737 = vsel %vm2729, %v2669, 0
        %v2738 = vsel %vm2730, %v2670, 0
        %v2739 = vsel %vm2731, %v2671, 0
        %v2740 = vsel %vm2732, %v2672, 0
        %v2741 = vsel %vm2733, %v2673, 0
        %v2742 = vsel %vm2734, %v2674, 0
        %2751 = vrot.lane.b32.xlu0 %v2735, 127
        %v2752 = vpop.permute.xlu0 %2751
        %2753 = vrot.lane.b32.xlu0 %v2736, 127
        %v2754 = vpop.permute.xlu0 %2753
        %2755 = vrot.lane.b32.xlu0 %v2737, 127
        %v2756 = vpop.permute.xlu0 %2755
        %2757 = vrot.lane.b32.xlu0 %v2738, 127
        %v2758 = vpop.permute.xlu0 %2757
        %2759 = vrot.lane.b32.xlu0 %v2739, 127
        %v2760 = vpop.permute.xlu0 %2759
        %2761 = vrot.lane.b32.xlu0 %v2740, 127
        %v2762 = vpop.permute.xlu0 %2761
        %2763 = vrot.lane.b32.xlu0 %v2741, 127
        %v2764 = vpop.permute.xlu0 %2763
        %2765 = vrot.lane.b32.xlu0 %v2742, 127
        %v2766 = vpop.permute.xlu0 %2765
        %v2767 = vrot.slane %v2752, 4
        %v2768 = vrot.slane %v2754, 4
        %v2769 = vrot.slane %v2756, 4
        %v2770 = vrot.slane %v2758, 4
        %v2771 = vrot.slane %v2760, 4
        %v2772 = vrot.slane %v2762, 4
        %v2773 = vrot.slane %v2764, 4
        %v2774 = vrot.slane %v2766, 4
        %v2775 = vsel %vm404, %v2767, %v2768
        %v2776 = vsel %vm792, %v2752, %v2775
        %v2777 = vsel %vm404, %v2768, %v2769
        %v2778 = vsel %vm792, %v2754, %v2777
        %v2779 = vsel %vm404, %v2769, %v2770
        %v2780 = vsel %vm792, %v2756, %v2779
        %v2781 = vsel %vm404, %v2771, %v2772
        %v2782 = vsel %vm792, %v2760, %v2781
        %v2783 = vsel %vm404, %v2772, %v2773
        %v2784 = vsel %vm792, %v2762, %v2783
        %v2785 = vsel %vm404, %v2773, %v2774
        %v2786 = vsel %vm792, %v2764, %v2785
        %2793 = vst [vmem:[#allocation3 + $0xf0] sm:$0xff] %v2776
        %2794 = vst [vmem:[#allocation3 + $0xf8] sm:$0xff] %v2778
        %2795 = vst [vmem:[#allocation3 + $0x100] sm:$0xff] %v2780
        %2796 = vst [vmem:[#allocation3 + $0x108] sm:$0xff] %v2782
        %2797 = vst [vmem:[#allocation3 + $0x110] sm:$0xff] %v2784
        %2798 = vst [vmem:[#allocation3 + $0x118] sm:$0xff] %v2786
        %v2799 = vld [vmem:[#allocation2 + $0x4] sm:$0xff]
        %v2800 = vld [vmem:[#allocation2 + $0xc] sm:$0xff]
        %v2801 = vld [vmem:[#allocation2 + $0x14] sm:$0xff]
        %v2802 = vld [vmem:[#allocation2 + $0x1c] sm:$0xf]
        %v2803 = vld [vmem:[#allocation2 + $0x24] sm:$0xff]
        %v2804 = vld [vmem:[#allocation2 + $0x2c] sm:$0xff]
        %v2805 = vld [vmem:[#allocation2 + $0x34] sm:$0xff]
        %v2806 = vld [vmem:[#allocation2 + $0x3c] sm:$0xf]
        %vm2807 = vmand %vm1041, %vm2125
        %vm2808 = vmand %vm1042, %vm2125
        %vm2809 = vmand %vm1043, %vm2125
        %vm2810 = vmand %vm1044, %vm2125
        %vm2811 = vmand %vm1045, %vm2125
        %vm2812 = vmand %vm1046, %vm2125
        %vm2813 = vmand %vm1041, %vm2126
        %vm2814 = vmand %vm1042, %vm2126
        %vm2815 = vmand %vm1043, %vm2126
        %vm2816 = vmand %vm1044, %vm2126
        %vm2817 = vmand %vm1045, %vm2126
        %vm2818 = vmand %vm1046, %vm2126
        %vm2819 = vmpackc.low %vm2808, %vm2807
        %vm2820 = vmpackc.low %vm2810, %vm2809
        %vm2821 = vmpackc.low %vm2812, %vm2811
        %vm2822 = vmpackc.low %vm2814, %vm2813
        %vm2823 = vmpackc.low %vm2816, %vm2815
        %vm2824 = vmpackc.low %vm2818, %vm2817
        %v2825 = vsel %vm2819, 65537, 0
        %v2826 = vsel %vm2820, 65537, 0
        %v2827 = vsel %vm2821, 65537, 0
        %v2828 = vsel %vm2822, 65537, 0
        %v2829 = vsel %vm2823, 65537, 0
        %v2830 = vsel %vm2824, 65537, 0
        %2831 = vrot.lane.b32.xlu0 %v2825, 15
        %v2832 = vpop.permute.xlu0 %2831
        %2833 = vrot.lane.b32.xlu0 %v2826, 15
        %v2834 = vpop.permute.xlu0 %2833
        %2835 = vrot.lane.b32.xlu0 %v2827, 15
        %v2836 = vpop.permute.xlu0 %2835
        %2837 = vrot.lane.b32.xlu0 %v2828, 15
        %v2838 = vpop.permute.xlu0 %2837
        %2839 = vrot.lane.b32.xlu0 %v2829, 15
        %v2840 = vpop.permute.xlu0 %2839
        %2841 = vrot.lane.b32.xlu0 %v2830, 15
        %v2842 = vpop.permute.xlu0 %2841
        %v2843 = vrot.slane %v2832, 4
        %v2844 = vrot.slane %v2834, 4
        %v2845 = vrot.slane %v2836, 4
        %v2846 = vrot.slane %v2838, 4
        %v2847 = vrot.slane %v2840, 4
        %v2848 = vrot.slane %v2842, 4
        %v2849 = vsel %vm714, %v2843, %v2832
        %v2850 = vsel %vm404, %v2843, %v2844
        %v2851 = vsel %vm714, %v2850, %v2834
        %v2852 = vsel %vm404, %v2844, %v2845
        %v2853 = vsel %vm714, %v2852, %v2836
        %v2854 = vsel %vm714, %v2846, %v2838
        %v2855 = vsel %vm404, %v2846, %v2847
        %v2856 = vsel %vm714, %v2855, %v2840
        %v2857 = vsel %vm404, %v2847, %v2848
        %v2858 = vsel %vm714, %v2857, %v2842
        %vm2859 = vcmp.ne.s16.totalorder %v2849, 0
        %vm2860 = vcmp.ne.s16.totalorder %v2851, 0
        %vm2861 = vcmp.ne.s16.totalorder %v2853, 0
        %vm2862 = vcmp.ne.s16.totalorder %v2845, 0
        %vm2863 = vcmp.ne.s16.totalorder %v2854, 0
        %vm2864 = vcmp.ne.s16.totalorder %v2856, 0
        %vm2865 = vcmp.ne.s16.totalorder %v2858, 0
        %vm2866 = vcmp.ne.s16.totalorder %v2848, 0
        %v2867 = vsel %vm2859, %v2799, 0
        %v2868 = vsel %vm2860, %v2800, 0
        %v2869 = vsel %vm2861, %v2801, 0
        %v2870 = vsel %vm2862, %v2802, 0
        %v2871 = vsel %vm2863, %v2803, 0
        %v2872 = vsel %vm2864, %v2804, 0
        %v2873 = vsel %vm2865, %v2805, 0
        %v2874 = vsel %vm2866, %v2806, 0
        %2883 = vrot.lane.b32.xlu0 %v2867, 113
        %v2884 = vpop.permute.xlu0 %2883
        %2885 = vrot.lane.b32.xlu0 %v2868, 113
        %v2886 = vpop.permute.xlu0 %2885
        %2887 = vrot.lane.b32.xlu0 %v2869, 113
        %v2888 = vpop.permute.xlu0 %2887
        %2889 = vrot.lane.b32.xlu0 %v2870, 113
        %v2890 = vpop.permute.xlu0 %2889
        %2891 = vrot.lane.b32.xlu0 %v2871, 113
        %v2892 = vpop.permute.xlu0 %2891
        %2893 = vrot.lane.b32.xlu0 %v2872, 113
        %v2894 = vpop.permute.xlu0 %2893
        %2895 = vrot.lane.b32.xlu0 %v2873, 113
        %v2896 = vpop.permute.xlu0 %2895
        %2897 = vrot.lane.b32.xlu0 %v2874, 113
        %v2898 = vpop.permute.xlu0 %2897
        %v2899 = vrot.slane %v2884, 4
        %v2900 = vrot.slane %v2886, 4
        %v2901 = vrot.slane %v2888, 4
        %v2902 = vrot.slane %v2890, 4
        %v2903 = vrot.slane %v2892, 4
        %v2904 = vrot.slane %v2894, 4
        %v2905 = vrot.slane %v2896, 4
        %v2906 = vrot.slane %v2898, 4
        %v2907 = vsel %vm404, %v2899, %v2900
        %v2908 = vsel %vm663, %v2884, %v2907
        %v2909 = vsel %vm404, %v2900, %v2901
        %v2910 = vsel %vm663, %v2886, %v2909
        %v2911 = vsel %vm404, %v2901, %v2902
        %v2912 = vsel %vm663, %v2888, %v2911
        %v2913 = vsel %vm404, %v2903, %v2904
        %v2914 = vsel %vm663, %v2892, %v2913
        %v2915 = vsel %vm404, %v2904, %v2905
        %v2916 = vsel %vm663, %v2894, %v2915
        %v2917 = vsel %vm404, %v2905, %v2906
        %v2918 = vsel %vm663, %v2896, %v2917
        %2925 = vst [vmem:[#allocation3 + $0x120] sm:$0xff] %v2908
        %2926 = vst [vmem:[#allocation3 + $0x128] sm:$0xff] %v2910
        %2927 = vst [vmem:[#allocation3 + $0x130] sm:$0xff] %v2912
        %2928 = vst [vmem:[#allocation3 + $0x138] sm:$0xff] %v2914
        %2929 = vst [vmem:[#allocation3 + $0x140] sm:$0xff] %v2916
        %2930 = vst [vmem:[#allocation3 + $0x148] sm:$0xff] %v2918
        %v2931 = vld [vmem:[#allocation2 + $0x4] sm:$0xff]
        %v2932 = vld [vmem:[#allocation2 + $0xc] sm:$0xff]
        %v2933 = vld [vmem:[#allocation2 + $0x14] sm:$0xff]
        %v2934 = vld [vmem:[#allocation2 + $0x1c] sm:$0xf]
        %v2935 = vld [vmem:[#allocation2 + $0x24] sm:$0xff]
        %v2936 = vld [vmem:[#allocation2 + $0x2c] sm:$0xff]
        %v2937 = vld [vmem:[#allocation2 + $0x34] sm:$0xff]
        %v2938 = vld [vmem:[#allocation2 + $0x3c] sm:$0xf]
        %vm2939 = vmand %vm1168, %vm2125
        %vm2940 = vmand %vm1169, %vm2125
        %vm2941 = vmand %vm1170, %vm2125
        %vm2942 = vmand %vm1171, %vm2125
        %vm2943 = vmand %vm1172, %vm2125
        %vm2944 = vmand %vm1173, %vm2125
        %vm2945 = vmand %vm1168, %vm2126
        %vm2946 = vmand %vm1169, %vm2126
        %vm2947 = vmand %vm1170, %vm2126
        %vm2948 = vmand %vm1171, %vm2126
        %vm2949 = vmand %vm1172, %vm2126
        %vm2950 = vmand %vm1173, %vm2126
        %vm2951 = vmpackc.low %vm2940, %vm2939
        %vm2952 = vmpackc.low %vm2942, %vm2941
        %vm2953 = vmpackc.low %vm2944, %vm2943
        %vm2954 = vmpackc.low %vm2946, %vm2945
        %vm2955 = vmpackc.low %vm2948, %vm2947
        %vm2956 = vmpackc.low %vm2950, %vm2949
        %v2957 = vsel %vm2951, 65537, 0
        %v2958 = vsel %vm2952, 65537, 0
        %v2959 = vsel %vm2953, 65537, 0
        %v2960 = vsel %vm2954, 65537, 0
        %v2961 = vsel %vm2955, 65537, 0
        %v2962 = vsel %vm2956, 65537, 0
        %2963 = vrot.lane.b32.xlu0 %v2957, 16
        %v2964 = vpop.permute.xlu0 %2963
        %2965 = vrot.lane.b32.xlu0 %v2958, 16
        %v2966 = vpop.permute.xlu0 %2965
        %2967 = vrot.lane.b32.xlu0 %v2959, 16
        %v2968 = vpop.permute.xlu0 %2967
        %2969 = vrot.lane.b32.xlu0 %v2960, 16
        %v2970 = vpop.permute.xlu0 %2969
        %2971 = vrot.lane.b32.xlu0 %v2961, 16
        %v2972 = vpop.permute.xlu0 %2971
        %2973 = vrot.lane.b32.xlu0 %v2962, 16
        %v2974 = vpop.permute.xlu0 %2973
        %v2975 = vrot.slane %v2964, 4
        %v2976 = vrot.slane %v2966, 4
        %v2977 = vrot.slane %v2968, 4
        %v2978 = vrot.slane %v2970, 4
        %v2979 = vrot.slane %v2972, 4
        %v2980 = vrot.slane %v2974, 4
        %v2981 = vsel %vm583, %v2975, %v2964
        %v2982 = vsel %vm404, %v2975, %v2976
        %v2983 = vsel %vm583, %v2982, %v2966
        %v2984 = vsel %vm404, %v2976, %v2977
        %v2985 = vsel %vm583, %v2984, %v2968
        %v2986 = vsel %vm583, %v2978, %v2970
        %v2987 = vsel %vm404, %v2978, %v2979
        %v2988 = vsel %vm583, %v2987, %v2972
        %v2989 = vsel %vm404, %v2979, %v2980
        %v2990 = vsel %vm583, %v2989, %v2974
        %vm2991 = vcmp.ne.s16.totalorder %v2981, 0
        %vm2992 = vcmp.ne.s16.totalorder %v2983, 0
        %vm2993 = vcmp.ne.s16.totalorder %v2985, 0
        %vm2994 = vcmp.ne.s16.totalorder %v2977, 0
        %vm2995 = vcmp.ne.s16.totalorder %v2986, 0
        %vm2996 = vcmp.ne.s16.totalorder %v2988, 0
        %vm2997 = vcmp.ne.s16.totalorder %v2990, 0
        %vm2998 = vcmp.ne.s16.totalorder %v2980, 0
        %v2999 = vsel %vm2991, %v2931, 0
        %v3000 = vsel %vm2992, %v2932, 0
        %v3001 = vsel %vm2993, %v2933, 0
        %v3002 = vsel %vm2994, %v2934, 0
        %v3003 = vsel %vm2995, %v2935, 0
        %v3004 = vsel %vm2996, %v2936, 0
        %v3005 = vsel %vm2997, %v2937, 0
        %v3006 = vsel %vm2998, %v2938, 0
        %3015 = vrot.lane.b32.xlu0 %v2999, 112
        %v3016 = vpop.permute.xlu0 %3015
        %3017 = vrot.lane.b32.xlu0 %v3000, 112
        %v3018 = vpop.permute.xlu0 %3017
        %3019 = vrot.lane.b32.xlu0 %v3001, 112
        %v3020 = vpop.permute.xlu0 %3019
        %3021 = vrot.lane.b32.xlu0 %v3002, 112
        %v3022 = vpop.permute.xlu0 %3021
        %3023 = vrot.lane.b32.xlu0 %v3003, 112
        %v3024 = vpop.permute.xlu0 %3023
        %3025 = vrot.lane.b32.xlu0 %v3004, 112
        %v3026 = vpop.permute.xlu0 %3025
        %3027 = vrot.lane.b32.xlu0 %v3005, 112
        %v3028 = vpop.permute.xlu0 %3027
        %3029 = vrot.lane.b32.xlu0 %v3006, 112
        %v3030 = vpop.permute.xlu0 %3029
        %v3031 = vrot.slane %v3016, 4
        %v3032 = vrot.slane %v3018, 4
        %v3033 = vrot.slane %v3020, 4
        %v3034 = vrot.slane %v3022, 4
        %v3035 = vrot.slane %v3024, 4
        %v3036 = vrot.slane %v3026, 4
        %v3037 = vrot.slane %v3028, 4
        %v3038 = vrot.slane %v3030, 4
        %v3039 = vsel %vm404, %v3031, %v3032
        %v3040 = vsel %vm532, %v3016, %v3039
        %v3041 = vsel %vm404, %v3032, %v3033
        %v3042 = vsel %vm532, %v3018, %v3041
        %v3043 = vsel %vm404, %v3033, %v3034
        %v3044 = vsel %vm532, %v3020, %v3043
        %v3045 = vsel %vm404, %v3035, %v3036
        %v3046 = vsel %vm532, %v3024, %v3045
        %v3047 = vsel %vm404, %v3036, %v3037
        %v3048 = vsel %vm532, %v3026, %v3047
        %v3049 = vsel %vm404, %v3037, %v3038
        %v3050 = vsel %vm532, %v3028, %v3049
        %3057 = vst [vmem:[#allocation3 + $0x150] sm:$0xff] %v3040
        %3058 = vst [vmem:[#allocation3 + $0x158] sm:$0xff] %v3042
        %3059 = vst [vmem:[#allocation3 + $0x160] sm:$0xff] %v3044
        %3060 = vst [vmem:[#allocation3 + $0x168] sm:$0xff] %v3046
        %3061 = vst [vmem:[#allocation3 + $0x170] sm:$0xff] %v3048
        %3062 = vst [vmem:[#allocation3 + $0x178] sm:$0xff] %v3050
        %v3063 = vld [vmem:[#allocation2 + $0x4] sm:$0xff]
        %v3064 = vld [vmem:[#allocation2 + $0xc] sm:$0xff]
        %v3065 = vld [vmem:[#allocation2 + $0x14] sm:$0xff]
        %v3066 = vld [vmem:[#allocation2 + $0x1c] sm:$0xf]
        %v3067 = vld [vmem:[#allocation2 + $0x24] sm:$0xff]
        %v3068 = vld [vmem:[#allocation2 + $0x2c] sm:$0xff]
        %v3069 = vld [vmem:[#allocation2 + $0x34] sm:$0xff]
        %v3070 = vld [vmem:[#allocation2 + $0x3c] sm:$0xf]
        %vm3071 = vmand %vm1296, %vm2125
        %vm3072 = vmand %vm1297, %vm2125
        %vm3073 = vmand %vm1298, %vm2125
        %vm3074 = vmand %vm1299, %vm2125
        %vm3075 = vmand %vm1300, %vm2125
        %vm3076 = vmand %vm1301, %vm2125
        %vm3077 = vmand %vm1296, %vm2126
        %vm3078 = vmand %vm1297, %vm2126
        %vm3079 = vmand %vm1298, %vm2126
        %vm3080 = vmand %vm1299, %vm2126
        %vm3081 = vmand %vm1300, %vm2126
        %vm3082 = vmand %vm1301, %vm2126
        %vm3083 = vmpackc.low %vm3072, %vm3071
        %vm3084 = vmpackc.low %vm3074, %vm3073
        %vm3085 = vmpackc.low %vm3076, %vm3075
        %vm3086 = vmpackc.low %vm3078, %vm3077
        %vm3087 = vmpackc.low %vm3080, %vm3079
        %vm3088 = vmpackc.low %vm3082, %vm3081
        %v3089 = vsel %vm3083, 65537, 0
        %v3090 = vsel %vm3084, 65537, 0
        %v3091 = vsel %vm3085, 65537, 0
        %v3092 = vsel %vm3086, 65537, 0
        %v3093 = vsel %vm3087, 65537, 0
        %v3094 = vsel %vm3088, 65537, 0
        %3095 = vrot.lane.b32.xlu0 %v3089, 17
        %v3096 = vpop.permute.xlu0 %3095
        %3097 = vrot.lane.b32.xlu0 %v3090, 17
        %v3098 = vpop.permute.xlu0 %3097
        %3099 = vrot.lane.b32.xlu0 %v3091, 17
        %v3100 = vpop.permute.xlu0 %3099
        %3101 = vrot.lane.b32.xlu0 %v3092, 17
        %v3102 = vpop.permute.xlu0 %3101
        %3103 = vrot.lane.b32.xlu0 %v3093, 17
        %v3104 = vpop.permute.xlu0 %3103
        %3105 = vrot.lane.b32.xlu0 %v3094, 17
        %v3106 = vpop.permute.xlu0 %3105
        %v3107 = vrot.slane %v3096, 4
        %v3108 = vrot.slane %v3098, 4
        %v3109 = vrot.slane %v3100, 4
        %v3110 = vrot.slane %v3102, 4
        %v3111 = vrot.slane %v3104, 4
        %v3112 = vrot.slane %v3106, 4
        %v3113 = vsel %vm454, %v3107, %v3096
        %v3114 = vsel %vm404, %v3107, %v3108
        %v3115 = vsel %vm454, %v3114, %v3098
        %v3116 = vsel %vm404, %v3108, %v3109
        %v3117 = vsel %vm454, %v3116, %v3100
        %v3118 = vsel %vm454, %v3110, %v3102
        %v3119 = vsel %vm404, %v3110, %v3111
        %v3120 = vsel %vm454, %v3119, %v3104
        %v3121 = vsel %vm404, %v3111, %v3112
        %v3122 = vsel %vm454, %v3121, %v3106
        %vm3123 = vcmp.ne.s16.totalorder %v3113, 0
        %vm3124 = vcmp.ne.s16.totalorder %v3115, 0
        %vm3125 = vcmp.ne.s16.totalorder %v3117, 0
        %vm3126 = vcmp.ne.s16.totalorder %v3109, 0
        %vm3127 = vcmp.ne.s16.totalorder %v3118, 0
        %vm3128 = vcmp.ne.s16.totalorder %v3120, 0
        %vm3129 = vcmp.ne.s16.totalorder %v3122, 0
        %vm3130 = vcmp.ne.s16.totalorder %v3112, 0
        %v3131 = vsel %vm3123, %v3063, 0
        %v3132 = vsel %vm3124, %v3064, 0
        %v3133 = vsel %vm3125, %v3065, 0
        %v3134 = vsel %vm3126, %v3066, 0
        %v3135 = vsel %vm3127, %v3067, 0
        %v3136 = vsel %vm3128, %v3068, 0
        %v3137 = vsel %vm3129, %v3069, 0
        %v3138 = vsel %vm3130, %v3070, 0
        %3147 = vrot.lane.b32.xlu0 %v3131, 111
        %v3148 = vpop.permute.xlu0 %3147
        %3149 = vrot.lane.b32.xlu0 %v3132, 111
        %v3150 = vpop.permute.xlu0 %3149
        %3151 = vrot.lane.b32.xlu0 %v3133, 111
        %v3152 = vpop.permute.xlu0 %3151
        %3153 = vrot.lane.b32.xlu0 %v3134, 111
        %v3154 = vpop.permute.xlu0 %3153
        %3155 = vrot.lane.b32.xlu0 %v3135, 111
        %v3156 = vpop.permute.xlu0 %3155
        %3157 = vrot.lane.b32.xlu0 %v3136, 111
        %v3158 = vpop.permute.xlu0 %3157
        %3159 = vrot.lane.b32.xlu0 %v3137, 111
        %v3160 = vpop.permute.xlu0 %3159
        %3161 = vrot.lane.b32.xlu0 %v3138, 111
        %v3162 = vpop.permute.xlu0 %3161
        %v3163 = vrot.slane %v3148, 4
        %v3164 = vrot.slane %v3150, 4
        %v3165 = vrot.slane %v3152, 4
        %v3166 = vrot.slane %v3154, 4
        %v3167 = vrot.slane %v3156, 4
        %v3168 = vrot.slane %v3158, 4
        %v3169 = vrot.slane %v3160, 4
        %v3170 = vrot.slane %v3162, 4
        %v3171 = vsel %vm404, %v3163, %v3164
        %v3172 = vsel %vm402, %v3148, %v3171
        %v3173 = vsel %vm404, %v3164, %v3165
        %v3174 = vsel %vm402, %v3150, %v3173
        %v3175 = vsel %vm404, %v3165, %v3166
        %v3176 = vsel %vm402, %v3152, %v3175
        %v3177 = vsel %vm404, %v3167, %v3168
        %v3178 = vsel %vm402, %v3156, %v3177
        %v3179 = vsel %vm404, %v3168, %v3169
        %v3180 = vsel %vm402, %v3158, %v3179
        %v3181 = vsel %vm404, %v3169, %v3170
        %v3182 = vsel %vm402, %v3160, %v3181
        %3189 = vst [vmem:[#allocation3 + $0x180] sm:$0xff] %v3172
        %3190 = vst [vmem:[#allocation3 + $0x188] sm:$0xff] %v3174
        %3191 = vst [vmem:[#allocation3 + $0x190] sm:$0xff] %v3176
        %3192 = vst [vmem:[#allocation3 + $0x198] sm:$0xff] %v3178
        %3193 = vst [vmem:[#allocation3 + $0x1a0] sm:$0xff] %v3180
        %3194 = vst [vmem:[#allocation3 + $0x1a8] sm:$0xff] %v3182
        %v3195 = vld [vmem:[#allocation9] sm:$0xff]
        %v3196 = vld [vmem:[#allocation3] sm:$0xff]
        %v3197 = vld [vmem:[#allocation3 + $0x8] sm:$0xff]
        %v3198 = vld [vmem:[#allocation3 + $0x10] sm:$0xff]
        %v3199 = vld [vmem:[#allocation3 + $0x18] sm:$0xff]
        %v3200 = vld [vmem:[#allocation3 + $0x20] sm:$0xff]
        %v3201 = vld [vmem:[#allocation3 + $0x28] sm:$0xff]
        %v3202 = vld [vmem:[#allocation3 + $0x30] sm:$0xff]
        %v3203 = vld [vmem:[#allocation3 + $0x38] sm:$0xff]
        %v3204 = vld [vmem:[#allocation3 + $0x40] sm:$0xff]
        %v3205 = vld [vmem:[#allocation3 + $0x48] sm:$0xff]
        %v3206 = vld [vmem:[#allocation3 + $0x50] sm:$0xff]
        %v3207 = vld [vmem:[#allocation3 + $0x58] sm:$0xff]
        %v3208 = vld [vmem:[#allocation3 + $0x60] sm:$0xff]
        %v3209 = vld [vmem:[#allocation3 + $0x68] sm:$0xff]
        %v3210 = vld [vmem:[#allocation3 + $0x70] sm:$0xff]
        %v3211 = vld [vmem:[#allocation3 + $0x78] sm:$0xff]
        %v3212 = vld [vmem:[#allocation3 + $0x80] sm:$0xff]
        %v3213 = vld [vmem:[#allocation3 + $0x88] sm:$0xff]
        %v3214 = vld [vmem:[#allocation3 + $0x90] sm:$0xff]
        %v3215 = vld [vmem:[#allocation3 + $0x98] sm:$0xff]
        %v3216 = vld [vmem:[#allocation3 + $0xa0] sm:$0xff]
        %v3217 = vld [vmem:[#allocation3 + $0xa8] sm:$0xff]
        %v3218 = vld [vmem:[#allocation3 + $0xb0] sm:$0xff]
        %v3219 = vld [vmem:[#allocation3 + $0xb8] sm:$0xff]
        %v3220 = vld [vmem:[#allocation3 + $0xc0] sm:$0xff]
        %v3221 = vld [vmem:[#allocation3 + $0xc8] sm:$0xff]
        %v3222 = vld [vmem:[#allocation3 + $0xd0] sm:$0xff]
        %v3223 = vld [vmem:[#allocation3 + $0xd8] sm:$0xff]
        %v3224 = vld [vmem:[#allocation3 + $0xe0] sm:$0xff]
        %v3225 = vld [vmem:[#allocation3 + $0xe8] sm:$0xff]
        %v3226 = vld [vmem:[#allocation3 + $0xf0] sm:$0xff]
        %v3227 = vld [vmem:[#allocation3 + $0xf8] sm:$0xff]
        %v3228 = vld [vmem:[#allocation3 + $0x100] sm:$0xff]
        %v3229 = vld [vmem:[#allocation3 + $0x108] sm:$0xff]
        %v3230 = vld [vmem:[#allocation3 + $0x110] sm:$0xff]
        %v3231 = vld [vmem:[#allocation3 + $0x118] sm:$0xff]
        %v3232 = vld [vmem:[#allocation3 + $0x120] sm:$0xff]
        %v3233 = vld [vmem:[#allocation3 + $0x128] sm:$0xff]
        %v3234 = vld [vmem:[#allocation3 + $0x130] sm:$0xff]
        %v3235 = vld [vmem:[#allocation3 + $0x138] sm:$0xff]
        %v3236 = vld [vmem:[#allocation3 + $0x140] sm:$0xff]
        %v3237 = vld [vmem:[#allocation3 + $0x148] sm:$0xff]
        %v3238 = vld [vmem:[#allocation3 + $0x150] sm:$0xff]
        %v3239 = vld [vmem:[#allocation3 + $0x158] sm:$0xff]
        %v3240 = vld [vmem:[#allocation3 + $0x160] sm:$0xff]
        %v3241 = vld [vmem:[#allocation3 + $0x168] sm:$0xff]
        %v3242 = vld [vmem:[#allocation3 + $0x170] sm:$0xff]
        %v3243 = vld [vmem:[#allocation3 + $0x178] sm:$0xff]
        %v3244 = vld [vmem:[#allocation3 + $0x180] sm:$0xff]
        %v3245 = vld [vmem:[#allocation3 + $0x188] sm:$0xff]
        %v3246 = vld [vmem:[#allocation3 + $0x190] sm:$0xff]
        %v3247 = vld [vmem:[#allocation3 + $0x198] sm:$0xff]
        %v3248 = vld [vmem:[#allocation3 + $0x1a0] sm:$0xff]
        %v3249 = vld [vmem:[#allocation3 + $0x1a8] sm:$0xff]
        %v3251 = vunpack.c.l.b16 %v3195
        %v3252 = vunpack.c.h.b16 %v3195
        %v3253 = vpack.c.b16 %v3251, %v3251
        %v3254 = vpack.c.b16 %v3252, %v3252
        %v3310 = vunpack.c.l.b16 %v3196
        %v3311 = vunpack.c.h.b16 %v3196
        %v3312 = vunpack.c.l.b16 %v3197
        %v3313 = vunpack.c.h.b16 %v3197
        %v3314 = vunpack.c.l.b16 %v3198
        %v3315 = vunpack.c.h.b16 %v3198
        %v3316 = vunpack.c.l.b16 %v3199
        %v3317 = vunpack.c.h.b16 %v3199
        %v3318 = vunpack.c.l.b16 %v3200
        %v3319 = vunpack.c.h.b16 %v3200
        %v3320 = vunpack.c.l.b16 %v3201
        %v3321 = vunpack.c.h.b16 %v3201
        %v3322 = vunpack.c.l.b16 %v3202
        %v3323 = vunpack.c.h.b16 %v3202
        %v3324 = vunpack.c.l.b16 %v3203
        %v3325 = vunpack.c.h.b16 %v3203
        %v3326 = vunpack.c.l.b16 %v3204
        %v3327 = vunpack.c.h.b16 %v3204
        %v3328 = vunpack.c.l.b16 %v3205
        %v3329 = vunpack.c.h.b16 %v3205
        %v3330 = vunpack.c.l.b16 %v3206
        %v3331 = vunpack.c.h.b16 %v3206
        %v3332 = vunpack.c.l.b16 %v3207
        %v3333 = vunpack.c.h.b16 %v3207
        %v3334 = vunpack.c.l.b16 %v3208
        %v3335 = vunpack.c.h.b16 %v3208
        %v3336 = vunpack.c.l.b16 %v3209
        %v3337 = vunpack.c.h.b16 %v3209
        %v3338 = vunpack.c.l.b16 %v3210
        %v3339 = vunpack.c.h.b16 %v3210
        %v3340 = vunpack.c.l.b16 %v3211
        %v3341 = vunpack.c.h.b16 %v3211
        %v3342 = vunpack.c.l.b16 %v3212
        %v3343 = vunpack.c.h.b16 %v3212
        %v3344 = vunpack.c.l.b16 %v3213
        %v3345 = vunpack.c.h.b16 %v3213
        %v3346 = vunpack.c.l.b16 %v3214
        %v3347 = vunpack.c.h.b16 %v3214
        %v3348 = vunpack.c.l.b16 %v3215
        %v3349 = vunpack.c.h.b16 %v3215
        %v3350 = vunpack.c.l.b16 %v3216
        %v3351 = vunpack.c.h.b16 %v3216
        %v3352 = vunpack.c.l.b16 %v3217
        %v3353 = vunpack.c.h.b16 %v3217
        %v3354 = vunpack.c.l.b16 %v3218
        %v3355 = vunpack.c.h.b16 %v3218
        %v3356 = vunpack.c.l.b16 %v3219
        %v3357 = vunpack.c.h.b16 %v3219
        %v3358 = vunpack.c.l.b16 %v3220
        %v3359 = vunpack.c.h.b16 %v3220
        %v3360 = vunpack.c.l.b16 %v3221
        %v3361 = vunpack.c.h.b16 %v3221
        %v3362 = vunpack.c.l.b16 %v3222
        %v3363 = vunpack.c.h.b16 %v3222
        %v3364 = vunpack.c.l.b16 %v3223
        %v3365 = vunpack.c.h.b16 %v3223
        %v3366 = vunpack.c.l.b16 %v3224
        %v3367 = vunpack.c.h.b16 %v3224
        %v3368 = vunpack.c.l.b16 %v3225
        %v3369 = vunpack.c.h.b16 %v3225
        %v3370 = vunpack.c.l.b16 %v3226
        %v3371 = vunpack.c.h.b16 %v3226
        %v3372 = vunpack.c.l.b16 %v3227
        %v3373 = vunpack.c.h.b16 %v3227
        %v3374 = vunpack.c.l.b16 %v3228
        %v3375 = vunpack.c.h.b16 %v3228
        %v3376 = vunpack.c.l.b16 %v3229
        %v3377 = vunpack.c.h.b16 %v3229
        %v3378 = vunpack.c.l.b16 %v3230
        %v3379 = vunpack.c.h.b16 %v3230
        %v3380 = vunpack.c.l.b16 %v3231
        %v3381 = vunpack.c.h.b16 %v3231
        %v3382 = vunpack.c.l.b16 %v3232
        %v3383 = vunpack.c.h.b16 %v3232
        %v3384 = vunpack.c.l.b16 %v3233
        %v3385 = vunpack.c.h.b16 %v3233
        %v3386 = vunpack.c.l.b16 %v3234
        %v3387 = vunpack.c.h.b16 %v3234
        %v3388 = vunpack.c.l.b16 %v3235
        %v3389 = vunpack.c.h.b16 %v3235
        %v3390 = vunpack.c.l.b16 %v3236
        %v3391 = vunpack.c.h.b16 %v3236
        %v3392 = vunpack.c.l.b16 %v3237
        %v3393 = vunpack.c.h.b16 %v3237
        %v3394 = vunpack.c.l.b16 %v3238
        %v3395 = vunpack.c.h.b16 %v3238
        %v3396 = vunpack.c.l.b16 %v3239
        %v3397 = vunpack.c.h.b16 %v3239
        %v3398 = vunpack.c.l.b16 %v3240
        %v3399 = vunpack.c.h.b16 %v3240
        %v3400 = vunpack.c.l.b16 %v3241
        %v3401 = vunpack.c.h.b16 %v3241
        %v3402 = vunpack.c.l.b16 %v3242
        %v3403 = vunpack.c.h.b16 %v3242
        %v3404 = vunpack.c.l.b16 %v3243
        %v3405 = vunpack.c.h.b16 %v3243
        %v3406 = vunpack.c.l.b16 %v3244
        %v3407 = vunpack.c.h.b16 %v3244
        %v3408 = vunpack.c.l.b16 %v3245
        %v3409 = vunpack.c.h.b16 %v3245
        %v3410 = vunpack.c.l.b16 %v3246
        %v3411 = vunpack.c.h.b16 %v3246
        %v3412 = vunpack.c.l.b16 %v3247
        %v3413 = vunpack.c.h.b16 %v3247
        %v3414 = vunpack.c.l.b16 %v3248
        %v3415 = vunpack.c.h.b16 %v3248
        %v3416 = vunpack.c.l.b16 %v3249
        %v3417 = vunpack.c.h.b16 %v3249
        %v3418 = vpack.c.b16 %v3316, %v3310
        %v3419 = vpack.c.b16 %v3317, %v3311
        %v3420 = vpack.c.b16 %v3318, %v3312
        %v3421 = vpack.c.b16 %v3319, %v3313
        %v3422 = vpack.c.b16 %v3320, %v3314
        %v3423 = vpack.c.b16 %v3321, %v3315
        %v3424 = vpack.c.b16 %v3328, %v3322
        %v3425 = vpack.c.b16 %v3329, %v3323
        %v3426 = vpack.c.b16 %v3330, %v3324
        %v3427 = vpack.c.b16 %v3331, %v3325
        %v3428 = vpack.c.b16 %v3332, %v3326
        %v3429 = vpack.c.b16 %v3333, %v3327
        %v3430 = vpack.c.b16 %v3340, %v3334
        %v3431 = vpack.c.b16 %v3341, %v3335
        %v3432 = vpack.c.b16 %v3342, %v3336
        %v3433 = vpack.c.b16 %v3343, %v3337
        %v3434 = vpack.c.b16 %v3344, %v3338
        %v3435 = vpack.c.b16 %v3345, %v3339
        %v3436 = vpack.c.b16 %v3352, %v3346
        %v3437 = vpack.c.b16 %v3353, %v3347
        %v3438 = vpack.c.b16 %v3354, %v3348
        %v3439 = vpack.c.b16 %v3355, %v3349
        %v3440 = vpack.c.b16 %v3356, %v3350
        %v3441 = vpack.c.b16 %v3357, %v3351
        %v3442 = vpack.c.b16 %v3364, %v3358
        %v3443 = vpack.c.b16 %v3365, %v3359
        %v3444 = vpack.c.b16 %v3366, %v3360
        %v3445 = vpack.c.b16 %v3367, %v3361
        %v3446 = vpack.c.b16 %v3368, %v3362
        %v3447 = vpack.c.b16 %v3369, %v3363
        %v3448 = vpack.c.b16 %v3376, %v3370
        %v3449 = vpack.c.b16 %v3377, %v3371
        %v3450 = vpack.c.b16 %v3378, %v3372
        %v3451 = vpack.c.b16 %v3379, %v3373
        %v3452 = vpack.c.b16 %v3380, %v3374
        %v3453 = vpack.c.b16 %v3381, %v3375
        %v3454 = vpack.c.b16 %v3388, %v3382
        %v3455 = vpack.c.b16 %v3389, %v3383
        %v3456 = vpack.c.b16 %v3390, %v3384
        %v3457 = vpack.c.b16 %v3391, %v3385
        %v3458 = vpack.c.b16 %v3392, %v3386
        %v3459 = vpack.c.b16 %v3393, %v3387
        %v3460 = vpack.c.b16 %v3400, %v3394
        %v3461 = vpack.c.b16 %v3401, %v3395
        %v3462 = vpack.c.b16 %v3402, %v3396
        %v3463 = vpack.c.b16 %v3403, %v3397
        %v3464 = vpack.c.b16 %v3404, %v3398
        %v3465 = vpack.c.b16 %v3405, %v3399
        %v3466 = vpack.c.b16 %v3412, %v3406
        %v3467 = vpack.c.b16 %v3413, %v3407
        %v3468 = vpack.c.b16 %v3414, %v3408
        %v3469 = vpack.c.b16 %v3415, %v3409
        %v3470 = vpack.c.b16 %v3416, %v3410
        %v3471 = vpack.c.b16 %v3417, %v3411
        %v3527 = vsel %vm1721, %v3254, 0
        %3529 = vmatprep.subr.bf16.mxu0 %v3461
        %3530 = vmatpush1.bf16.msra.mxu0 %v3460
        %3531 = vmatprep.subr.bf16.mxu0 %v3455
        %3532 = vmatpush1.bf16.msra.mxu0 %v3454
        %3533 = vmatprep.subr.bf16.mxu0 %v3449
        %3534 = vmatpush1.bf16.msra.mxu0 %v3448
        %3535 = vmatprep.subr.bf16.mxu0 %v3443
        %3536 = vmatpush1.bf16.msra.mxu0 %v3442
        %3537 = vmatprep.subr.bf16.mxu0 %v3437
        %3538 = vmatpush1.bf16.msra.mxu0 %v3436
        %3539 = vmatprep.subr.bf16.mxu0 %v3431
        %3540 = vmatpush1.bf16.msra.mxu0 %v3430
        %3541 = vmatprep.subr.bf16.mxu0 %v3425
        %3542 = vmatpush1.bf16.msra.mxu0 %v3424
        %3543 = vmatprep.subr.bf16.mxu0 %v3419
        %3544 = vmatpush1.bf16.msra.mxu0 %v3418
        %3545 = vmatprep.subr.bf16.mxu0 0
        %3546 = vmatpush2.bf16.msra.mxu0 0
        %3547 = vmatprep.subr.bf16.mxu0 0
        %3548 = vmatpush2.bf16.msra.mxu0 0
        %3549 = vmatprep.subr.bf16.mxu0 0
        %3550 = vmatpush2.bf16.msra.mxu0 0
        %3551 = vmatprep.subr.bf16.mxu0 0
        %3552 = vmatpush2.bf16.msra.mxu0 0
        %3553 = vmatprep.subr.bf16.mxu0 0
        %3554 = vmatpush2.bf16.msra.mxu0 0
        %3555 = vmatprep.subr.bf16.mxu0 0
        %3556 = vmatpush2.bf16.msra.mxu0 0
        %3557 = vmatprep.subr.bf16.mxu0 0
        %3558 = vmatpush2.bf16.msra.mxu0 0
        %3559 = vmatprep.subr.bf16.mxu0 %v3467
        %3560 = vmatpush2.bf16.msra.mxu0 %v3466
        %3561 = vmatprep.mubr.bf16.mxu0 %v3527
        %3562 = vmatmul.mubr.bf16.gmra.mxu0 %v3253
        %v3563 = vpop.f32.mrf.mxu0
        %v3564 = vadd.f32 0.0, %v3563
        %v3565 = vpop.f32.mrf.mxu0
        %v3566 = vadd.f32 0.0, %v3565
        %v3567 = vpop.f32.mrf.mxu0
        %v3568 = vpop.f32.mrf.mxu0
        %3569 = vdwg.mxu0
        %3570 = vmatprep.subr.bf16.mxu0 %v3463
        %3571 = vmatpush1.bf16.msra.mxu0 %v3462
        %3572 = vmatprep.subr.bf16.mxu0 %v3457
        %3573 = vmatpush1.bf16.msra.mxu0 %v3456
        %3574 = vmatprep.subr.bf16.mxu0 %v3451
        %3575 = vmatpush1.bf16.msra.mxu0 %v3450
        %3576 = vmatprep.subr.bf16.mxu0 %v3445
        %3577 = vmatpush1.bf16.msra.mxu0 %v3444
        %3578 = vmatprep.subr.bf16.mxu0 %v3439
        %3579 = vmatpush1.bf16.msra.mxu0 %v3438
        %3580 = vmatprep.subr.bf16.mxu0 %v3433
        %3581 = vmatpush1.bf16.msra.mxu0 %v3432
        %3582 = vmatprep.subr.bf16.mxu0 %v3427
        %3583 = vmatpush1.bf16.msra.mxu0 %v3426
        %3584 = vmatprep.subr.bf16.mxu0 %v3421
        %3585 = vmatpush1.bf16.msra.mxu0 %v3420
        %3586 = vmatprep.subr.bf16.mxu0 0
        %3587 = vmatpush2.bf16.msra.mxu0 0
        %3588 = vmatprep.subr.bf16.mxu0 0
        %3589 = vmatpush2.bf16.msra.mxu0 0
        %3590 = vmatprep.subr.bf16.mxu0 0
        %3591 = vmatpush2.bf16.msra.mxu0 0
        %3592 = vmatprep.subr.bf16.mxu0 0
        %3593 = vmatpush2.bf16.msra.mxu0 0
        %3594 = vmatprep.subr.bf16.mxu0 0
        %3595 = vmatpush2.bf16.msra.mxu0 0
        %3596 = vmatprep.subr.bf16.mxu0 0
        %3597 = vmatpush2.bf16.msra.mxu0 0
        %3598 = vmatprep.subr.bf16.mxu0 0
        %3599 = vmatpush2.bf16.msra.mxu0 0
        %3600 = vmatprep.subr.bf16.mxu0 %v3469
        %3601 = vmatpush2.bf16.msra.mxu0 %v3468
        %3602 = vmatprep.mubr.bf16.mxu0 %v3527
        %3603 = vmatmul.mubr.bf16.gmra.mxu0 %v3253
        %v3604 = vpop.f32.mrf.mxu0
        %v3605 = vadd.f32 0.0, %v3604
        %v3606 = vpop.f32.mrf.mxu0
        %v3607 = vadd.f32 0.0, %v3606
        %v3608 = vpop.f32.mrf.mxu0
        %v3609 = vpop.f32.mrf.mxu0
        %3610 = vdwg.mxu0
        %3611 = vmatprep.subr.bf16.mxu0 %v3465
        %3612 = vmatpush1.bf16.msra.mxu0 %v3464
        %3613 = vmatprep.subr.bf16.mxu0 %v3459
        %3614 = vmatpush1.bf16.msra.mxu0 %v3458
        %3615 = vmatprep.subr.bf16.mxu0 %v3453
        %3616 = vmatpush1.bf16.msra.mxu0 %v3452
        %3617 = vmatprep.subr.bf16.mxu0 %v3447
        %3618 = vmatpush1.bf16.msra.mxu0 %v3446
        %3619 = vmatprep.subr.bf16.mxu0 %v3441
        %3620 = vmatpush1.bf16.msra.mxu0 %v3440
        %3621 = vmatprep.subr.bf16.mxu0 %v3435
        %3622 = vmatpush1.bf16.msra.mxu0 %v3434
        %3623 = vmatprep.subr.bf16.mxu0 %v3429
        %3624 = vmatpush1.bf16.msra.mxu0 %v3428
        %3625 = vmatprep.subr.bf16.mxu0 %v3423
        %3626 = vmatpush1.bf16.msra.mxu0 %v3422
        %3627 = vmatprep.subr.bf16.mxu0 0
        %3628 = vmatpush2.bf16.msra.mxu0 0
        %3629 = vmatprep.subr.bf16.mxu0 0
        %3630 = vmatpush2.bf16.msra.mxu0 0
        %3631 = vmatprep.subr.bf16.mxu0 0
        %3632 = vmatpush2.bf16.msra.mxu0 0
        %3633 = vmatprep.subr.bf16.mxu0 0
        %3634 = vmatpush2.bf16.msra.mxu0 0
        %3635 = vmatprep.subr.bf16.mxu0 0
        %3636 = vmatpush2.bf16.msra.mxu0 0
        %3637 = vmatprep.subr.bf16.mxu0 0
        %3638 = vmatpush2.bf16.msra.mxu0 0
        %3639 = vmatprep.subr.bf16.mxu0 0
        %3640 = vmatpush2.bf16.msra.mxu0 0
        %3641 = vmatprep.subr.bf16.mxu0 %v3471
        %3642 = vmatpush2.bf16.msra.mxu0 %v3470
        %3643 = vmatprep.mubr.bf16.mxu0 %v3527
        %3644 = vmatmul.mubr.bf16.gmra.mxu0 %v3253
        %v3645 = vpop.f32.mrf.mxu0
        %v3646 = vadd.f32 0.0, %v3645
        %v3647 = vpop.f32.mrf.mxu0
        %v3648 = vadd.f32 0.0, %v3647
        %v3649 = vpop.f32.mrf.mxu0
        %v3650 = vpop.f32.mrf.mxu0
        %3651 = vdwg.mxu0
        %v3652 = vmul.f32 %v1923, %v1923
        %v3653 = vmul.f32 %v1925, %v1925
        %v3654 = vadd.f32 %v1923, %v1925
        %3655 = vadd.xlane.f32.xlu0 %v3654
        %v3656 = vpop.xlane.xlu0 %3655
        %v3657 = vadd.f32 %v3652, %v3653
        %3658 = vadd.xlane.f32.xlu0 %v3657
        %v3659 = vpop.xlane.xlu0 %3658
        %v3660 = vmul.f32 %v3656, 0.00390625
        %v3661 = vmul.f32 %v3659, 0.00390625
        %v3662 = vmul.f32 %v3660, %v3660
        %v3663 = vsub.f32 %v3661, %v3662
        %v3664 = vmax.f32 %v3663, 0.0
        %v3665 = vsub.f32 %v1923, %v3660
        %v3666 = vsub.f32 %v1925, %v3660
        %v3667 = vadd.f32 %v3664, 1e-05
        %v3668 = vrsqrt.pop %v3667
        %v3669 = vmul.f32 %v3665, %v3668
        %v3670 = vmul.f32 %v3666, %v3668
        %v3671 = vadd.f32 %v3564, %v3669
        %v3672 = vadd.f32 %v3566, %v3670
        %v3673 = vmul.f32 %v3671, %v3671
        %v3674 = vmul.f32 %v3672, %v3672
        %v3675 = vadd.f32 %v3671, %v3672
        %3676 = vadd.xlane.f32.xlu0 %v3675
        %v3677 = vpop.xlane.xlu0 %3676
        %v3678 = vadd.f32 %v3673, %v3674
        %3679 = vadd.xlane.f32.xlu0 %v3678
        %v3680 = vpop.xlane.xlu0 %3679
        %v3681 = vmul.f32 %v3677, 0.00390625
        %v3682 = vmul.f32 %v3680, 0.00390625
        %v3683 = vmul.f32 %v3681, %v3681
        %v3684 = vsub.f32 %v3682, %v3683
        %v3685 = vmax.f32 %v3684, 0.0
        %v3686 = vsub.f32 %v3671, %v3681
        %v3687 = vsub.f32 %v3672, %v3681
        %v3688 = vadd.f32 %v3685, 1e-05
        %v3689 = vrsqrt.pop %v3688
        %v3690 = vmul.f32 %v3686, %v3689
        %v3691 = vmul.f32 %v3687, %v3689
        %vm3692 = vcmp.ge.f32.partialorder %v3690, 0.0
        %vm3693 = vcmp.ge.f32.partialorder %v3691, 0.0
        %v3694 = vmul.f32 %v3690, 0.2
        %v3695 = vmul.f32 %v3691, 0.2
        %v3696 = vsel %vm3692, %v3690, %v3694
        %v3697 = vsel %vm3693, %v3691, %v3695
        %3698 = vst [vmem:[%s320] sm:$0xff] %v3696
        %3699 = vst [vmem:[%s320 + $0x8] sm:$0xff] %v3697
        %v3700 = vmul.f32 %v1964, %v1964
        %v3701 = vmul.f32 %v1966, %v1966
        %v3702 = vadd.f32 %v1964, %v1966
        %3703 = vadd.xlane.f32.xlu0 %v3702
        %v3704 = vpop.xlane.xlu0 %3703
        %v3705 = vadd.f32 %v3700, %v3701
        %3706 = vadd.xlane.f32.xlu0 %v3705
        %v3707 = vpop.xlane.xlu0 %3706
        %v3708 = vmul.f32 %v3704, 0.00390625
        %v3709 = vmul.f32 %v3707, 0.00390625
        %v3710 = vmul.f32 %v3708, %v3708
        %v3711 = vsub.f32 %v3709, %v3710
        %v3712 = vmax.f32 %v3711, 0.0
        %v3713 = vsub.f32 %v1964, %v3708
        %v3714 = vsub.f32 %v1966, %v3708
        %v3715 = vadd.f32 %v3712, 1e-05
        %v3716 = vrsqrt.pop %v3715
        %v3717 = vmul.f32 %v3713, %v3716
        %v3718 = vmul.f32 %v3714, %v3716
        %v3719 = vadd.f32 %v3605, %v3717
        %v3720 = vadd.f32 %v3607, %v3718
        %v3721 = vmul.f32 %v3719, %v3719
        %v3722 = vmul.f32 %v3720, %v3720
        %v3723 = vadd.f32 %v3719, %v3720
        %3724 = vadd.xlane.f32.xlu0 %v3723
        %v3725 = vpop.xlane.xlu0 %3724
        %v3726 = vadd.f32 %v3721, %v3722
        %3727 = vadd.xlane.f32.xlu0 %v3726
        %v3728 = vpop.xlane.xlu0 %3727
        %v3729 = vmul.f32 %v3725, 0.00390625
        %v3730 = vmul.f32 %v3728, 0.00390625
        %v3731 = vmul.f32 %v3729, %v3729
        %v3732 = vsub.f32 %v3730, %v3731
        %v3733 = vmax.f32 %v3732, 0.0
        %v3734 = vsub.f32 %v3719, %v3729
        %v3735 = vsub.f32 %v3720, %v3729
        %v3736 = vadd.f32 %v3733, 1e-05
        %v3737 = vrsqrt.pop %v3736
        %v3738 = vmul.f32 %v3734, %v3737
        %v3739 = vmul.f32 %v3735, %v3737
        %vm3740 = vcmp.ge.f32.partialorder %v3738, 0.0
        %vm3741 = vcmp.ge.f32.partialorder %v3739, 0.0
        %v3742 = vmul.f32 %v3738, 0.2
        %v3743 = vmul.f32 %v3739, 0.2
        %v3744 = vsel %vm3740, %v3738, %v3742
        %v3745 = vsel %vm3741, %v3739, %v3743
        %s3746 = scalar_lea.vmem %s320, 16 [#allocation13]
        %3747 = vst [vmem:[%s3746] sm:$0xff] %v3744
        %3748 = vst [vmem:[%s3746 + $0x8] sm:$0xff] %v3745
        %v3749 = vmul.f32 %v2005, %v2005
        %v3750 = vmul.f32 %v2007, %v2007
        %v3751 = vadd.f32 %v2005, %v2007
        %3752 = vadd.xlane.f32.xlu0 %v3751
        %v3753 = vpop.xlane.xlu0 %3752
        %v3754 = vadd.f32 %v3749, %v3750
        %3755 = vadd.xlane.f32.xlu0 %v3754
        %v3756 = vpop.xlane.xlu0 %3755
        %v3757 = vmul.f32 %v3753, 0.00390625
        %v3758 = vmul.f32 %v3756, 0.00390625
        %v3759 = vmul.f32 %v3757, %v3757
        %v3760 = vsub.f32 %v3758, %v3759
        %v3761 = vmax.f32 %v3760, 0.0
        %v3762 = vsub.f32 %v2005, %v3757
        %v3763 = vsub.f32 %v2007, %v3757
        %v3764 = vadd.f32 %v3761, 1e-05
        %v3765 = vrsqrt.pop %v3764
        %v3766 = vmul.f32 %v3762, %v3765
        %v3767 = vmul.f32 %v3763, %v3765
        %v3768 = vadd.f32 %v3646, %v3766
        %v3769 = vadd.f32 %v3648, %v3767
        %v3770 = vmul.f32 %v3768, %v3768
        %v3771 = vmul.f32 %v3769, %v3769
        %v3772 = vadd.f32 %v3768, %v3769
        %3773 = vadd.xlane.f32.xlu0 %v3772
        %v3774 = vpop.xlane.xlu0 %3773
        %v3775 = vadd.f32 %v3770, %v3771
        %3776 = vadd.xlane.f32.xlu0 %v3775
        %v3777 = vpop.xlane.xlu0 %3776
        %v3778 = vmul.f32 %v3774, 0.00390625
        %v3779 = vmul.f32 %v3777, 0.00390625
        %v3780 = vmul.f32 %v3778, %v3778
        %v3781 = vsub.f32 %v3779, %v3780
        %v3782 = vmax.f32 %v3781, 0.0
        %v3783 = vsub.f32 %v3768, %v3778
        %v3784 = vsub.f32 %v3769, %v3778
        %v3785 = vadd.f32 %v3782, 1e-05
        %v3786 = vrsqrt.pop %v3785
        %v3787 = vmul.f32 %v3783, %v3786
        %v3788 = vmul.f32 %v3784, %v3786
        %vm3789 = vcmp.ge.f32.partialorder %v3787, 0.0
        %vm3790 = vcmp.ge.f32.partialorder %v3788, 0.0
        %v3791 = vmul.f32 %v3787, 0.2
        %v3792 = vmul.f32 %v3788, 0.2
        %v3793 = vsel %vm3789, %v3787, %v3791
        %v3794 = vsel %vm3790, %v3788, %v3792
        %s3795 = scalar_lea.vmem %s320, 32 [#allocation13]
        %3796 = vst [vmem:[%s3795] sm:$0xff] %v3793
        %3797 = vst [vmem:[%s3795 + $0x8] sm:$0xff] %v3794
        %s3798 = sand.u32 %s164, 1
        %s3799 = scalar_lea.sflag [#allocation6], %s3798
        %s3800 = sand.u32 %s164, 1
        %s3801 = smul.addr %s3800, 48
        %s3802 = scalar_lea.vmem [#allocation13], %s3801
        // Predicated region
        $region65: #{tpu_custom_call.1} parent=43 // pred_check
          %p3803 = pneg %p174
        $region66: #{tpu_custom_call.1} parent=43 // pred_check_branch
          %3805 = sbr.rel (%p3803) target = $region68
        $region67: #{tpu_custom_call.1} parent=43 // pred_region
          %s3806 = smul.u32 3, %s25
          %s3808 = ssub.s32 768, 768
          %3809 = vsyncadd %s3799, %s3808
          %s3810 = smul.addr %s3806, 2
          %s3811 = smul.addr %s3810, 128
          %s3812 = scalar_lea.hbm %s6, %s3811
          %s3813 = sshll.u32 %s3802, 4
          %s3814 = int_to_ptr.vmem [resolvable:$true] %s3813
          %3819 = dma.vmem_to_hbm [thread:$0]  %s3814, 768, %s3812, %s3799, 256, 256, 16
        $region68: #{tpu_custom_call.1} parent=43 // pred_fallthru
          _
      $region44: #{tpu_custom_call.1} parent=5 // pred_fallthru
        _
      %p3820 = scmp.le.s32.totalorder 2, %s20
      // Predicated region
      $region69: #{tpu_custom_call.1} parent=5 // pred_check
        %p3821 = pneg %p3820
      $region70: #{tpu_custom_call.1} parent=5 // pred_check_branch
        %3823 = sbr.rel (%p3821) target = $region72
      $region71: #{tpu_custom_call.1} parent=5 // pred_region
        %s3824 = ssub.s32 %s20, 2
        // Predicated region
        $region73: #{tpu_custom_call.1} parent=71 // pred_check
          %p3825 = pneg %p180
        $region74: #{tpu_custom_call.1} parent=71 // pred_check_branch
          %3827 = sbr.rel (%p3825) target = $region76
        $region75: #{tpu_custom_call.1} parent=71 // pred_region
          %s3828 = sand.u32 %s165, 1
          %s3829 = scalar_lea.sflag [#allocation6], %s3828
          %s3830 = sand.u32 %s165, 1
          %s3831 = smul.addr %s3830, 48
          %s3832 = scalar_lea.vmem [#allocation13], %s3831
          %3833 = dma.done %s3829, 768
        $region76: #{tpu_custom_call.1} parent=71 // pred_fallthru
          _
      $region72: #{tpu_custom_call.1} parent=5 // pred_fallthru
        _
    $region6: #{tpu_custom_call.1} parent=1 // loop_footer
      %s24 = sadd.s32 1, %s20
    $region7: #{tpu_custom_call.1} parent=1 // loop_footer_branch
      %19 = sbr.rel target = $region3
    $region8: #{tpu_custom_call.1} parent=1 // loop_exit
      _
    %3834 = vsyncpa [#allocation5], 1
    %s3835 = scalar_lea.sflag [#allocation5], 1
    %3836 = vsyncpa %s3835, 1
    %3837 = vsyncpa [#allocation8], 1
    %3838 = vsyncpa [#allocation11], 1
    %3839 = vsyncpa [#allocation6], 1
    %s3840 = scalar_lea.sflag [#allocation6], 1
    %3841 = vsyncpa %s3840, 1

</llo_original>
